<compile_context>
chip_gen: v7x
topology: tpu7x:2x2x1
jax: 0.10.0
libtpu: 0.0.40
codegen_flags: <defaults>
</compile_context>

<pallas_src>
import jax
import jax.numpy as jnp
from jax.experimental import pallas as pl
from jax.experimental.pallas import tpu as pltpu

# ----------------------------- config (small synthetic shapes) ---------------
B = 2            # batch
C = 4            # ECG channels (leads)
L = 16           # ECG samples
H = 32           # decoder hidden size (distilgpt2 uses 768)
NH = 4           # attention heads
HD = H // NH     # head dim
T = 8            # decoder sequence length (stand-in for 256)
NLAYER = 2       # transformer blocks (distilgpt2 uses 6)
VOCAB = 64 + 2   # vocab_size + 2 (resize_token_embeddings(vocab + 2))
MAXPOS = 16      # max positions for wpe

SLAB_B = 1                         # batches per grid step; raise so SLAB_B*T >= 128 at real scale
ROWS = SLAB_B * T                  # matmul M per grid step
HP = 128                           # hidden padded to one full lane tile
F4 = 4 * H                         # MLP inner dim (= 128, already lane dense)
VP = ((VOCAB + 127) // 128) * 128  # vocab padded to 128


# ----------------------------- fused forward kernel --------------------------
def _fused_kernel(
    ecg_ref, x_ref, mask_ref,
    enc_w_ref, enc_b_ref,
    ln1_g_ref, ln1_b_ref,
    wqkv_ref, bqkv_ref, wo_ref, bo_ref,
    wcross_ref, bcross_ref,
    ln2_g_ref, ln2_b_ref,
    wfc_ref, bfc_ref, wpr_ref, bpr_ref,
    lnf_g_ref, lnf_b_ref, lm_w_ref,
    o_ref,
):
    f32 = jnp.float32
    bf16 = jnp.bfloat16

    # lane mask selecting the true hidden width inside the 128-lane padding
    hmask = (jax.lax.broadcasted_iota(jnp.int32, (1, HP), 1) < H).astype(f32)

    def layernorm(x, g, b):
        xm = x * hmask
        mu = jnp.sum(xm, axis=-1, keepdims=True) * (1.0 / H)
        xc = (xm - mu) * hmask
        var = jnp.sum(xc * xc, axis=-1, keepdims=True) * (1.0 / H)
        # g / b are zero in padded lanes -> output padded lanes stay zero.
        return xc * jax.lax.rsqrt(var + 1e-5) * g + b

    def mm(a_f32, w_bf16):
        # bf16 operands into the MXU, f32 accumulation.
        return jnp.dot(a_f32.astype(bf16), w_bf16, preferred_element_type=f32)

    # ---- ECG encoder stand-in: global-average-pool over time + reset_head ----
    feat = jnp.sum(ecg_ref[...], axis=-1) * (1.0 / L)              # [SLAB_B, C]
    enc = mm(feat, enc_w_ref[...]) + enc_b_ref[...]                # [SLAB_B, HP]

    # ---- cross-attention path, hoisted (Tk==1 -> softmax == 1) ---------------
    # enc is layer-invariant: all NLAYER pre-composed cross affines in one matmul.
    cross_all = mm(enc, wcross_ref[...]) + bcross_ref[...]         # [SLAB_B, NLAYER*HP]

    # ---- additive self-attention bias: causal + key padding, built in-kernel --
    rowi = jax.lax.broadcasted_iota(jnp.int32, (T, T), 0)
    coli = jax.lax.broadcasted_iota(jnp.int32, (T, T), 1)
    causal = (coli <= rowi).astype(f32)                            # [T, T]
    keep = causal[None, :, :] * mask_ref[...]                      # [SLAB_B, T, T]
    bias = (1.0 - keep) * (-1e9)

    # per-head lane-slot masks (head h occupies lanes h*HD .. h*HD+HD)
    lane_iota = jax.lax.broadcasted_iota(jnp.int32, (1, 1, HP), 2)
    head_masks = [((lane_iota >= hh * HD) & (lane_iota < (hh + 1) * HD)).astype(f32)
                  for hh in range(NH)]

    x = x_ref[...]                                                 # [ROWS, HP] f32
    scale = 1.0 / (HD ** 0.5)

    # TODO(synk): switch to lax.fori_loop(..., unroll=True) / a layer grid axis
    # before scaling NLAYER (static unroll does not bound vreg live ranges).
    for l in range(NLAYER):
        # ---------------- masked causal self-attention ----------------
        h1 = layernorm(x, ln1_g_ref[l], ln1_b_ref[l])
        qkv = mm(h1, wqkv_ref[l]) + bqkv_ref[l]                    # [ROWS, 3*HP], 1 MXU issue
        q3 = qkv[:, 0 * HP:1 * HP].reshape(SLAB_B, T, HP)          # tile-aligned slices
        k3 = qkv[:, 1 * HP:2 * HP].reshape(SLAB_B, T, HP)
        v3 = qkv[:, 2 * HP:3 * HP].reshape(SLAB_B, T, HP)

        # per-head scores; head outputs accumulated into their natural lane
        # slots so the output projection is a single K=128 matmul.
        attn_pre = None
        for hh in range(NH):
            lo = hh * HD
            qh = q3[:, :, lo:lo + HD]                              # [SLAB_B, T, HD]
            kh = k3[:, :, lo:lo + HD]
            s = jnp.einsum("bid,bjd->bij", qh, kh,
                           preferred_element_type=f32) * scale + bias
            s = s - jnp.max(s, axis=-1, keepdims=True)
            p = jnp.exp(s)
            p = p * pl.reciprocal(jnp.sum(p, axis=-1, keepdims=True), approx=True)
            oh_full = jnp.einsum("bij,bjd->bid", p, v3,
                                 preferred_element_type=f32)       # [SLAB_B, T, HP]
            part = oh_full * head_masks[hh]
            attn_pre = part if attn_pre is None else attn_pre + part
        attn = mm(attn_pre.reshape(ROWS, HP), wo_ref[l]) + bo_ref[l]
        x = x + attn

        # ---------------- cross attention to the single encoder token --------
        cp = cross_all[:, l * HP:(l + 1) * HP]                     # [SLAB_B, HP], tile aligned
        x = x + jnp.broadcast_to(cp[:, None, :], (SLAB_B, T, HP)).reshape(ROWS, HP)

        # ---------------- MLP (gelu_new) ----------------
        h2 = layernorm(x, ln2_g_ref[l], ln2_b_ref[l])
        m = mm(h2, wfc_ref[l]) + bfc_ref[l]                        # [ROWS, F4]
        m = 0.5 * m * (1.0 + jnp.tanh(0.7978845608028654 *
                                      (m + 0.044715 * m * m * m)))
        x = x + mm(m, wpr_ref[l]) + bpr_ref[l]

    # ---------------- final LN + tied LM head ----------------
    xf = layernorm(x, lnf_g_ref[...], lnf_b_ref[...])
    o_ref[...] = mm(xf, lm_w_ref[...])                             # [ROWS, VP] lane-dense


# ----------------------------- parameters (padded, stacked, bf16) -------------
def init_params(key):
    keys = iter(jax.random.split(key, 64))

    def nrm(shape, scale=0.02):
        return scale * jax.random.normal(next(keys), shape, jnp.float32)

    def pad2(w, rows, cols):
        return jnp.zeros((rows, cols), jnp.float32).at[: w.shape[0], : w.shape[1]].set(w)

    def pad_row(v, cols=HP):
        return jnp.zeros((1, cols), jnp.float32).at[0, : v.shape[0]].set(v)

    wte = nrm((VOCAB, H))
    wpe = nrm((MAXPOS, H))

    params = {
        # embeddings pre-padded to HP so the gather yields lane-padded rows directly
        "wte_pad": pad2(wte, VOCAB, HP),
        "wpe_pad": pad2(wpe, MAXPOS, HP),
        "enc_w": pad2(nrm((C, H)), C, HP).astype(jnp.bfloat16),
        "enc_b": pad_row(nrm((H,))),
        "lnf_g": pad_row(jnp.ones((H,), jnp.float32)),
        "lnf_b": jnp.zeros((1, HP), jnp.float32),
        "lm_w": pad2(wte.T, HP, VP).astype(jnp.bfloat16),          # tied head (no bias)
    }

    ln_gain = jnp.stack([pad_row(jnp.ones((H,), jnp.float32))] * NLAYER)
    ln_bias = jnp.zeros((NLAYER, 1, HP), jnp.float32)
    params["ln1_g"], params["ln1_b"] = ln_gain, ln_bias
    params["ln2_g"], params["ln2_b"] = ln_gain, ln_bias

    wqkv_l, bqkv_l, wo_l, bo_l = [], [], [], []
    wc_cols, bc_cols = [], []
    wfc_l, bfc_l, wpr_l, bpr_l = [], [], [], []
    for _ in range(NLAYER):
        # fused QKV, each projection at tile-aligned lane offsets 0/128/256
        w = jnp.zeros((HP, 3 * HP), jnp.float32)
        bb = jnp.zeros((1, 3 * HP), jnp.float32)
        for s in range(3):
            w = w.at[:H, s * HP: s * HP + H].set(nrm((H, H)))
            bb = bb.at[0, s * HP: s * HP + H].set(nrm((H,)))
        wqkv_l.append(w)
        bqkv_l.append(bb)

        wo_l.append(pad2(nrm((H, H)), HP, HP))
        bo_l.append(pad_row(nrm((H,))))

        # Tk==1 cross attention: pre-compose cross_v -> cross_proj into one affine
        wcv, bcv = nrm((H, H)), nrm((H,))
        wcp, bcp = nrm((H, H)), nrm((H,))
        wc_cols.append(pad2(wcv @ wcp, HP, HP))
        bc_cols.append(pad_row(bcv @ wcp + bcp))

        wfc_l.append(pad2(nrm((H, 4 * H)), HP, F4))
        bfc_l.append(pad_row(nrm((4 * H,)), F4))
        wpr_l.append(pad2(nrm((4 * H, H)), F4, HP))
        bpr_l.append(pad_row(nrm((H,))))

    params["wqkv"] = jnp.stack(wqkv_l).astype(jnp.bfloat16)
    params["bqkv"] = jnp.stack(bqkv_l)
    params["wo"] = jnp.stack(wo_l).astype(jnp.bfloat16)
    params["bo"] = jnp.stack(bo_l)
    params["wcross"] = jnp.concatenate(wc_cols, axis=1).astype(jnp.bfloat16)   # [HP, NLAYER*HP]
    params["bcross"] = jnp.concatenate(bc_cols, axis=1)                        # [1, NLAYER*HP]
    params["wfc"] = jnp.stack(wfc_l).astype(jnp.bfloat16)
    params["bfc"] = jnp.stack(bfc_l)
    params["wpr"] = jnp.stack(wpr_l).astype(jnp.bfloat16)
    params["bpr"] = jnp.stack(bpr_l)
    return params


# ----------------------------- forward -----------------------------------------
def ergpt2_forward(params, ecg, input_ids, attention_mask, label_ids):
    b, t = input_ids.shape
    assert t == T and b % SLAB_B == 0

    # decoder embeddings: gather already yields the lane-padded layout
    x = jnp.take(params["wte_pad"], input_ids, axis=0) + params["wpe_pad"][:t][None]
    x = x.reshape(b * t, HP).astype(jnp.float32)

    mask3 = attention_mask.astype(jnp.float32).reshape(b, 1, t)

    weight_names = ("enc_w", "enc_b", "ln1_g", "ln1_b", "wqkv", "bqkv", "wo", "bo",
                    "wcross", "bcross", "ln2_g", "ln2_b",
                    "wfc", "bfc", "wpr", "bpr", "lnf_g", "lnf_b", "lm_w")
    weights = [params[k] for k in weight_names]

    def resident(arr):
        # whole array, constant block index -> fetched once, VMEM-resident
        return pl.BlockSpec(arr.shape, lambda g, _nd=arr.ndim: (0,) * _nd)

    in_specs = ([
        pl.BlockSpec((SLAB_B, C, L), lambda g: (g, 0, 0)),
        pl.BlockSpec((SLAB_B * T, HP), lambda g: (g, 0)),
        pl.BlockSpec((SLAB_B, 1, T), lambda g: (g, 0, 0)),
    ] + [resident(w) for w in weights])
    out_spec = pl.BlockSpec((SLAB_B * T, VP), lambda g: (g, 0))

    # advisory cost estimate for XLA's scheduler
    mm_flops = 2 * b * t * (NLAYER * (HP * 3 * HP + HP * HP + HP * F4 + F4 * HP) + HP * VP)
    attn_flops = 2 * b * NLAYER * NH * (T * T * HD + T * T * HP)
    cross_flops = 2 * b * (C * HP + HP * NLAYER * HP)
    transcend = NLAYER * b * (NH * T * T + t * F4)
    bytes_acc = int(sum(a.size * a.dtype.itemsize for a in [ecg, x, mask3] + weights)
                    + b * t * VP * 4)
    cost = pl.CostEstimate(flops=int(mm_flops + attn_flops + cross_flops),
                           transcendentals=int(transcend),
                           bytes_accessed=bytes_acc)

    logits_p = pl.pallas_call(
        _fused_kernel,
        out_shape=jax.ShapeDtypeStruct((b * t, VP), jnp.float32),
        grid=(b // SLAB_B,),
        in_specs=in_specs,
        out_specs=out_spec,
        compiler_params=pltpu.CompilerParams(dimension_semantics=("parallel",)),
        cost_estimate=cost,
    )(ecg, x, mask3, *weights)

    logits = logits_p[:, :VOCAB].reshape(b, t, VOCAB)
    return logits, input_ids, attention_mask, label_ids


# ----------------------------- main ---------------------------------------------
if __name__ == "__main__":
    key = jax.random.PRNGKey(0)
    k_param, k_ecg, k_ids, k_lbl = jax.random.split(key, 4)

    params = init_params(k_param)

    ecg = jax.random.normal(k_ecg, (B, C, L), jnp.float32)               # [B, C, L]
    input_ids = jax.random.randint(k_ids, (B, T), 0, VOCAB, jnp.int32)
    label_ids = jax.random.randint(k_lbl, (B, T), 0, VOCAB, jnp.int32)
    # right-padded mask (lengths 8 and 5), mimicking tokenizer padding
    lengths = jnp.array([T, 5], jnp.int32)
    attention_mask = (jnp.arange(T)[None, :] < lengths[:, None]).astype(jnp.int32)

    fwd = jax.jit(ergpt2_forward)
    logits, ids_out, mask_out, labels_out = fwd(
        params, ecg, input_ids, attention_mask, label_ids
    )
    jax.block_until_ready(logits)

    assert logits.shape == (B, T, VOCAB)
    assert ids_out.shape == (B, T)
    assert mask_out.shape == (B, T)
    assert labels_out.shape == (B, T)
    assert bool(jnp.all(jnp.isfinite(logits)))
    print("KERNEL_OK")
</pallas_src>

<mosaic_0001>
module attributes {stable_mosaic.version = 11 : i64} {
  func.func @_fused_kernel(%arg0: i32, %arg1: memref<1x4x16xf32, #tpu.memory_space<vmem>>, %arg2: memref<8x128xf32, #tpu.memory_space<vmem>>, %arg3: memref<1x1x8xf32, #tpu.memory_space<vmem>>, %arg4: memref<4x128xbf16, #tpu.memory_space<vmem>>, %arg5: memref<1x128xf32, #tpu.memory_space<vmem>>, %arg6: memref<2x1x128xf32, #tpu.memory_space<vmem>>, %arg7: memref<2x1x128xf32, #tpu.memory_space<vmem>>, %arg8: memref<2x128x384xbf16, #tpu.memory_space<vmem>>, %arg9: memref<2x1x384xf32, #tpu.memory_space<vmem>>, %arg10: memref<2x128x128xbf16, #tpu.memory_space<vmem>>, %arg11: memref<2x1x128xf32, #tpu.memory_space<vmem>>, %arg12: memref<128x256xbf16, #tpu.memory_space<vmem>>, %arg13: memref<1x256xf32, #tpu.memory_space<vmem>>, %arg14: memref<2x1x128xf32, #tpu.memory_space<vmem>>, %arg15: memref<2x1x128xf32, #tpu.memory_space<vmem>>, %arg16: memref<2x128x128xbf16, #tpu.memory_space<vmem>>, %arg17: memref<2x1x128xf32, #tpu.memory_space<vmem>>, %arg18: memref<2x128x128xbf16, #tpu.memory_space<vmem>>, %arg19: memref<2x1x128xf32, #tpu.memory_space<vmem>>, %arg20: memref<1x128xf32, #tpu.memory_space<vmem>>, %arg21: memref<1x128xf32, #tpu.memory_space<vmem>>, %arg22: memref<128x128xbf16, #tpu.memory_space<vmem>>, %arg23: memref<8x128xf32, #tpu.memory_space<vmem>>) attributes {dimension_semantics = [#tpu.dimension_semantics<parallel>], iteration_bounds = array<i64: 2>, scalar_prefetch = 0 : i64, scratch_operands = 0 : i64, tpu.core_type = #tpu.core_type<tc>, window_params = [{transform_indices = @transform_0, window_bounds = array<i64: 1, 4, 16>}, {transform_indices = @transform_1, window_bounds = array<i64: 8, 128>}, {transform_indices = @transform_2, window_bounds = array<i64: 1, 1, 8>}, {pipeline_mode = #tpu.pipeline_mode<synchronous>, transform_indices = @transform_3, window_bounds = array<i64: 4, 128>}, {pipeline_mode = #tpu.pipeline_mode<synchronous>, transform_indices = @transform_4, window_bounds = array<i64: 1, 128>}, {pipeline_mode = #tpu.pipeline_mode<synchronous>, transform_indices = @transform_5, window_bounds = array<i64: 2, 1, 128>}, {pipeline_mode = #tpu.pipeline_mode<synchronous>, transform_indices = @transform_6, window_bounds = array<i64: 2, 1, 128>}, {pipeline_mode = #tpu.pipeline_mode<synchronous>, transform_indices = @transform_7, window_bounds = array<i64: 2, 128, 384>}, {pipeline_mode = #tpu.pipeline_mode<synchronous>, transform_indices = @transform_8, window_bounds = array<i64: 2, 1, 384>}, {pipeline_mode = #tpu.pipeline_mode<synchronous>, transform_indices = @transform_9, window_bounds = array<i64: 2, 128, 128>}, {pipeline_mode = #tpu.pipeline_mode<synchronous>, transform_indices = @transform_10, window_bounds = array<i64: 2, 1, 128>}, {pipeline_mode = #tpu.pipeline_mode<synchronous>, transform_indices = @transform_11, window_bounds = array<i64: 128, 256>}, {pipeline_mode = #tpu.pipeline_mode<synchronous>, transform_indices = @transform_12, window_bounds = array<i64: 1, 256>}, {pipeline_mode = #tpu.pipeline_mode<synchronous>, transform_indices = @transform_13, window_bounds = array<i64: 2, 1, 128>}, {pipeline_mode = #tpu.pipeline_mode<synchronous>, transform_indices = @transform_14, window_bounds = array<i64: 2, 1, 128>}, {pipeline_mode = #tpu.pipeline_mode<synchronous>, transform_indices = @transform_15, window_bounds = array<i64: 2, 128, 128>}, {pipeline_mode = #tpu.pipeline_mode<synchronous>, transform_indices = @transform_16, window_bounds = array<i64: 2, 1, 128>}, {pipeline_mode = #tpu.pipeline_mode<synchronous>, transform_indices = @transform_17, window_bounds = array<i64: 2, 128, 128>}, {pipeline_mode = #tpu.pipeline_mode<synchronous>, transform_indices = @transform_18, window_bounds = array<i64: 2, 1, 128>}, {pipeline_mode = #tpu.pipeline_mode<synchronous>, transform_indices = @transform_19, window_bounds = array<i64: 1, 128>}, {pipeline_mode = #tpu.pipeline_mode<synchronous>, transform_indices = @transform_20, window_bounds = array<i64: 1, 128>}, {pipeline_mode = #tpu.pipeline_mode<synchronous>, transform_indices = @transform_21, window_bounds = array<i64: 128, 128>}, {transform_indices = @transform_22, window_bounds = array<i64: 8, 128>}]} {
    %0 = tpu.iota {dimensions = array<i32: 1>} : vector<1x128xi32>
    %c32_i32 = arith.constant 32 : i32
    %1 = vector.broadcast %c32_i32 : i32 to vector<1x128xi32>
    %2 = arith.cmpi slt, %0, %1 : vector<1x128xi32>
    %3 = arith.extui %2 : vector<1x128xi1> to vector<1x128xi32>
    %4 = arith.sitofp %3 : vector<1x128xi32> to vector<1x128xf32>
    %c0 = arith.constant 0 : index
    %c0_0 = arith.constant 0 : index
    %c0_1 = arith.constant 0 : index
    %5 = vector.load %arg1[%c0, %c0_0, %c0_1] : memref<1x4x16xf32, #tpu.memory_space<vmem>>, vector<1x4x16xf32>
    %cst = arith.constant dense<0.000000e+00> : vector<1x4xf32>
    %6 = vector.multi_reduction <add>, %5, %cst [2] : vector<1x4x16xf32> to vector<1x4xf32>
    %cst_2 = arith.constant 6.250000e-02 : f32
    %7 = vector.broadcast %cst_2 : f32 to vector<1x4xf32>
    %8 = arith.mulf %6, %7 : vector<1x4xf32>
    %c0_3 = arith.constant 0 : index
    %c0_4 = arith.constant 0 : index
    %9 = vector.load %arg4[%c0_3, %c0_4] : memref<4x128xbf16, #tpu.memory_space<vmem>>, vector<4x128xbf16>
    %10 = arith.truncf %8 : vector<1x4xf32> to vector<1x4xbf16>
    %cst_5 = arith.constant dense<0.000000e+00> : vector<1x128xf32>
    %11 = tpu.matmul %10, %9, %cst_5 {dimension_numbers = #tpu.dot_dimension_numbers<[1], [0], [0], [1], [0, 0, 1, 1], [], []>} : vector<1x4xbf16>, vector<4x128xbf16>, vector<1x128xf32> -> vector<1x128xf32>
    %c0_6 = arith.constant 0 : index
    %c0_7 = arith.constant 0 : index
    %12 = vector.load %arg5[%c0_6, %c0_7] : memref<1x128xf32, #tpu.memory_space<vmem>>, vector<1x128xf32>
    %13 = arith.addf %11, %12 : vector<1x128xf32>
    %c0_8 = arith.constant 0 : index
    %c0_9 = arith.constant 0 : index
    %14 = vector.load %arg12[%c0_8, %c0_9] : memref<128x256xbf16, #tpu.memory_space<vmem>>, vector<128x256xbf16>
    %15 = arith.truncf %13 : vector<1x128xf32> to vector<1x128xbf16>
    %cst_10 = arith.constant dense<0.000000e+00> : vector<1x256xf32>
    %16 = tpu.matmul %15, %14, %cst_10 {dimension_numbers = #tpu.dot_dimension_numbers<[1], [0], [0], [1], [0, 0, 1, 1], [], []>} : vector<1x128xbf16>, vector<128x256xbf16>, vector<1x256xf32> -> vector<1x256xf32>
    %c0_11 = arith.constant 0 : index
    %c0_12 = arith.constant 0 : index
    %17 = vector.load %arg13[%c0_11, %c0_12] : memref<1x256xf32, #tpu.memory_space<vmem>>, vector<1x256xf32>
    %18 = arith.addf %16, %17 : vector<1x256xf32>
    %19 = tpu.iota {dimensions = array<i32: 0>} : vector<8x8xi32>
    %20 = tpu.iota {dimensions = array<i32: 1>} : vector<8x8xi32>
    %21 = arith.cmpi sle, %20, %19 : vector<8x8xi32>
    %22 = arith.extui %21 : vector<8x8xi1> to vector<8x8xi32>
    %23 = arith.sitofp %22 : vector<8x8xi32> to vector<8x8xf32>
    %24 = vector.shape_cast %23 : vector<8x8xf32> to vector<1x8x8xf32>
    %c0_13 = arith.constant 0 : index
    %c0_14 = arith.constant 0 : index
    %c0_15 = arith.constant 0 : index
    %25 = vector.load %arg3[%c0_13, %c0_14, %c0_15] : memref<1x1x8xf32, #tpu.memory_space<vmem>>, vector<1x1x8xf32>
    %26 = vector.broadcast %25 : vector<1x1x8xf32> to vector<1x8x8xf32>
    %27 = arith.mulf %24, %26 : vector<1x8x8xf32>
    %cst_16 = arith.constant 1.000000e+00 : f32
    %28 = vector.broadcast %cst_16 : f32 to vector<1x8x8xf32>
    %29 = arith.subf %28, %27 : vector<1x8x8xf32>
    %cst_17 = arith.constant -1.000000e+09 : f32
    %30 = vector.broadcast %cst_17 : f32 to vector<1x8x8xf32>
    %31 = arith.mulf %29, %30 : vector<1x8x8xf32>
    %32 = tpu.iota {dimensions = array<i32: 2>} : vector<1x1x128xi32>
    %c0_i32 = arith.constant 0 : i32
    %33 = vector.broadcast %c0_i32 : i32 to vector<1x1x128xi32>
    %34 = arith.cmpi sge, %32, %33 : vector<1x1x128xi32>
    %c8_i32 = arith.constant 8 : i32
    %35 = vector.broadcast %c8_i32 : i32 to vector<1x1x128xi32>
    %36 = arith.cmpi slt, %32, %35 : vector<1x1x128xi32>
    %37 = arith.andi %34, %36 : vector<1x1x128xi1>
    %38 = arith.extui %37 : vector<1x1x128xi1> to vector<1x1x128xi32>
    %39 = arith.sitofp %38 : vector<1x1x128xi32> to vector<1x1x128xf32>
    %c8_i32_18 = arith.constant 8 : i32
    %40 = vector.broadcast %c8_i32_18 : i32 to vector<1x1x128xi32>
    %41 = arith.cmpi sge, %32, %40 : vector<1x1x128xi32>
    %c16_i32 = arith.constant 16 : i32
    %42 = vector.broadcast %c16_i32 : i32 to vector<1x1x128xi32>
    %43 = arith.cmpi slt, %32, %42 : vector<1x1x128xi32>
    %44 = arith.andi %41, %43 : vector<1x1x128xi1>
    %45 = arith.extui %44 : vector<1x1x128xi1> to vector<1x1x128xi32>
    %46 = arith.sitofp %45 : vector<1x1x128xi32> to vector<1x1x128xf32>
    %c16_i32_19 = arith.constant 16 : i32
    %47 = vector.broadcast %c16_i32_19 : i32 to vector<1x1x128xi32>
    %48 = arith.cmpi sge, %32, %47 : vector<1x1x128xi32>
    %c24_i32 = arith.constant 24 : i32
    %49 = vector.broadcast %c24_i32 : i32 to vector<1x1x128xi32>
    %50 = arith.cmpi slt, %32, %49 : vector<1x1x128xi32>
    %51 = arith.andi %48, %50 : vector<1x1x128xi1>
    %52 = arith.extui %51 : vector<1x1x128xi1> to vector<1x1x128xi32>
    %53 = arith.sitofp %52 : vector<1x1x128xi32> to vector<1x1x128xf32>
    %c24_i32_20 = arith.constant 24 : i32
    %54 = vector.broadcast %c24_i32_20 : i32 to vector<1x1x128xi32>
    %55 = arith.cmpi sge, %32, %54 : vector<1x1x128xi32>
    %c32_i32_21 = arith.constant 32 : i32
    %56 = vector.broadcast %c32_i32_21 : i32 to vector<1x1x128xi32>
    %57 = arith.cmpi slt, %32, %56 : vector<1x1x128xi32>
    %58 = arith.andi %55, %57 : vector<1x1x128xi1>
    %59 = arith.extui %58 : vector<1x1x128xi1> to vector<1x1x128xi32>
    %60 = arith.sitofp %59 : vector<1x1x128xi32> to vector<1x1x128xf32>
    %c0_22 = arith.constant 0 : index
    %c0_23 = arith.constant 0 : index
    %61 = vector.load %arg2[%c0_22, %c0_23] : memref<8x128xf32, #tpu.memory_space<vmem>>, vector<8x128xf32>
    %c0_24 = arith.constant 0 : index
    %c0_25 = arith.constant 0 : index
    %c0_26 = arith.constant 0 : index
    %62 = vector.load %arg6[%c0_24, %c0_25, %c0_26] : memref<2x1x128xf32, #tpu.memory_space<vmem>>, vector<1x1x128xf32>
    %63 = vector.shape_cast %62 : vector<1x1x128xf32> to vector<1x128xf32>
    %c0_27 = arith.constant 0 : index
    %c0_28 = arith.constant 0 : index
    %c0_29 = arith.constant 0 : index
    %64 = vector.load %arg7[%c0_27, %c0_28, %c0_29] : memref<2x1x128xf32, #tpu.memory_space<vmem>>, vector<1x1x128xf32>
    %65 = vector.shape_cast %64 : vector<1x1x128xf32> to vector<1x128xf32>
    %66 = vector.broadcast %4 : vector<1x128xf32> to vector<8x128xf32>
    %67 = arith.mulf %61, %66 : vector<8x128xf32>
    %cst_30 = arith.constant dense<0.000000e+00> : vector<8xf32>
    %68 = vector.multi_reduction <add>, %67, %cst_30 [1] : vector<8x128xf32> to vector<8xf32>
    %69 = vector.shape_cast %68 : vector<8xf32> to vector<8x1xf32>
    %cst_31 = arith.constant 3.125000e-02 : f32
    %70 = vector.broadcast %cst_31 : f32 to vector<8x1xf32>
    %71 = arith.mulf %69, %70 : vector<8x1xf32>
    %72 = vector.broadcast %71 : vector<8x1xf32> to vector<8x128xf32>
    %73 = arith.subf %67, %72 : vector<8x128xf32>
    %74 = vector.broadcast %4 : vector<1x128xf32> to vector<8x128xf32>
    %75 = arith.mulf %73, %74 : vector<8x128xf32>
    %76 = arith.mulf %75, %75 : vector<8x128xf32>
    %cst_32 = arith.constant dense<0.000000e+00> : vector<8xf32>
    %77 = vector.multi_reduction <add>, %76, %cst_32 [1] : vector<8x128xf32> to vector<8xf32>
    %78 = vector.shape_cast %77 : vector<8xf32> to vector<8x1xf32>
    %cst_33 = arith.constant 3.125000e-02 : f32
    %79 = vector.broadcast %cst_33 : f32 to vector<8x1xf32>
    %80 = arith.mulf %78, %79 : vector<8x1xf32>
    %cst_34 = arith.constant 9.99999974E-6 : f32
    %81 = vector.broadcast %cst_34 : f32 to vector<8x1xf32>
    %82 = arith.addf %80, %81 : vector<8x1xf32>
    %83 = math.rsqrt %82 : vector<8x1xf32>
    %84 = vector.broadcast %83 : vector<8x1xf32> to vector<8x128xf32>
    %85 = arith.mulf %75, %84 : vector<8x128xf32>
    %86 = vector.broadcast %63 : vector<1x128xf32> to vector<8x128xf32>
    %87 = arith.mulf %85, %86 : vector<8x128xf32>
    %88 = vector.broadcast %65 : vector<1x128xf32> to vector<8x128xf32>
    %89 = arith.addf %87, %88 : vector<8x128xf32>
    %c0_35 = arith.constant 0 : index
    %c0_36 = arith.constant 0 : index
    %c0_37 = arith.constant 0 : index
    %90 = vector.load %arg8[%c0_35, %c0_36, %c0_37] : memref<2x128x384xbf16, #tpu.memory_space<vmem>>, vector<1x128x384xbf16>
    %91 = vector.shape_cast %90 : vector<1x128x384xbf16> to vector<128x384xbf16>
    %92 = arith.truncf %89 : vector<8x128xf32> to vector<8x128xbf16>
    %cst_38 = arith.constant dense<0.000000e+00> : vector<8x384xf32>
    %93 = tpu.matmul %92, %91, %cst_38 {dimension_numbers = #tpu.dot_dimension_numbers<[1], [0], [0], [1], [0, 0, 1, 1], [], []>} : vector<8x128xbf16>, vector<128x384xbf16>, vector<8x384xf32> -> vector<8x384xf32>
    %c0_39 = arith.constant 0 : index
    %c0_40 = arith.constant 0 : index
    %c0_41 = arith.constant 0 : index
    %94 = vector.load %arg9[%c0_39, %c0_40, %c0_41] : memref<2x1x384xf32, #tpu.memory_space<vmem>>, vector<1x1x384xf32>
    %95 = vector.shape_cast %94 : vector<1x1x384xf32> to vector<1x384xf32>
    %96 = vector.broadcast %95 : vector<1x384xf32> to vector<8x384xf32>
    %97 = arith.addf %93, %96 : vector<8x384xf32>
    %98 = vector.extract_strided_slice %97 {offsets = [0, 0], sizes = [8, 128], strides = [1, 1]} : vector<8x384xf32> to vector<8x128xf32>
    %99 = vector.shape_cast %98 : vector<8x128xf32> to vector<1x8x128xf32>
    %100 = vector.extract_strided_slice %97 {offsets = [0, 128], sizes = [8, 128], strides = [1, 1]} : vector<8x384xf32> to vector<8x128xf32>
    %101 = vector.shape_cast %100 : vector<8x128xf32> to vector<1x8x128xf32>
    %102 = vector.extract_strided_slice %97 {offsets = [0, 256], sizes = [8, 128], strides = [1, 1]} : vector<8x384xf32> to vector<8x128xf32>
    %103 = vector.shape_cast %102 : vector<8x128xf32> to vector<1x8x128xf32>
    %104 = vector.extract_strided_slice %99 {offsets = [0, 0, 0], sizes = [1, 8, 8], strides = [1, 1, 1]} : vector<1x8x128xf32> to vector<1x8x8xf32>
    %105 = vector.extract_strided_slice %101 {offsets = [0, 0, 0], sizes = [1, 8, 8], strides = [1, 1, 1]} : vector<1x8x128xf32> to vector<1x8x8xf32>
    "tpu.trace_start"() <{level = 10 : i32, message = "bid,bjd->bij"}> : () -> ()
    %cst_42 = arith.constant dense<0.000000e+00> : vector<1x8x8xf32>
    %106 = tpu.matmul %104, %105, %cst_42 {dimension_numbers = #tpu.dot_dimension_numbers<[2], [2], [1], [1], [0, 0, 0, 1, 1, 1], [0], [0]>} : vector<1x8x8xf32>, vector<1x8x8xf32>, vector<1x8x8xf32> -> vector<1x8x8xf32>
    "tpu.trace_stop"() : () -> ()
    %cst_43 = arith.constant 0.353553385 : f32
    %107 = vector.broadcast %cst_43 : f32 to vector<1x8x8xf32>
    %108 = arith.mulf %106, %107 : vector<1x8x8xf32>
    %109 = arith.addf %108, %31 : vector<1x8x8xf32>
    %cst_44 = arith.constant dense<0xFF800000> : vector<1x8xf32>
    %110 = vector.multi_reduction <maximumf>, %109, %cst_44 [2] : vector<1x8x8xf32> to vector<1x8xf32>
    %111 = vector.shape_cast %110 : vector<1x8xf32> to vector<1x8x1xf32>
    %112 = vector.broadcast %111 : vector<1x8x1xf32> to vector<1x8x8xf32>
    %113 = arith.subf %109, %112 : vector<1x8x8xf32>
    %114 = math.exp %113 : vector<1x8x8xf32>
    %cst_45 = arith.constant dense<0.000000e+00> : vector<1x8xf32>
    %115 = vector.multi_reduction <add>, %114, %cst_45 [2] : vector<1x8x8xf32> to vector<1x8xf32>
    %116 = vector.shape_cast %115 : vector<1x8xf32> to vector<1x8x1xf32>
    %117 = tpu.reciprocal %116 {approx = true} : vector<1x8x1xf32> -> vector<1x8x1xf32>
    %118 = vector.broadcast %117 : vector<1x8x1xf32> to vector<1x8x8xf32>
    %119 = arith.mulf %114, %118 : vector<1x8x8xf32>
    "tpu.trace_start"() <{level = 10 : i32, message = "bij,bjd->bid"}> : () -> ()
    %cst_46 = arith.constant dense<0.000000e+00> : vector<1x8x128xf32>
    %120 = tpu.matmul %119, %103, %cst_46 {dimension_numbers = #tpu.dot_dimension_numbers<[2], [1], [1], [2], [0, 0, 0, 1, 1, 2], [0], [0]>} : vector<1x8x8xf32>, vector<1x8x128xf32>, vector<1x8x128xf32> -> vector<1x8x128xf32>
    "tpu.trace_stop"() : () -> ()
    %121 = vector.broadcast %39 : vector<1x1x128xf32> to vector<1x8x128xf32>
    %122 = arith.mulf %120, %121 : vector<1x8x128xf32>
    %123 = vector.extract_strided_slice %99 {offsets = [0, 0, 8], sizes = [1, 8, 8], strides = [1, 1, 1]} : vector<1x8x128xf32> to vector<1x8x8xf32>
    %124 = vector.extract_strided_slice %101 {offsets = [0, 0, 8], sizes = [1, 8, 8], strides = [1, 1, 1]} : vector<1x8x128xf32> to vector<1x8x8xf32>
    "tpu.trace_start"() <{level = 10 : i32, message = "bid,bjd->bij"}> : () -> ()
    %cst_47 = arith.constant dense<0.000000e+00> : vector<1x8x8xf32>
    %125 = tpu.matmul %123, %124, %cst_47 {dimension_numbers = #tpu.dot_dimension_numbers<[2], [2], [1], [1], [0, 0, 0, 1, 1, 1], [0], [0]>} : vector<1x8x8xf32>, vector<1x8x8xf32>, vector<1x8x8xf32> -> vector<1x8x8xf32>
    "tpu.trace_stop"() : () -> ()
    %cst_48 = arith.constant 0.353553385 : f32
    %126 = vector.broadcast %cst_48 : f32 to vector<1x8x8xf32>
    %127 = arith.mulf %125, %126 : vector<1x8x8xf32>
    %128 = arith.addf %127, %31 : vector<1x8x8xf32>
    %cst_49 = arith.constant dense<0xFF800000> : vector<1x8xf32>
    %129 = vector.multi_reduction <maximumf>, %128, %cst_49 [2] : vector<1x8x8xf32> to vector<1x8xf32>
    %130 = vector.shape_cast %129 : vector<1x8xf32> to vector<1x8x1xf32>
    %131 = vector.broadcast %130 : vector<1x8x1xf32> to vector<1x8x8xf32>
    %132 = arith.subf %128, %131 : vector<1x8x8xf32>
    %133 = math.exp %132 : vector<1x8x8xf32>
    %cst_50 = arith.constant dense<0.000000e+00> : vector<1x8xf32>
    %134 = vector.multi_reduction <add>, %133, %cst_50 [2] : vector<1x8x8xf32> to vector<1x8xf32>
    %135 = vector.shape_cast %134 : vector<1x8xf32> to vector<1x8x1xf32>
    %136 = tpu.reciprocal %135 {approx = true} : vector<1x8x1xf32> -> vector<1x8x1xf32>
    %137 = vector.broadcast %136 : vector<1x8x1xf32> to vector<1x8x8xf32>
    %138 = arith.mulf %133, %137 : vector<1x8x8xf32>
    "tpu.trace_start"() <{level = 10 : i32, message = "bij,bjd->bid"}> : () -> ()
    %cst_51 = arith.constant dense<0.000000e+00> : vector<1x8x128xf32>
    %139 = tpu.matmul %138, %103, %cst_51 {dimension_numbers = #tpu.dot_dimension_numbers<[2], [1], [1], [2], [0, 0, 0, 1, 1, 2], [0], [0]>} : vector<1x8x8xf32>, vector<1x8x128xf32>, vector<1x8x128xf32> -> vector<1x8x128xf32>
    "tpu.trace_stop"() : () -> ()
    %140 = vector.broadcast %46 : vector<1x1x128xf32> to vector<1x8x128xf32>
    %141 = arith.mulf %139, %140 : vector<1x8x128xf32>
    %142 = arith.addf %122, %141 : vector<1x8x128xf32>
    %143 = vector.extract_strided_slice %99 {offsets = [0, 0, 16], sizes = [1, 8, 8], strides = [1, 1, 1]} : vector<1x8x128xf32> to vector<1x8x8xf32>
    %144 = vector.extract_strided_slice %101 {offsets = [0, 0, 16], sizes = [1, 8, 8], strides = [1, 1, 1]} : vector<1x8x128xf32> to vector<1x8x8xf32>
    "tpu.trace_start"() <{level = 10 : i32, message = "bid,bjd->bij"}> : () -> ()
    %cst_52 = arith.constant dense<0.000000e+00> : vector<1x8x8xf32>
    %145 = tpu.matmul %143, %144, %cst_52 {dimension_numbers = #tpu.dot_dimension_numbers<[2], [2], [1], [1], [0, 0, 0, 1, 1, 1], [0], [0]>} : vector<1x8x8xf32>, vector<1x8x8xf32>, vector<1x8x8xf32> -> vector<1x8x8xf32>
    "tpu.trace_stop"() : () -> ()
    %cst_53 = arith.constant 0.353553385 : f32
    %146 = vector.broadcast %cst_53 : f32 to vector<1x8x8xf32>
    %147 = arith.mulf %145, %146 : vector<1x8x8xf32>
    %148 = arith.addf %147, %31 : vector<1x8x8xf32>
    %cst_54 = arith.constant dense<0xFF800000> : vector<1x8xf32>
    %149 = vector.multi_reduction <maximumf>, %148, %cst_54 [2] : vector<1x8x8xf32> to vector<1x8xf32>
    %150 = vector.shape_cast %149 : vector<1x8xf32> to vector<1x8x1xf32>
    %151 = vector.broadcast %150 : vector<1x8x1xf32> to vector<1x8x8xf32>
    %152 = arith.subf %148, %151 : vector<1x8x8xf32>
    %153 = math.exp %152 : vector<1x8x8xf32>
    %cst_55 = arith.constant dense<0.000000e+00> : vector<1x8xf32>
    %154 = vector.multi_reduction <add>, %153, %cst_55 [2] : vector<1x8x8xf32> to vector<1x8xf32>
    %155 = vector.shape_cast %154 : vector<1x8xf32> to vector<1x8x1xf32>
    %156 = tpu.reciprocal %155 {approx = true} : vector<1x8x1xf32> -> vector<1x8x1xf32>
    %157 = vector.broadcast %156 : vector<1x8x1xf32> to vector<1x8x8xf32>
    %158 = arith.mulf %153, %157 : vector<1x8x8xf32>
    "tpu.trace_start"() <{level = 10 : i32, message = "bij,bjd->bid"}> : () -> ()
    %cst_56 = arith.constant dense<0.000000e+00> : vector<1x8x128xf32>
    %159 = tpu.matmul %158, %103, %cst_56 {dimension_numbers = #tpu.dot_dimension_numbers<[2], [1], [1], [2], [0, 0, 0, 1, 1, 2], [0], [0]>} : vector<1x8x8xf32>, vector<1x8x128xf32>, vector<1x8x128xf32> -> vector<1x8x128xf32>
    "tpu.trace_stop"() : () -> ()
    %160 = vector.broadcast %53 : vector<1x1x128xf32> to vector<1x8x128xf32>
    %161 = arith.mulf %159, %160 : vector<1x8x128xf32>
    %162 = arith.addf %142, %161 : vector<1x8x128xf32>
    %163 = vector.extract_strided_slice %99 {offsets = [0, 0, 24], sizes = [1, 8, 8], strides = [1, 1, 1]} : vector<1x8x128xf32> to vector<1x8x8xf32>
    %164 = vector.extract_strided_slice %101 {offsets = [0, 0, 24], sizes = [1, 8, 8], strides = [1, 1, 1]} : vector<1x8x128xf32> to vector<1x8x8xf32>
    "tpu.trace_start"() <{level = 10 : i32, message = "bid,bjd->bij"}> : () -> ()
    %cst_57 = arith.constant dense<0.000000e+00> : vector<1x8x8xf32>
    %165 = tpu.matmul %163, %164, %cst_57 {dimension_numbers = #tpu.dot_dimension_numbers<[2], [2], [1], [1], [0, 0, 0, 1, 1, 1], [0], [0]>} : vector<1x8x8xf32>, vector<1x8x8xf32>, vector<1x8x8xf32> -> vector<1x8x8xf32>
    "tpu.trace_stop"() : () -> ()
    %cst_58 = arith.constant 0.353553385 : f32
    %166 = vector.broadcast %cst_58 : f32 to vector<1x8x8xf32>
    %167 = arith.mulf %165, %166 : vector<1x8x8xf32>
    %168 = arith.addf %167, %31 : vector<1x8x8xf32>
    %cst_59 = arith.constant dense<0xFF800000> : vector<1x8xf32>
    %169 = vector.multi_reduction <maximumf>, %168, %cst_59 [2] : vector<1x8x8xf32> to vector<1x8xf32>
    %170 = vector.shape_cast %169 : vector<1x8xf32> to vector<1x8x1xf32>
    %171 = vector.broadcast %170 : vector<1x8x1xf32> to vector<1x8x8xf32>
    %172 = arith.subf %168, %171 : vector<1x8x8xf32>
    %173 = math.exp %172 : vector<1x8x8xf32>
    %cst_60 = arith.constant dense<0.000000e+00> : vector<1x8xf32>
    %174 = vector.multi_reduction <add>, %173, %cst_60 [2] : vector<1x8x8xf32> to vector<1x8xf32>
    %175 = vector.shape_cast %174 : vector<1x8xf32> to vector<1x8x1xf32>
    %176 = tpu.reciprocal %175 {approx = true} : vector<1x8x1xf32> -> vector<1x8x1xf32>
    %177 = vector.broadcast %176 : vector<1x8x1xf32> to vector<1x8x8xf32>
    %178 = arith.mulf %173, %177 : vector<1x8x8xf32>
    "tpu.trace_start"() <{level = 10 : i32, message = "bij,bjd->bid"}> : () -> ()
    %cst_61 = arith.constant dense<0.000000e+00> : vector<1x8x128xf32>
    %179 = tpu.matmul %178, %103, %cst_61 {dimension_numbers = #tpu.dot_dimension_numbers<[2], [1], [1], [2], [0, 0, 0, 1, 1, 2], [0], [0]>} : vector<1x8x8xf32>, vector<1x8x128xf32>, vector<1x8x128xf32> -> vector<1x8x128xf32>
    "tpu.trace_stop"() : () -> ()
    %180 = vector.broadcast %60 : vector<1x1x128xf32> to vector<1x8x128xf32>
    %181 = arith.mulf %179, %180 : vector<1x8x128xf32>
    %182 = arith.addf %162, %181 : vector<1x8x128xf32>
    %183 = vector.shape_cast %182 : vector<1x8x128xf32> to vector<8x128xf32>
    %c0_62 = arith.constant 0 : index
    %c0_63 = arith.constant 0 : index
    %c0_64 = arith.constant 0 : index
    %184 = vector.load %arg10[%c0_62, %c0_63, %c0_64] : memref<2x128x128xbf16, #tpu.memory_space<vmem>>, vector<1x128x128xbf16>
    %185 = vector.shape_cast %184 : vector<1x128x128xbf16> to vector<128x128xbf16>
    %186 = arith.truncf %183 : vector<8x128xf32> to vector<8x128xbf16>
    %cst_65 = arith.constant dense<0.000000e+00> : vector<8x128xf32>
    %187 = tpu.matmul %186, %185, %cst_65 {dimension_numbers = #tpu.dot_dimension_numbers<[1], [0], [0], [1], [0, 0, 1, 1], [], []>} : vector<8x128xbf16>, vector<128x128xbf16>, vector<8x128xf32> -> vector<8x128xf32>
    %c0_66 = arith.constant 0 : index
    %c0_67 = arith.constant 0 : index
    %c0_68 = arith.constant 0 : index
    %188 = vector.load %arg11[%c0_66, %c0_67, %c0_68] : memref<2x1x128xf32, #tpu.memory_space<vmem>>, vector<1x1x128xf32>
    %189 = vector.shape_cast %188 : vector<1x1x128xf32> to vector<1x128xf32>
    %190 = vector.broadcast %189 : vector<1x128xf32> to vector<8x128xf32>
    %191 = arith.addf %187, %190 : vector<8x128xf32>
    %192 = arith.addf %61, %191 : vector<8x128xf32>
    %193 = vector.extract_strided_slice %18 {offsets = [0, 0], sizes = [1, 128], strides = [1, 1]} : vector<1x256xf32> to vector<1x128xf32>
    %194 = vector.shape_cast %193 : vector<1x128xf32> to vector<1x1x128xf32>
    %195 = vector.shape_cast %194 : vector<1x1x128xf32> to vector<1x1x128xf32>
    %196 = vector.broadcast %195 : vector<1x1x128xf32> to vector<1x8x128xf32>
    %197 = vector.shape_cast %196 : vector<1x8x128xf32> to vector<8x128xf32>
    %198 = arith.addf %192, %197 : vector<8x128xf32>
    %c0_69 = arith.constant 0 : index
    %c0_70 = arith.constant 0 : index
    %c0_71 = arith.constant 0 : index
    %199 = vector.load %arg14[%c0_69, %c0_70, %c0_71] : memref<2x1x128xf32, #tpu.memory_space<vmem>>, vector<1x1x128xf32>
    %200 = vector.shape_cast %199 : vector<1x1x128xf32> to vector<1x128xf32>
    %c0_72 = arith.constant 0 : index
    %c0_73 = arith.constant 0 : index
    %c0_74 = arith.constant 0 : index
    %201 = vector.load %arg15[%c0_72, %c0_73, %c0_74] : memref<2x1x128xf32, #tpu.memory_space<vmem>>, vector<1x1x128xf32>
    %202 = vector.shape_cast %201 : vector<1x1x128xf32> to vector<1x128xf32>
    %203 = vector.broadcast %4 : vector<1x128xf32> to vector<8x128xf32>
    %204 = arith.mulf %198, %203 : vector<8x128xf32>
    %cst_75 = arith.constant dense<0.000000e+00> : vector<8xf32>
    %205 = vector.multi_reduction <add>, %204, %cst_75 [1] : vector<8x128xf32> to vector<8xf32>
    %206 = vector.shape_cast %205 : vector<8xf32> to vector<8x1xf32>
    %cst_76 = arith.constant 3.125000e-02 : f32
    %207 = vector.broadcast %cst_76 : f32 to vector<8x1xf32>
    %208 = arith.mulf %206, %207 : vector<8x1xf32>
    %209 = vector.broadcast %208 : vector<8x1xf32> to vector<8x128xf32>
    %210 = arith.subf %204, %209 : vector<8x128xf32>
    %211 = vector.broadcast %4 : vector<1x128xf32> to vector<8x128xf32>
    %212 = arith.mulf %210, %211 : vector<8x128xf32>
    %213 = arith.mulf %212, %212 : vector<8x128xf32>
    %cst_77 = arith.constant dense<0.000000e+00> : vector<8xf32>
    %214 = vector.multi_reduction <add>, %213, %cst_77 [1] : vector<8x128xf32> to vector<8xf32>
    %215 = vector.shape_cast %214 : vector<8xf32> to vector<8x1xf32>
    %cst_78 = arith.constant 3.125000e-02 : f32
    %216 = vector.broadcast %cst_78 : f32 to vector<8x1xf32>
    %217 = arith.mulf %215, %216 : vector<8x1xf32>
    %cst_79 = arith.constant 9.99999974E-6 : f32
    %218 = vector.broadcast %cst_79 : f32 to vector<8x1xf32>
    %219 = arith.addf %217, %218 : vector<8x1xf32>
    %220 = math.rsqrt %219 : vector<8x1xf32>
    %221 = vector.broadcast %220 : vector<8x1xf32> to vector<8x128xf32>
    %222 = arith.mulf %212, %221 : vector<8x128xf32>
    %223 = vector.broadcast %200 : vector<1x128xf32> to vector<8x128xf32>
    %224 = arith.mulf %222, %223 : vector<8x128xf32>
    %225 = vector.broadcast %202 : vector<1x128xf32> to vector<8x128xf32>
    %226 = arith.addf %224, %225 : vector<8x128xf32>
    %c0_80 = arith.constant 0 : index
    %c0_81 = arith.constant 0 : index
    %c0_82 = arith.constant 0 : index
    %227 = vector.load %arg16[%c0_80, %c0_81, %c0_82] : memref<2x128x128xbf16, #tpu.memory_space<vmem>>, vector<1x128x128xbf16>
    %228 = vector.shape_cast %227 : vector<1x128x128xbf16> to vector<128x128xbf16>
    %229 = arith.truncf %226 : vector<8x128xf32> to vector<8x128xbf16>
    %cst_83 = arith.constant dense<0.000000e+00> : vector<8x128xf32>
    %230 = tpu.matmul %229, %228, %cst_83 {dimension_numbers = #tpu.dot_dimension_numbers<[1], [0], [0], [1], [0, 0, 1, 1], [], []>} : vector<8x128xbf16>, vector<128x128xbf16>, vector<8x128xf32> -> vector<8x128xf32>
    %c0_84 = arith.constant 0 : index
    %c0_85 = arith.constant 0 : index
    %c0_86 = arith.constant 0 : index
    %231 = vector.load %arg17[%c0_84, %c0_85, %c0_86] : memref<2x1x128xf32, #tpu.memory_space<vmem>>, vector<1x1x128xf32>
    %232 = vector.shape_cast %231 : vector<1x1x128xf32> to vector<1x128xf32>
    %233 = vector.broadcast %232 : vector<1x128xf32> to vector<8x128xf32>
    %234 = arith.addf %230, %233 : vector<8x128xf32>
    %cst_87 = arith.constant 5.000000e-01 : f32
    %235 = vector.broadcast %cst_87 : f32 to vector<8x128xf32>
    %236 = arith.mulf %235, %234 : vector<8x128xf32>
    %cst_88 = arith.constant 4.471500e-02 : f32
    %237 = vector.broadcast %cst_88 : f32 to vector<8x128xf32>
    %238 = arith.mulf %237, %234 : vector<8x128xf32>
    %239 = arith.mulf %238, %234 : vector<8x128xf32>
    %240 = arith.mulf %239, %234 : vector<8x128xf32>
    %241 = arith.addf %234, %240 : vector<8x128xf32>
    %cst_89 = arith.constant 0.797884583 : f32
    %242 = vector.broadcast %cst_89 : f32 to vector<8x128xf32>
    %243 = arith.mulf %242, %241 : vector<8x128xf32>
    %244 = math.tanh %243 : vector<8x128xf32>
    %cst_90 = arith.constant 1.000000e+00 : f32
    %245 = vector.broadcast %cst_90 : f32 to vector<8x128xf32>
    %246 = arith.addf %245, %244 : vector<8x128xf32>
    %247 = arith.mulf %236, %246 : vector<8x128xf32>
    %c0_91 = arith.constant 0 : index
    %c0_92 = arith.constant 0 : index
    %c0_93 = arith.constant 0 : index
    %248 = vector.load %arg18[%c0_91, %c0_92, %c0_93] : memref<2x128x128xbf16, #tpu.memory_space<vmem>>, vector<1x128x128xbf16>
    %249 = vector.shape_cast %248 : vector<1x128x128xbf16> to vector<128x128xbf16>
    %250 = arith.truncf %247 : vector<8x128xf32> to vector<8x128xbf16>
    %cst_94 = arith.constant dense<0.000000e+00> : vector<8x128xf32>
    %251 = tpu.matmul %250, %249, %cst_94 {dimension_numbers = #tpu.dot_dimension_numbers<[1], [0], [0], [1], [0, 0, 1, 1], [], []>} : vector<8x128xbf16>, vector<128x128xbf16>, vector<8x128xf32> -> vector<8x128xf32>
    %252 = arith.addf %198, %251 : vector<8x128xf32>
    %c0_95 = arith.constant 0 : index
    %c0_96 = arith.constant 0 : index
    %c0_97 = arith.constant 0 : index
    %253 = vector.load %arg19[%c0_95, %c0_96, %c0_97] : memref<2x1x128xf32, #tpu.memory_space<vmem>>, vector<1x1x128xf32>
    %254 = vector.shape_cast %253 : vector<1x1x128xf32> to vector<1x128xf32>
    %255 = vector.broadcast %254 : vector<1x128xf32> to vector<8x128xf32>
    %256 = arith.addf %252, %255 : vector<8x128xf32>
    %c1 = arith.constant 1 : index
    %c0_98 = arith.constant 0 : index
    %c0_99 = arith.constant 0 : index
    %257 = vector.load %arg6[%c1, %c0_98, %c0_99] : memref<2x1x128xf32, #tpu.memory_space<vmem>>, vector<1x1x128xf32>
    %258 = vector.shape_cast %257 : vector<1x1x128xf32> to vector<1x128xf32>
    %c1_100 = arith.constant 1 : index
    %c0_101 = arith.constant 0 : index
    %c0_102 = arith.constant 0 : index
    %259 = vector.load %arg7[%c1_100, %c0_101, %c0_102] : memref<2x1x128xf32, #tpu.memory_space<vmem>>, vector<1x1x128xf32>
    %260 = vector.shape_cast %259 : vector<1x1x128xf32> to vector<1x128xf32>
    %261 = vector.broadcast %4 : vector<1x128xf32> to vector<8x128xf32>
    %262 = arith.mulf %256, %261 : vector<8x128xf32>
    %cst_103 = arith.constant dense<0.000000e+00> : vector<8xf32>
    %263 = vector.multi_reduction <add>, %262, %cst_103 [1] : vector<8x128xf32> to vector<8xf32>
    %264 = vector.shape_cast %263 : vector<8xf32> to vector<8x1xf32>
    %cst_104 = arith.constant 3.125000e-02 : f32
    %265 = vector.broadcast %cst_104 : f32 to vector<8x1xf32>
    %266 = arith.mulf %264, %265 : vector<8x1xf32>
    %267 = vector.broadcast %266 : vector<8x1xf32> to vector<8x128xf32>
    %268 = arith.subf %262, %267 : vector<8x128xf32>
    %269 = vector.broadcast %4 : vector<1x128xf32> to vector<8x128xf32>
    %270 = arith.mulf %268, %269 : vector<8x128xf32>
    %271 = arith.mulf %270, %270 : vector<8x128xf32>
    %cst_105 = arith.constant dense<0.000000e+00> : vector<8xf32>
    %272 = vector.multi_reduction <add>, %271, %cst_105 [1] : vector<8x128xf32> to vector<8xf32>
    %273 = vector.shape_cast %272 : vector<8xf32> to vector<8x1xf32>
    %cst_106 = arith.constant 3.125000e-02 : f32
    %274 = vector.broadcast %cst_106 : f32 to vector<8x1xf32>
    %275 = arith.mulf %273, %274 : vector<8x1xf32>
    %cst_107 = arith.constant 9.99999974E-6 : f32
    %276 = vector.broadcast %cst_107 : f32 to vector<8x1xf32>
    %277 = arith.addf %275, %276 : vector<8x1xf32>
    %278 = math.rsqrt %277 : vector<8x1xf32>
    %279 = vector.broadcast %278 : vector<8x1xf32> to vector<8x128xf32>
    %280 = arith.mulf %270, %279 : vector<8x128xf32>
    %281 = vector.broadcast %258 : vector<1x128xf32> to vector<8x128xf32>
    %282 = arith.mulf %280, %281 : vector<8x128xf32>
    %283 = vector.broadcast %260 : vector<1x128xf32> to vector<8x128xf32>
    %284 = arith.addf %282, %283 : vector<8x128xf32>
    %c1_108 = arith.constant 1 : index
    %c0_109 = arith.constant 0 : index
    %c0_110 = arith.constant 0 : index
    %285 = vector.load %arg8[%c1_108, %c0_109, %c0_110] : memref<2x128x384xbf16, #tpu.memory_space<vmem>>, vector<1x128x384xbf16>
    %286 = vector.shape_cast %285 : vector<1x128x384xbf16> to vector<128x384xbf16>
    %287 = arith.truncf %284 : vector<8x128xf32> to vector<8x128xbf16>
    %cst_111 = arith.constant dense<0.000000e+00> : vector<8x384xf32>
    %288 = tpu.matmul %287, %286, %cst_111 {dimension_numbers = #tpu.dot_dimension_numbers<[1], [0], [0], [1], [0, 0, 1, 1], [], []>} : vector<8x128xbf16>, vector<128x384xbf16>, vector<8x384xf32> -> vector<8x384xf32>
    %c1_112 = arith.constant 1 : index
    %c0_113 = arith.constant 0 : index
    %c0_114 = arith.constant 0 : index
    %289 = vector.load %arg9[%c1_112, %c0_113, %c0_114] : memref<2x1x384xf32, #tpu.memory_space<vmem>>, vector<1x1x384xf32>
    %290 = vector.shape_cast %289 : vector<1x1x384xf32> to vector<1x384xf32>
    %291 = vector.broadcast %290 : vector<1x384xf32> to vector<8x384xf32>
    %292 = arith.addf %288, %291 : vector<8x384xf32>
    %293 = vector.extract_strided_slice %292 {offsets = [0, 0], sizes = [8, 128], strides = [1, 1]} : vector<8x384xf32> to vector<8x128xf32>
    %294 = vector.shape_cast %293 : vector<8x128xf32> to vector<1x8x128xf32>
    %295 = vector.extract_strided_slice %292 {offsets = [0, 128], sizes = [8, 128], strides = [1, 1]} : vector<8x384xf32> to vector<8x128xf32>
    %296 = vector.shape_cast %295 : vector<8x128xf32> to vector<1x8x128xf32>
    %297 = vector.extract_strided_slice %292 {offsets = [0, 256], sizes = [8, 128], strides = [1, 1]} : vector<8x384xf32> to vector<8x128xf32>
    %298 = vector.shape_cast %297 : vector<8x128xf32> to vector<1x8x128xf32>
    %299 = vector.extract_strided_slice %294 {offsets = [0, 0, 0], sizes = [1, 8, 8], strides = [1, 1, 1]} : vector<1x8x128xf32> to vector<1x8x8xf32>
    %300 = vector.extract_strided_slice %296 {offsets = [0, 0, 0], sizes = [1, 8, 8], strides = [1, 1, 1]} : vector<1x8x128xf32> to vector<1x8x8xf32>
    "tpu.trace_start"() <{level = 10 : i32, message = "bid,bjd->bij"}> : () -> ()
    %cst_115 = arith.constant dense<0.000000e+00> : vector<1x8x8xf32>
    %301 = tpu.matmul %299, %300, %cst_115 {dimension_numbers = #tpu.dot_dimension_numbers<[2], [2], [1], [1], [0, 0, 0, 1, 1, 1], [0], [0]>} : vector<1x8x8xf32>, vector<1x8x8xf32>, vector<1x8x8xf32> -> vector<1x8x8xf32>
    "tpu.trace_stop"() : () -> ()
    %cst_116 = arith.constant 0.353553385 : f32
    %302 = vector.broadcast %cst_116 : f32 to vector<1x8x8xf32>
    %303 = arith.mulf %301, %302 : vector<1x8x8xf32>
    %304 = arith.addf %303, %31 : vector<1x8x8xf32>
    %cst_117 = arith.constant dense<0xFF800000> : vector<1x8xf32>
    %305 = vector.multi_reduction <maximumf>, %304, %cst_117 [2] : vector<1x8x8xf32> to vector<1x8xf32>
    %306 = vector.shape_cast %305 : vector<1x8xf32> to vector<1x8x1xf32>
    %307 = vector.broadcast %306 : vector<1x8x1xf32> to vector<1x8x8xf32>
    %308 = arith.subf %304, %307 : vector<1x8x8xf32>
    %309 = math.exp %308 : vector<1x8x8xf32>
    %cst_118 = arith.constant dense<0.000000e+00> : vector<1x8xf32>
    %310 = vector.multi_reduction <add>, %309, %cst_118 [2] : vector<1x8x8xf32> to vector<1x8xf32>
    %311 = vector.shape_cast %310 : vector<1x8xf32> to vector<1x8x1xf32>
    %312 = tpu.reciprocal %311 {approx = true} : vector<1x8x1xf32> -> vector<1x8x1xf32>
    %313 = vector.broadcast %312 : vector<1x8x1xf32> to vector<1x8x8xf32>
    %314 = arith.mulf %309, %313 : vector<1x8x8xf32>
    "tpu.trace_start"() <{level = 10 : i32, message = "bij,bjd->bid"}> : () -> ()
    %cst_119 = arith.constant dense<0.000000e+00> : vector<1x8x128xf32>
    %315 = tpu.matmul %314, %298, %cst_119 {dimension_numbers = #tpu.dot_dimension_numbers<[2], [1], [1], [2], [0, 0, 0, 1, 1, 2], [0], [0]>} : vector<1x8x8xf32>, vector<1x8x128xf32>, vector<1x8x128xf32> -> vector<1x8x128xf32>
    "tpu.trace_stop"() : () -> ()
    %316 = vector.broadcast %39 : vector<1x1x128xf32> to vector<1x8x128xf32>
    %317 = arith.mulf %315, %316 : vector<1x8x128xf32>
    %318 = vector.extract_strided_slice %294 {offsets = [0, 0, 8], sizes = [1, 8, 8], strides = [1, 1, 1]} : vector<1x8x128xf32> to vector<1x8x8xf32>
    %319 = vector.extract_strided_slice %296 {offsets = [0, 0, 8], sizes = [1, 8, 8], strides = [1, 1, 1]} : vector<1x8x128xf32> to vector<1x8x8xf32>
    "tpu.trace_start"() <{level = 10 : i32, message = "bid,bjd->bij"}> : () -> ()
    %cst_120 = arith.constant dense<0.000000e+00> : vector<1x8x8xf32>
    %320 = tpu.matmul %318, %319, %cst_120 {dimension_numbers = #tpu.dot_dimension_numbers<[2], [2], [1], [1], [0, 0, 0, 1, 1, 1], [0], [0]>} : vector<1x8x8xf32>, vector<1x8x8xf32>, vector<1x8x8xf32> -> vector<1x8x8xf32>
    "tpu.trace_stop"() : () -> ()
    %cst_121 = arith.constant 0.353553385 : f32
    %321 = vector.broadcast %cst_121 : f32 to vector<1x8x8xf32>
    %322 = arith.mulf %320, %321 : vector<1x8x8xf32>
    %323 = arith.addf %322, %31 : vector<1x8x8xf32>
    %cst_122 = arith.constant dense<0xFF800000> : vector<1x8xf32>
    %324 = vector.multi_reduction <maximumf>, %323, %cst_122 [2] : vector<1x8x8xf32> to vector<1x8xf32>
    %325 = vector.shape_cast %324 : vector<1x8xf32> to vector<1x8x1xf32>
    %326 = vector.broadcast %325 : vector<1x8x1xf32> to vector<1x8x8xf32>
    %327 = arith.subf %323, %326 : vector<1x8x8xf32>
    %328 = math.exp %327 : vector<1x8x8xf32>
    %cst_123 = arith.constant dense<0.000000e+00> : vector<1x8xf32>
    %329 = vector.multi_reduction <add>, %328, %cst_123 [2] : vector<1x8x8xf32> to vector<1x8xf32>
    %330 = vector.shape_cast %329 : vector<1x8xf32> to vector<1x8x1xf32>
    %331 = tpu.reciprocal %330 {approx = true} : vector<1x8x1xf32> -> vector<1x8x1xf32>
    %332 = vector.broadcast %331 : vector<1x8x1xf32> to vector<1x8x8xf32>
    %333 = arith.mulf %328, %332 : vector<1x8x8xf32>
    "tpu.trace_start"() <{level = 10 : i32, message = "bij,bjd->bid"}> : () -> ()
    %cst_124 = arith.constant dense<0.000000e+00> : vector<1x8x128xf32>
    %334 = tpu.matmul %333, %298, %cst_124 {dimension_numbers = #tpu.dot_dimension_numbers<[2], [1], [1], [2], [0, 0, 0, 1, 1, 2], [0], [0]>} : vector<1x8x8xf32>, vector<1x8x128xf32>, vector<1x8x128xf32> -> vector<1x8x128xf32>
    "tpu.trace_stop"() : () -> ()
    %335 = vector.broadcast %46 : vector<1x1x128xf32> to vector<1x8x128xf32>
    %336 = arith.mulf %334, %335 : vector<1x8x128xf32>
    %337 = arith.addf %317, %336 : vector<1x8x128xf32>
    %338 = vector.extract_strided_slice %294 {offsets = [0, 0, 16], sizes = [1, 8, 8], strides = [1, 1, 1]} : vector<1x8x128xf32> to vector<1x8x8xf32>
    %339 = vector.extract_strided_slice %296 {offsets = [0, 0, 16], sizes = [1, 8, 8], strides = [1, 1, 1]} : vector<1x8x128xf32> to vector<1x8x8xf32>
    "tpu.trace_start"() <{level = 10 : i32, message = "bid,bjd->bij"}> : () -> ()
    %cst_125 = arith.constant dense<0.000000e+00> : vector<1x8x8xf32>
    %340 = tpu.matmul %338, %339, %cst_125 {dimension_numbers = #tpu.dot_dimension_numbers<[2], [2], [1], [1], [0, 0, 0, 1, 1, 1], [0], [0]>} : vector<1x8x8xf32>, vector<1x8x8xf32>, vector<1x8x8xf32> -> vector<1x8x8xf32>
    "tpu.trace_stop"() : () -> ()
    %cst_126 = arith.constant 0.353553385 : f32
    %341 = vector.broadcast %cst_126 : f32 to vector<1x8x8xf32>
    %342 = arith.mulf %340, %341 : vector<1x8x8xf32>
    %343 = arith.addf %342, %31 : vector<1x8x8xf32>
    %cst_127 = arith.constant dense<0xFF800000> : vector<1x8xf32>
    %344 = vector.multi_reduction <maximumf>, %343, %cst_127 [2] : vector<1x8x8xf32> to vector<1x8xf32>
    %345 = vector.shape_cast %344 : vector<1x8xf32> to vector<1x8x1xf32>
    %346 = vector.broadcast %345 : vector<1x8x1xf32> to vector<1x8x8xf32>
    %347 = arith.subf %343, %346 : vector<1x8x8xf32>
    %348 = math.exp %347 : vector<1x8x8xf32>
    %cst_128 = arith.constant dense<0.000000e+00> : vector<1x8xf32>
    %349 = vector.multi_reduction <add>, %348, %cst_128 [2] : vector<1x8x8xf32> to vector<1x8xf32>
    %350 = vector.shape_cast %349 : vector<1x8xf32> to vector<1x8x1xf32>
    %351 = tpu.reciprocal %350 {approx = true} : vector<1x8x1xf32> -> vector<1x8x1xf32>
    %352 = vector.broadcast %351 : vector<1x8x1xf32> to vector<1x8x8xf32>
    %353 = arith.mulf %348, %352 : vector<1x8x8xf32>
    "tpu.trace_start"() <{level = 10 : i32, message = "bij,bjd->bid"}> : () -> ()
    %cst_129 = arith.constant dense<0.000000e+00> : vector<1x8x128xf32>
    %354 = tpu.matmul %353, %298, %cst_129 {dimension_numbers = #tpu.dot_dimension_numbers<[2], [1], [1], [2], [0, 0, 0, 1, 1, 2], [0], [0]>} : vector<1x8x8xf32>, vector<1x8x128xf32>, vector<1x8x128xf32> -> vector<1x8x128xf32>
    "tpu.trace_stop"() : () -> ()
    %355 = vector.broadcast %53 : vector<1x1x128xf32> to vector<1x8x128xf32>
    %356 = arith.mulf %354, %355 : vector<1x8x128xf32>
    %357 = arith.addf %337, %356 : vector<1x8x128xf32>
    %358 = vector.extract_strided_slice %294 {offsets = [0, 0, 24], sizes = [1, 8, 8], strides = [1, 1, 1]} : vector<1x8x128xf32> to vector<1x8x8xf32>
    %359 = vector.extract_strided_slice %296 {offsets = [0, 0, 24], sizes = [1, 8, 8], strides = [1, 1, 1]} : vector<1x8x128xf32> to vector<1x8x8xf32>
    "tpu.trace_start"() <{level = 10 : i32, message = "bid,bjd->bij"}> : () -> ()
    %cst_130 = arith.constant dense<0.000000e+00> : vector<1x8x8xf32>
    %360 = tpu.matmul %358, %359, %cst_130 {dimension_numbers = #tpu.dot_dimension_numbers<[2], [2], [1], [1], [0, 0, 0, 1, 1, 1], [0], [0]>} : vector<1x8x8xf32>, vector<1x8x8xf32>, vector<1x8x8xf32> -> vector<1x8x8xf32>
    "tpu.trace_stop"() : () -> ()
    %cst_131 = arith.constant 0.353553385 : f32
    %361 = vector.broadcast %cst_131 : f32 to vector<1x8x8xf32>
    %362 = arith.mulf %360, %361 : vector<1x8x8xf32>
    %363 = arith.addf %362, %31 : vector<1x8x8xf32>
    %cst_132 = arith.constant dense<0xFF800000> : vector<1x8xf32>
    %364 = vector.multi_reduction <maximumf>, %363, %cst_132 [2] : vector<1x8x8xf32> to vector<1x8xf32>
    %365 = vector.shape_cast %364 : vector<1x8xf32> to vector<1x8x1xf32>
    %366 = vector.broadcast %365 : vector<1x8x1xf32> to vector<1x8x8xf32>
    %367 = arith.subf %363, %366 : vector<1x8x8xf32>
    %368 = math.exp %367 : vector<1x8x8xf32>
    %cst_133 = arith.constant dense<0.000000e+00> : vector<1x8xf32>
    %369 = vector.multi_reduction <add>, %368, %cst_133 [2] : vector<1x8x8xf32> to vector<1x8xf32>
    %370 = vector.shape_cast %369 : vector<1x8xf32> to vector<1x8x1xf32>
    %371 = tpu.reciprocal %370 {approx = true} : vector<1x8x1xf32> -> vector<1x8x1xf32>
    %372 = vector.broadcast %371 : vector<1x8x1xf32> to vector<1x8x8xf32>
    %373 = arith.mulf %368, %372 : vector<1x8x8xf32>
    "tpu.trace_start"() <{level = 10 : i32, message = "bij,bjd->bid"}> : () -> ()
    %cst_134 = arith.constant dense<0.000000e+00> : vector<1x8x128xf32>
    %374 = tpu.matmul %373, %298, %cst_134 {dimension_numbers = #tpu.dot_dimension_numbers<[2], [1], [1], [2], [0, 0, 0, 1, 1, 2], [0], [0]>} : vector<1x8x8xf32>, vector<1x8x128xf32>, vector<1x8x128xf32> -> vector<1x8x128xf32>
    "tpu.trace_stop"() : () -> ()
    %375 = vector.broadcast %60 : vector<1x1x128xf32> to vector<1x8x128xf32>
    %376 = arith.mulf %374, %375 : vector<1x8x128xf32>
    %377 = arith.addf %357, %376 : vector<1x8x128xf32>
    %378 = vector.shape_cast %377 : vector<1x8x128xf32> to vector<8x128xf32>
    %c1_135 = arith.constant 1 : index
    %c0_136 = arith.constant 0 : index
    %c0_137 = arith.constant 0 : index
    %379 = vector.load %arg10[%c1_135, %c0_136, %c0_137] : memref<2x128x128xbf16, #tpu.memory_space<vmem>>, vector<1x128x128xbf16>
    %380 = vector.shape_cast %379 : vector<1x128x128xbf16> to vector<128x128xbf16>
    %381 = arith.truncf %378 : vector<8x128xf32> to vector<8x128xbf16>
    %cst_138 = arith.constant dense<0.000000e+00> : vector<8x128xf32>
    %382 = tpu.matmul %381, %380, %cst_138 {dimension_numbers = #tpu.dot_dimension_numbers<[1], [0], [0], [1], [0, 0, 1, 1], [], []>} : vector<8x128xbf16>, vector<128x128xbf16>, vector<8x128xf32> -> vector<8x128xf32>
    %c1_139 = arith.constant 1 : index
    %c0_140 = arith.constant 0 : index
    %c0_141 = arith.constant 0 : index
    %383 = vector.load %arg11[%c1_139, %c0_140, %c0_141] : memref<2x1x128xf32, #tpu.memory_space<vmem>>, vector<1x1x128xf32>
    %384 = vector.shape_cast %383 : vector<1x1x128xf32> to vector<1x128xf32>
    %385 = vector.broadcast %384 : vector<1x128xf32> to vector<8x128xf32>
    %386 = arith.addf %382, %385 : vector<8x128xf32>
    %387 = arith.addf %256, %386 : vector<8x128xf32>
    %388 = vector.extract_strided_slice %18 {offsets = [0, 128], sizes = [1, 128], strides = [1, 1]} : vector<1x256xf32> to vector<1x128xf32>
    %389 = vector.shape_cast %388 : vector<1x128xf32> to vector<1x1x128xf32>
    %390 = vector.shape_cast %389 : vector<1x1x128xf32> to vector<1x1x128xf32>
    %391 = vector.broadcast %390 : vector<1x1x128xf32> to vector<1x8x128xf32>
    %392 = vector.shape_cast %391 : vector<1x8x128xf32> to vector<8x128xf32>
    %393 = arith.addf %387, %392 : vector<8x128xf32>
    %c1_142 = arith.constant 1 : index
    %c0_143 = arith.constant 0 : index
    %c0_144 = arith.constant 0 : index
    %394 = vector.load %arg14[%c1_142, %c0_143, %c0_144] : memref<2x1x128xf32, #tpu.memory_space<vmem>>, vector<1x1x128xf32>
    %395 = vector.shape_cast %394 : vector<1x1x128xf32> to vector<1x128xf32>
    %c1_145 = arith.constant 1 : index
    %c0_146 = arith.constant 0 : index
    %c0_147 = arith.constant 0 : index
    %396 = vector.load %arg15[%c1_145, %c0_146, %c0_147] : memref<2x1x128xf32, #tpu.memory_space<vmem>>, vector<1x1x128xf32>
    %397 = vector.shape_cast %396 : vector<1x1x128xf32> to vector<1x128xf32>
    %398 = vector.broadcast %4 : vector<1x128xf32> to vector<8x128xf32>
    %399 = arith.mulf %393, %398 : vector<8x128xf32>
    %cst_148 = arith.constant dense<0.000000e+00> : vector<8xf32>
    %400 = vector.multi_reduction <add>, %399, %cst_148 [1] : vector<8x128xf32> to vector<8xf32>
    %401 = vector.shape_cast %400 : vector<8xf32> to vector<8x1xf32>
    %cst_149 = arith.constant 3.125000e-02 : f32
    %402 = vector.broadcast %cst_149 : f32 to vector<8x1xf32>
    %403 = arith.mulf %401, %402 : vector<8x1xf32>
    %404 = vector.broadcast %403 : vector<8x1xf32> to vector<8x128xf32>
    %405 = arith.subf %399, %404 : vector<8x128xf32>
    %406 = vector.broadcast %4 : vector<1x128xf32> to vector<8x128xf32>
    %407 = arith.mulf %405, %406 : vector<8x128xf32>
    %408 = arith.mulf %407, %407 : vector<8x128xf32>
    %cst_150 = arith.constant dense<0.000000e+00> : vector<8xf32>
    %409 = vector.multi_reduction <add>, %408, %cst_150 [1] : vector<8x128xf32> to vector<8xf32>
    %410 = vector.shape_cast %409 : vector<8xf32> to vector<8x1xf32>
    %cst_151 = arith.constant 3.125000e-02 : f32
    %411 = vector.broadcast %cst_151 : f32 to vector<8x1xf32>
    %412 = arith.mulf %410, %411 : vector<8x1xf32>
    %cst_152 = arith.constant 9.99999974E-6 : f32
    %413 = vector.broadcast %cst_152 : f32 to vector<8x1xf32>
    %414 = arith.addf %412, %413 : vector<8x1xf32>
    %415 = math.rsqrt %414 : vector<8x1xf32>
    %416 = vector.broadcast %415 : vector<8x1xf32> to vector<8x128xf32>
    %417 = arith.mulf %407, %416 : vector<8x128xf32>
    %418 = vector.broadcast %395 : vector<1x128xf32> to vector<8x128xf32>
    %419 = arith.mulf %417, %418 : vector<8x128xf32>
    %420 = vector.broadcast %397 : vector<1x128xf32> to vector<8x128xf32>
    %421 = arith.addf %419, %420 : vector<8x128xf32>
    %c1_153 = arith.constant 1 : index
    %c0_154 = arith.constant 0 : index
    %c0_155 = arith.constant 0 : index
    %422 = vector.load %arg16[%c1_153, %c0_154, %c0_155] : memref<2x128x128xbf16, #tpu.memory_space<vmem>>, vector<1x128x128xbf16>
    %423 = vector.shape_cast %422 : vector<1x128x128xbf16> to vector<128x128xbf16>
    %424 = arith.truncf %421 : vector<8x128xf32> to vector<8x128xbf16>
    %cst_156 = arith.constant dense<0.000000e+00> : vector<8x128xf32>
    %425 = tpu.matmul %424, %423, %cst_156 {dimension_numbers = #tpu.dot_dimension_numbers<[1], [0], [0], [1], [0, 0, 1, 1], [], []>} : vector<8x128xbf16>, vector<128x128xbf16>, vector<8x128xf32> -> vector<8x128xf32>
    %c1_157 = arith.constant 1 : index
    %c0_158 = arith.constant 0 : index
    %c0_159 = arith.constant 0 : index
    %426 = vector.load %arg17[%c1_157, %c0_158, %c0_159] : memref<2x1x128xf32, #tpu.memory_space<vmem>>, vector<1x1x128xf32>
    %427 = vector.shape_cast %426 : vector<1x1x128xf32> to vector<1x128xf32>
    %428 = vector.broadcast %427 : vector<1x128xf32> to vector<8x128xf32>
    %429 = arith.addf %425, %428 : vector<8x128xf32>
    %cst_160 = arith.constant 5.000000e-01 : f32
    %430 = vector.broadcast %cst_160 : f32 to vector<8x128xf32>
    %431 = arith.mulf %430, %429 : vector<8x128xf32>
    %cst_161 = arith.constant 4.471500e-02 : f32
    %432 = vector.broadcast %cst_161 : f32 to vector<8x128xf32>
    %433 = arith.mulf %432, %429 : vector<8x128xf32>
    %434 = arith.mulf %433, %429 : vector<8x128xf32>
    %435 = arith.mulf %434, %429 : vector<8x128xf32>
    %436 = arith.addf %429, %435 : vector<8x128xf32>
    %cst_162 = arith.constant 0.797884583 : f32
    %437 = vector.broadcast %cst_162 : f32 to vector<8x128xf32>
    %438 = arith.mulf %437, %436 : vector<8x128xf32>
    %439 = math.tanh %438 : vector<8x128xf32>
    %cst_163 = arith.constant 1.000000e+00 : f32
    %440 = vector.broadcast %cst_163 : f32 to vector<8x128xf32>
    %441 = arith.addf %440, %439 : vector<8x128xf32>
    %442 = arith.mulf %431, %441 : vector<8x128xf32>
    %c1_164 = arith.constant 1 : index
    %c0_165 = arith.constant 0 : index
    %c0_166 = arith.constant 0 : index
    %443 = vector.load %arg18[%c1_164, %c0_165, %c0_166] : memref<2x128x128xbf16, #tpu.memory_space<vmem>>, vector<1x128x128xbf16>
    %444 = vector.shape_cast %443 : vector<1x128x128xbf16> to vector<128x128xbf16>
    %445 = arith.truncf %442 : vector<8x128xf32> to vector<8x128xbf16>
    %cst_167 = arith.constant dense<0.000000e+00> : vector<8x128xf32>
    %446 = tpu.matmul %445, %444, %cst_167 {dimension_numbers = #tpu.dot_dimension_numbers<[1], [0], [0], [1], [0, 0, 1, 1], [], []>} : vector<8x128xbf16>, vector<128x128xbf16>, vector<8x128xf32> -> vector<8x128xf32>
    %447 = arith.addf %393, %446 : vector<8x128xf32>
    %c1_168 = arith.constant 1 : index
    %c0_169 = arith.constant 0 : index
    %c0_170 = arith.constant 0 : index
    %448 = vector.load %arg19[%c1_168, %c0_169, %c0_170] : memref<2x1x128xf32, #tpu.memory_space<vmem>>, vector<1x1x128xf32>
    %449 = vector.shape_cast %448 : vector<1x1x128xf32> to vector<1x128xf32>
    %450 = vector.broadcast %449 : vector<1x128xf32> to vector<8x128xf32>
    %451 = arith.addf %447, %450 : vector<8x128xf32>
    %c0_171 = arith.constant 0 : index
    %c0_172 = arith.constant 0 : index
    %452 = vector.load %arg20[%c0_171, %c0_172] : memref<1x128xf32, #tpu.memory_space<vmem>>, vector<1x128xf32>
    %c0_173 = arith.constant 0 : index
    %c0_174 = arith.constant 0 : index
    %453 = vector.load %arg21[%c0_173, %c0_174] : memref<1x128xf32, #tpu.memory_space<vmem>>, vector<1x128xf32>
    %454 = vector.broadcast %4 : vector<1x128xf32> to vector<8x128xf32>
    %455 = arith.mulf %451, %454 : vector<8x128xf32>
    %cst_175 = arith.constant dense<0.000000e+00> : vector<8xf32>
    %456 = vector.multi_reduction <add>, %455, %cst_175 [1] : vector<8x128xf32> to vector<8xf32>
    %457 = vector.shape_cast %456 : vector<8xf32> to vector<8x1xf32>
    %cst_176 = arith.constant 3.125000e-02 : f32
    %458 = vector.broadcast %cst_176 : f32 to vector<8x1xf32>
    %459 = arith.mulf %457, %458 : vector<8x1xf32>
    %460 = vector.broadcast %459 : vector<8x1xf32> to vector<8x128xf32>
    %461 = arith.subf %455, %460 : vector<8x128xf32>
    %462 = vector.broadcast %4 : vector<1x128xf32> to vector<8x128xf32>
    %463 = arith.mulf %461, %462 : vector<8x128xf32>
    %464 = arith.mulf %463, %463 : vector<8x128xf32>
    %cst_177 = arith.constant dense<0.000000e+00> : vector<8xf32>
    %465 = vector.multi_reduction <add>, %464, %cst_177 [1] : vector<8x128xf32> to vector<8xf32>
    %466 = vector.shape_cast %465 : vector<8xf32> to vector<8x1xf32>
    %cst_178 = arith.constant 3.125000e-02 : f32
    %467 = vector.broadcast %cst_178 : f32 to vector<8x1xf32>
    %468 = arith.mulf %466, %467 : vector<8x1xf32>
    %cst_179 = arith.constant 9.99999974E-6 : f32
    %469 = vector.broadcast %cst_179 : f32 to vector<8x1xf32>
    %470 = arith.addf %468, %469 : vector<8x1xf32>
    %471 = math.rsqrt %470 : vector<8x1xf32>
    %472 = vector.broadcast %471 : vector<8x1xf32> to vector<8x128xf32>
    %473 = arith.mulf %463, %472 : vector<8x128xf32>
    %474 = vector.broadcast %452 : vector<1x128xf32> to vector<8x128xf32>
    %475 = arith.mulf %473, %474 : vector<8x128xf32>
    %476 = vector.broadcast %453 : vector<1x128xf32> to vector<8x128xf32>
    %477 = arith.addf %475, %476 : vector<8x128xf32>
    %c0_180 = arith.constant 0 : index
    %c0_181 = arith.constant 0 : index
    %478 = vector.load %arg22[%c0_180, %c0_181] : memref<128x128xbf16, #tpu.memory_space<vmem>>, vector<128x128xbf16>
    %479 = arith.truncf %477 : vector<8x128xf32> to vector<8x128xbf16>
    %cst_182 = arith.constant dense<0.000000e+00> : vector<8x128xf32>
    %480 = tpu.matmul %479, %478, %cst_182 {dimension_numbers = #tpu.dot_dimension_numbers<[1], [0], [0], [1], [0, 0, 1, 1], [], []>} : vector<8x128xbf16>, vector<128x128xbf16>, vector<8x128xf32> -> vector<8x128xf32>
    %c0_183 = arith.constant 0 : index
    %c0_184 = arith.constant 0 : index
    %481 = vector.load %arg23[%c0_183, %c0_184] : memref<8x128xf32, #tpu.memory_space<vmem>>, vector<8x128xf32>
    tpu.vector_store %arg23[%c0_183, %c0_184], %480 {strides = array<i32>} : memref<8x128xf32, #tpu.memory_space<vmem>>, vector<8x128xf32>,
    return
  }
  func.func @transform_0(%arg0: i32) -> (i32, i32, i32) {
    %c0_i32 = arith.constant 0 : i32
    %c0_i32_0 = arith.constant 0 : i32
    %c0_i32_1 = arith.constant 0 : i32
    return %arg0, %c0_i32, %c0_i32_0 : i32, i32, i32
  }
  func.func @transform_1(%arg0: i32) -> (i32, i32) {
    %c0_i32 = arith.constant 0 : i32
    %c0_i32_0 = arith.constant 0 : i32
    return %arg0, %c0_i32 : i32, i32
  }
  func.func @transform_2(%arg0: i32) -> (i32, i32, i32) {
    %c0_i32 = arith.constant 0 : i32
    %c0_i32_0 = arith.constant 0 : i32
    %c0_i32_1 = arith.constant 0 : i32
    return %arg0, %c0_i32, %c0_i32_0 : i32, i32, i32
  }
  func.func @transform_3(%arg0: i32) -> (i32, i32) {
    %c0_i32 = arith.constant 0 : i32
    %c0_i32_0 = arith.constant 0 : i32
    %c0_i32_1 = arith.constant 0 : i32
    return %c0_i32, %c0_i32_0 : i32, i32
  }
  func.func @transform_4(%arg0: i32) -> (i32, i32) {
    %c0_i32 = arith.constant 0 : i32
    %c0_i32_0 = arith.constant 0 : i32
    %c0_i32_1 = arith.constant 0 : i32
    return %c0_i32, %c0_i32_0 : i32, i32
  }
  func.func @transform_5(%arg0: i32) -> (i32, i32, i32) {
    %c0_i32 = arith.constant 0 : i32
    %c0_i32_0 = arith.constant 0 : i32
    %c0_i32_1 = arith.constant 0 : i32
    %c0_i32_2 = arith.constant 0 : i32
    return %c0_i32, %c0_i32_0, %c0_i32_1 : i32, i32, i32
  }
  func.func @transform_6(%arg0: i32) -> (i32, i32, i32) {
    %c0_i32 = arith.constant 0 : i32
    %c0_i32_0 = arith.constant 0 : i32
    %c0_i32_1 = arith.constant 0 : i32
    %c0_i32_2 = arith.constant 0 : i32
    return %c0_i32, %c0_i32_0, %c0_i32_1 : i32, i32, i32
  }
  func.func @transform_7(%arg0: i32) -> (i32, i32, i32) {
    %c0_i32 = arith.constant 0 : i32
    %c0_i32_0 = arith.constant 0 : i32
    %c0_i32_1 = arith.constant 0 : i32
    %c0_i32_2 = arith.constant 0 : i32
    return %c0_i32, %c0_i32_0, %c0_i32_1 : i32, i32, i32
  }
  func.func @transform_8(%arg0: i32) -> (i32, i32, i32) {
    %c0_i32 = arith.constant 0 : i32
    %c0_i32_0 = arith.constant 0 : i32
    %c0_i32_1 = arith.constant 0 : i32
    %c0_i32_2 = arith.constant 0 : i32
    return %c0_i32, %c0_i32_0, %c0_i32_1 : i32, i32, i32
  }
  func.func @transform_9(%arg0: i32) -> (i32, i32, i32) {
    %c0_i32 = arith.constant 0 : i32
    %c0_i32_0 = arith.constant 0 : i32
    %c0_i32_1 = arith.constant 0 : i32
    %c0_i32_2 = arith.constant 0 : i32
    return %c0_i32, %c0_i32_0, %c0_i32_1 : i32, i32, i32
  }
  func.func @transform_10(%arg0: i32) -> (i32, i32, i32) {
    %c0_i32 = arith.constant 0 : i32
    %c0_i32_0 = arith.constant 0 : i32
    %c0_i32_1 = arith.constant 0 : i32
    %c0_i32_2 = arith.constant 0 : i32
    return %c0_i32, %c0_i32_0, %c0_i32_1 : i32, i32, i32
  }
  func.func @transform_11(%arg0: i32) -> (i32, i32) {
    %c0_i32 = arith.constant 0 : i32
    %c0_i32_0 = arith.constant 0 : i32
    %c0_i32_1 = arith.constant 0 : i32
    return %c0_i32, %c0_i32_0 : i32, i32
  }
  func.func @transform_12(%arg0: i32) -> (i32, i32) {
    %c0_i32 = arith.constant 0 : i32
    %c0_i32_0 = arith.constant 0 : i32
    %c0_i32_1 = arith.constant 0 : i32
    return %c0_i32, %c0_i32_0 : i32, i32
  }
  func.func @transform_13(%arg0: i32) -> (i32, i32, i32) {
    %c0_i32 = arith.constant 0 : i32
    %c0_i32_0 = arith.constant 0 : i32
    %c0_i32_1 = arith.constant 0 : i32
    %c0_i32_2 = arith.constant 0 : i32
    return %c0_i32, %c0_i32_0, %c0_i32_1 : i32, i32, i32
  }
  func.func @transform_14(%arg0: i32) -> (i32, i32, i32) {
    %c0_i32 = arith.constant 0 : i32
    %c0_i32_0 = arith.constant 0 : i32
    %c0_i32_1 = arith.constant 0 : i32
    %c0_i32_2 = arith.constant 0 : i32
    return %c0_i32, %c0_i32_0, %c0_i32_1 : i32, i32, i32
  }
  func.func @transform_15(%arg0: i32) -> (i32, i32, i32) {
    %c0_i32 = arith.constant 0 : i32
    %c0_i32_0 = arith.constant 0 : i32
    %c0_i32_1 = arith.constant 0 : i32
    %c0_i32_2 = arith.constant 0 : i32
    return %c0_i32, %c0_i32_0, %c0_i32_1 : i32, i32, i32
  }
  func.func @transform_16(%arg0: i32) -> (i32, i32, i32) {
    %c0_i32 = arith.constant 0 : i32
    %c0_i32_0 = arith.constant 0 : i32
    %c0_i32_1 = arith.constant 0 : i32
    %c0_i32_2 = arith.constant 0 : i32
    return %c0_i32, %c0_i32_0, %c0_i32_1 : i32, i32, i32
  }
  func.func @transform_17(%arg0: i32) -> (i32, i32, i32) {
    %c0_i32 = arith.constant 0 : i32
    %c0_i32_0 = arith.constant 0 : i32
    %c0_i32_1 = arith.constant 0 : i32
    %c0_i32_2 = arith.constant 0 : i32
    return %c0_i32, %c0_i32_0, %c0_i32_1 : i32, i32, i32
  }
  func.func @transform_18(%arg0: i32) -> (i32, i32, i32) {
    %c0_i32 = arith.constant 0 : i32
    %c0_i32_0 = arith.constant 0 : i32
    %c0_i32_1 = arith.constant 0 : i32
    %c0_i32_2 = arith.constant 0 : i32
    return %c0_i32, %c0_i32_0, %c0_i32_1 : i32, i32, i32
  }
  func.func @transform_19(%arg0: i32) -> (i32, i32) {
    %c0_i32 = arith.constant 0 : i32
    %c0_i32_0 = arith.constant 0 : i32
    %c0_i32_1 = arith.constant 0 : i32
    return %c0_i32, %c0_i32_0 : i32, i32
  }
  func.func @transform_20(%arg0: i32) -> (i32, i32) {
    %c0_i32 = arith.constant 0 : i32
    %c0_i32_0 = arith.constant 0 : i32
    %c0_i32_1 = arith.constant 0 : i32
    return %c0_i32, %c0_i32_0 : i32, i32
  }
  func.func @transform_21(%arg0: i32) -> (i32, i32) {
    %c0_i32 = arith.constant 0 : i32
    %c0_i32_0 = arith.constant 0 : i32
    %c0_i32_1 = arith.constant 0 : i32
    return %c0_i32, %c0_i32_0 : i32, i32
  }
  func.func @transform_22(%arg0: i32) -> (i32, i32) {
    %c0_i32 = arith.constant 0 : i32
    %c0_i32_0 = arith.constant 0 : i32
    return %arg0, %c0_i32 : i32, i32
  }
}

</mosaic_0001>

<llo_original>
// kernel: ergpt2_forward.1
$region0: #{ergpt2_forward.1}
  #allocation0 [shape = 'u32[]', space=smem, size = 0x4, offset = 0x4, fixed_abs, tag = 'smem constant byte address 0x4 - core index']
  #allocation1 [shape = 'u32[144,128]{1,0:T(1,128)}', space=vmem, size = 0x12000, scoped, tag = 'internal scratch']
  %s0 = inlined_call_operand.vmem [shape: f32[2,4,16], index: 0, kind: input, shape index: {}]
  %s1 = inlined_call_operand.vmem [shape: f32[16,128], index: 1, kind: input, shape index: {}]
  %s2 = inlined_call_operand.vmem [shape: f32[2,1,8], index: 2, kind: input, shape index: {}]
  %s3 = inlined_call_operand.vmem [shape: bf16[4,128], index: 3, kind: input, shape index: {}]
  %s4 = inlined_call_operand.vmem [shape: f32[1,128], index: 4, kind: input, shape index: {}]
  %s5 = inlined_call_operand.vmem [shape: f32[2,1,128], index: 5, kind: input, shape index: {}]
  %s6 = inlined_call_operand.vmem [shape: f32[2,1,128], index: 6, kind: input, shape index: {}]
  %s7 = inlined_call_operand.hbm [shape: bf16[2,128,384], index: 7, kind: input, shape index: {}]
  %s8 = inlined_call_operand.vmem [shape: f32[2,1,384], index: 8, kind: input, shape index: {}]
  %s9 = inlined_call_operand.vmem [shape: bf16[2,128,128], index: 9, kind: input, shape index: {}]
  %s10 = inlined_call_operand.vmem [shape: f32[2,1,128], index: 10, kind: input, shape index: {}]
  %s11 = inlined_call_operand.hbm [shape: bf16[128,256], index: 11, kind: input, shape index: {}]
  %s12 = inlined_call_operand.vmem [shape: f32[1,256], index: 12, kind: input, shape index: {}]
  %s13 = inlined_call_operand.vmem [shape: f32[2,1,128], index: 13, kind: input, shape index: {}]
  %s14 = inlined_call_operand.vmem [shape: f32[2,1,128], index: 14, kind: input, shape index: {}]
  %s15 = inlined_call_operand.hbm [shape: bf16[2,128,128], index: 15, kind: input, shape index: {}]
  %s16 = inlined_call_operand.vmem [shape: f32[2,1,128], index: 16, kind: input, shape index: {}]
  %s17 = inlined_call_operand.hbm [shape: bf16[2,128,128], index: 17, kind: input, shape index: {}]
  %s18 = inlined_call_operand.vmem [shape: f32[2,1,128], index: 18, kind: input, shape index: {}]
  %s19 = inlined_call_operand.vmem [shape: f32[1,128], index: 19, kind: input, shape index: {}]
  %s20 = inlined_call_operand.vmem [shape: f32[1,128], index: 20, kind: input, shape index: {}]
  %s21 = inlined_call_operand.vmem [shape: bf16[128,128], index: 21, kind: input, shape index: {}]
  %s22 = inlined_call_operand.vmem [shape: f32[16,128], index: 22, kind: output, shape index: {}]
  %s23 = sld [smem:[#allocation0]]
  $region137: #{ergpt2_forward.1} parent=0
    _
  %s25 = ssub.s32 1, %s23
  %s26 = scalar_select 0, %s25, %s23
  $region1: #{ergpt2_forward.1} parent=0
    #allocation2 [shape = 'u8[196608]{0}', space=vmem, size = 0x30000, scoped, tag = 'input window, operand 7, single buffered']
    #allocation3 [shape = 's32[2]{0}', space=sflag, size = 0x8, scoped, tag = 'scoped memory for ergpt2_forward.1']
    #allocation4 [shape = 'u8[65536]{0}', space=vmem, size = 0x10000, scoped, tag = 'input window, operand 11, single buffered']
    #allocation5 [shape = 's32[1]{0}', space=sflag, size = 0x4, scoped, tag = 'scoped memory for ergpt2_forward.1']
    #allocation6 [shape = 'u8[65536]{0}', space=vmem, size = 0x10000, scoped, tag = 'input window, operand 15, single buffered']
    #allocation7 [shape = 'u8[65536]{0}', space=vmem, size = 0x10000, scoped, tag = 'input window, operand 17, single buffered']
    #allocation8 [shape = 's32[1]{0}', space=sflag, size = 0x4, scoped, tag = 'scoped memory for ergpt2_forward.1']
    %27 = vsyncpa [#allocation3], 0
    %28 = vsyncpa [#allocation5], 0
    %29 = vsyncpa [#allocation8], 0
    loop: start=0, step=1, limit=4
    $region2: #{ergpt2_forward.1} parent=1 // loop_pre_header
      _
    $region3: #{ergpt2_forward.1} parent=1 // loop_header
      %s31 = sphi 0, %s35
      %p32 = scmp.ge.s32.totalorder %s31, 4
      %s41 = sphi 0, %s43
      %s44 = sphi 0, %s41
      %s45 = sphi 0, %s44
      %s61 = sphi 0, %s45
      %s67 = sphi 0, %s69
      %s70 = sphi 0, %s67
      %s71 = sphi 0, %s70
      %s87 = sphi 0, %s71
      %s93 = sphi 0, %s95
      %s96 = sphi 0, %s93
      %s97 = sphi 0, %s96
      %s113 = sphi 0, %s97
      %s117 = sphi 0, %s117
      %s119 = sphi 0, %s117
      %s120 = sphi 0, %s119
      %s134 = sphi 0, %s120
      %s138 = sphi 0, %s138
      %s140 = sphi 0, %s138
      %s141 = sphi 0, %s140
      %s155 = sphi 0, %s141
      %s159 = sphi 0, %s159
      %s161 = sphi 0, %s159
      %s162 = sphi 0, %s161
      %s176 = sphi 0, %s162
      %s180 = sphi 0, %s180
      %s182 = sphi 0, %s180
      %s183 = sphi 0, %s182
      %s197 = sphi 0, %s183
      %s201 = sphi 0, %s201
      %s203 = sphi 0, %s201
      %s204 = sphi 0, %s203
      %s218 = sphi 0, %s204
      %s222 = sphi 0, %s222
      %s224 = sphi 0, %s222
      %s225 = sphi 0, %s224
      %s239 = sphi 0, %s225
      %s243 = sphi 0, %s243
      %s245 = sphi 0, %s243
      %s246 = sphi 0, %s245
      %s260 = sphi 0, %s246
      %s264 = sphi 0, %s264
      %s266 = sphi 0, %s264
      %s267 = sphi 0, %s266
      %s281 = sphi 0, %s267
      %s285 = sphi 0, %s285
      %s287 = sphi 0, %s285
      %s288 = sphi 0, %s287
      %s302 = sphi 0, %s288
      %s306 = sphi 0, %s306
      %s308 = sphi 0, %s306
      %s309 = sphi 0, %s308
      %s323 = sphi 0, %s309
      %s327 = sphi 0, %s327
      %s329 = sphi 0, %s327
      %s330 = sphi 0, %s329
      %s344 = sphi 0, %s330
      %s348 = sphi 0, %s348
      %s350 = sphi 0, %s348
      %s351 = sphi 0, %s350
      %s365 = sphi 0, %s351
      %s369 = sphi 0, %s369
      %s371 = sphi 0, %s369
      %s372 = sphi 0, %s371
      %s386 = sphi 0, %s372
      %s390 = sphi 0, %s390
      %s392 = sphi 0, %s390
      %s393 = sphi 0, %s392
      %s407 = sphi 0, %s393
      %s411 = sphi 0, %s411
      %s413 = sphi 0, %s411
      %s414 = sphi 0, %s413
      %s428 = sphi 0, %s414
      %s432 = sphi 0, %s432
      %s434 = sphi 0, %s432
      %s435 = sphi 0, %s434
      %s449 = sphi 0, %s435
      %s453 = sphi 0, %s453
      %s455 = sphi 0, %s453
      %s456 = sphi 0, %s455
      %s470 = sphi 0, %s456
      %s474 = sphi 0, %s474
      %s476 = sphi 0, %s474
      %s477 = sphi 0, %s476
      %s491 = sphi 0, %s477
      %s495 = sphi 0, %s495
      %s497 = sphi 0, %s495
      %s498 = sphi 0, %s497
      %s512 = sphi 0, %s498
      %s518 = sphi 0, %s520
      %s521 = sphi 0, %s518
      %s522 = sphi 0, %s521
      %s538 = sphi 0, %s522
    $region4: #{ergpt2_forward.1} parent=1 // loop_header_branch
      %34 = sbr.rel (%p32) target = $region8
    $region5: #{ergpt2_forward.1} parent=1 // loop_body
      %s36 = ssub.s32 %s31, 1
      %s37 = ssub.s32 %s31, 2
      %s38 = sadd.s32 %s31, 1
      %s39 = ssub.s32 %s31, %s38
      %p40 = scmp.eq.s32.totalorder %s39, 0
      %s42 = sadd.s32 %s41, 1
      %s43 = scalar_select %p40, %s41, %s42
      %p46 = pneg %p40
      %p47 = scmp.eq.s32.totalorder %s31, 1
      %p48 = por %p46, %p47
      %p49 = scmp.ne.s32.totalorder %s41, %s44
      %p50 = scmp.eq.s32.totalorder %s31, 0
      %p51 = por %p49, %p50
      %p52 = scmp.ne.s32.totalorder %s41, %s44
      %p53 = scmp.eq.s32.totalorder %s36, 1
      %p54 = por %p52, %p53
      %p55 = scmp.ne.s32.totalorder %s44, %s45
      %p56 = scmp.eq.s32.totalorder %s36, 0
      %p57 = por %p55, %p56
      %p58 = scmp.ne.s32.totalorder %s44, %s45
      %p59 = scmp.eq.s32.totalorder %s37, 1
      %p60 = por %p58, %p59
      %p62 = scmp.ne.s32.totalorder %s45, %s61
      %p63 = scmp.eq.s32.totalorder %s37, 0
      %p64 = por %p62, %p63
      %s65 = ssub.s32 %s31, %s38
      %p66 = scmp.eq.s32.totalorder %s65, 0
      %s68 = sadd.s32 %s67, 1
      %s69 = scalar_select %p66, %s67, %s68
      %p72 = pneg %p66
      %p73 = scmp.eq.s32.totalorder %s31, 1
      %p74 = por %p72, %p73
      %p75 = scmp.ne.s32.totalorder %s67, %s70
      %p76 = scmp.eq.s32.totalorder %s31, 0
      %p77 = por %p75, %p76
      %p78 = scmp.ne.s32.totalorder %s67, %s70
      %p79 = scmp.eq.s32.totalorder %s36, 1
      %p80 = por %p78, %p79
      %p81 = scmp.ne.s32.totalorder %s70, %s71
      %p82 = scmp.eq.s32.totalorder %s36, 0
      %p83 = por %p81, %p82
      %p84 = scmp.ne.s32.totalorder %s70, %s71
      %p85 = scmp.eq.s32.totalorder %s37, 1
      %p86 = por %p84, %p85
      %p88 = scmp.ne.s32.totalorder %s71, %s87
      %p89 = scmp.eq.s32.totalorder %s37, 0
      %p90 = por %p88, %p89
      %s91 = ssub.s32 %s31, %s38
      %p92 = scmp.eq.s32.totalorder %s91, 0
      %s94 = sadd.s32 %s93, 1
      %s95 = scalar_select %p92, %s93, %s94
      %p98 = pneg %p92
      %p99 = scmp.eq.s32.totalorder %s31, 1
      %p100 = por %p98, %p99
      %p101 = scmp.ne.s32.totalorder %s93, %s96
      %p102 = scmp.eq.s32.totalorder %s31, 0
      %p103 = por %p101, %p102
      %p104 = scmp.ne.s32.totalorder %s93, %s96
      %p105 = scmp.eq.s32.totalorder %s36, 1
      %p106 = por %p104, %p105
      %p107 = scmp.ne.s32.totalorder %s96, %s97
      %p108 = scmp.eq.s32.totalorder %s36, 0
      %p109 = por %p107, %p108
      %p110 = scmp.ne.s32.totalorder %s96, %s97
      %p111 = scmp.eq.s32.totalorder %s37, 1
      %p112 = por %p110, %p111
      %p114 = scmp.ne.s32.totalorder %s97, %s113
      %p115 = scmp.eq.s32.totalorder %s37, 0
      %p116 = por %p114, %p115
      %s118 = sadd.s32 %s117, 1
      %p121 = scmp.eq.s32.totalorder %s31, 1
      %p122 = scmp.ne.s32.totalorder %s117, %s119
      %p123 = scmp.eq.s32.totalorder %s31, 0
      %p124 = por %p122, %p123
      %p125 = scmp.ne.s32.totalorder %s117, %s119
      %p126 = scmp.eq.s32.totalorder %s36, 1
      %p127 = por %p125, %p126
      %p128 = scmp.ne.s32.totalorder %s119, %s120
      %p129 = scmp.eq.s32.totalorder %s36, 0
      %p130 = por %p128, %p129
      %p131 = scmp.ne.s32.totalorder %s119, %s120
      %p132 = scmp.eq.s32.totalorder %s37, 1
      %p133 = por %p131, %p132
      %p135 = scmp.ne.s32.totalorder %s120, %s134
      %p136 = scmp.eq.s32.totalorder %s37, 0
      %p137 = por %p135, %p136
      %s139 = sadd.s32 %s138, 1
      %p142 = scmp.eq.s32.totalorder %s31, 1
      %p143 = scmp.ne.s32.totalorder %s138, %s140
      %p144 = scmp.eq.s32.totalorder %s31, 0
      %p145 = por %p143, %p144
      %p146 = scmp.ne.s32.totalorder %s138, %s140
      %p147 = scmp.eq.s32.totalorder %s36, 1
      %p148 = por %p146, %p147
      %p149 = scmp.ne.s32.totalorder %s140, %s141
      %p150 = scmp.eq.s32.totalorder %s36, 0
      %p151 = por %p149, %p150
      %p152 = scmp.ne.s32.totalorder %s140, %s141
      %p153 = scmp.eq.s32.totalorder %s37, 1
      %p154 = por %p152, %p153
      %p156 = scmp.ne.s32.totalorder %s141, %s155
      %p157 = scmp.eq.s32.totalorder %s37, 0
      %p158 = por %p156, %p157
      %s160 = sadd.s32 %s159, 1
      %p163 = scmp.eq.s32.totalorder %s31, 1
      %p164 = scmp.ne.s32.totalorder %s159, %s161
      %p165 = scmp.eq.s32.totalorder %s31, 0
      %p166 = por %p164, %p165
      %p167 = scmp.ne.s32.totalorder %s159, %s161
      %p168 = scmp.eq.s32.totalorder %s36, 1
      %p169 = por %p167, %p168
      %p170 = scmp.ne.s32.totalorder %s161, %s162
      %p171 = scmp.eq.s32.totalorder %s36, 0
      %p172 = por %p170, %p171
      %p173 = scmp.ne.s32.totalorder %s161, %s162
      %p174 = scmp.eq.s32.totalorder %s37, 1
      %p175 = por %p173, %p174
      %p177 = scmp.ne.s32.totalorder %s162, %s176
      %p178 = scmp.eq.s32.totalorder %s37, 0
      %p179 = por %p177, %p178
      %s181 = sadd.s32 %s180, 1
      %p184 = scmp.eq.s32.totalorder %s31, 1
      %p185 = scmp.ne.s32.totalorder %s180, %s182
      %p186 = scmp.eq.s32.totalorder %s31, 0
      %p187 = por %p185, %p186
      %p188 = scmp.ne.s32.totalorder %s180, %s182
      %p189 = scmp.eq.s32.totalorder %s36, 1
      %p190 = por %p188, %p189
      %p191 = scmp.ne.s32.totalorder %s182, %s183
      %p192 = scmp.eq.s32.totalorder %s36, 0
      %p193 = por %p191, %p192
      %p194 = scmp.ne.s32.totalorder %s182, %s183
      %p195 = scmp.eq.s32.totalorder %s37, 1
      %p196 = por %p194, %p195
      %p198 = scmp.ne.s32.totalorder %s183, %s197
      %p199 = scmp.eq.s32.totalorder %s37, 0
      %p200 = por %p198, %p199
      %s202 = sadd.s32 %s201, 1
      %p205 = scmp.eq.s32.totalorder %s31, 1
      %p206 = scmp.ne.s32.totalorder %s201, %s203
      %p207 = scmp.eq.s32.totalorder %s31, 0
      %p208 = por %p206, %p207
      %p209 = scmp.ne.s32.totalorder %s201, %s203
      %p210 = scmp.eq.s32.totalorder %s36, 1
      %p211 = por %p209, %p210
      %p212 = scmp.ne.s32.totalorder %s203, %s204
      %p213 = scmp.eq.s32.totalorder %s36, 0
      %p214 = por %p212, %p213
      %p215 = scmp.ne.s32.totalorder %s203, %s204
      %p216 = scmp.eq.s32.totalorder %s37, 1
      %p217 = por %p215, %p216
      %p219 = scmp.ne.s32.totalorder %s204, %s218
      %p220 = scmp.eq.s32.totalorder %s37, 0
      %p221 = por %p219, %p220
      %s223 = sadd.s32 %s222, 1
      %p226 = scmp.eq.s32.totalorder %s31, 1
      %p227 = scmp.ne.s32.totalorder %s222, %s224
      %p228 = scmp.eq.s32.totalorder %s31, 0
      %p229 = por %p227, %p228
      %p230 = scmp.ne.s32.totalorder %s222, %s224
      %p231 = scmp.eq.s32.totalorder %s36, 1
      %p232 = por %p230, %p231
      %p233 = scmp.ne.s32.totalorder %s224, %s225
      %p234 = scmp.eq.s32.totalorder %s36, 0
      %p235 = por %p233, %p234
      %p236 = scmp.ne.s32.totalorder %s224, %s225
      %p237 = scmp.eq.s32.totalorder %s37, 1
      %p238 = por %p236, %p237
      %p240 = scmp.ne.s32.totalorder %s225, %s239
      %p241 = scmp.eq.s32.totalorder %s37, 0
      %p242 = por %p240, %p241
      %s244 = sadd.s32 %s243, 1
      %p247 = scmp.eq.s32.totalorder %s31, 1
      %p248 = scmp.ne.s32.totalorder %s243, %s245
      %p249 = scmp.eq.s32.totalorder %s31, 0
      %p250 = por %p248, %p249
      %p251 = scmp.ne.s32.totalorder %s243, %s245
      %p252 = scmp.eq.s32.totalorder %s36, 1
      %p253 = por %p251, %p252
      %p254 = scmp.ne.s32.totalorder %s245, %s246
      %p255 = scmp.eq.s32.totalorder %s36, 0
      %p256 = por %p254, %p255
      %p257 = scmp.ne.s32.totalorder %s245, %s246
      %p258 = scmp.eq.s32.totalorder %s37, 1
      %p259 = por %p257, %p258
      %p261 = scmp.ne.s32.totalorder %s246, %s260
      %p262 = scmp.eq.s32.totalorder %s37, 0
      %p263 = por %p261, %p262
      %s265 = sadd.s32 %s264, 1
      %p268 = scmp.eq.s32.totalorder %s31, 1
      %p269 = scmp.ne.s32.totalorder %s264, %s266
      %p270 = scmp.eq.s32.totalorder %s31, 0
      %p271 = por %p269, %p270
      %p272 = scmp.ne.s32.totalorder %s264, %s266
      %p273 = scmp.eq.s32.totalorder %s36, 1
      %p274 = por %p272, %p273
      %p275 = scmp.ne.s32.totalorder %s266, %s267
      %p276 = scmp.eq.s32.totalorder %s36, 0
      %p277 = por %p275, %p276
      %p278 = scmp.ne.s32.totalorder %s266, %s267
      %p279 = scmp.eq.s32.totalorder %s37, 1
      %p280 = por %p278, %p279
      %p282 = scmp.ne.s32.totalorder %s267, %s281
      %p283 = scmp.eq.s32.totalorder %s37, 0
      %p284 = por %p282, %p283
      %s286 = sadd.s32 %s285, 1
      %p289 = scmp.eq.s32.totalorder %s31, 1
      %p290 = scmp.ne.s32.totalorder %s285, %s287
      %p291 = scmp.eq.s32.totalorder %s31, 0
      %p292 = por %p290, %p291
      %p293 = scmp.ne.s32.totalorder %s285, %s287
      %p294 = scmp.eq.s32.totalorder %s36, 1
      %p295 = por %p293, %p294
      %p296 = scmp.ne.s32.totalorder %s287, %s288
      %p297 = scmp.eq.s32.totalorder %s36, 0
      %p298 = por %p296, %p297
      %p299 = scmp.ne.s32.totalorder %s287, %s288
      %p300 = scmp.eq.s32.totalorder %s37, 1
      %p301 = por %p299, %p300
      %p303 = scmp.ne.s32.totalorder %s288, %s302
      %p304 = scmp.eq.s32.totalorder %s37, 0
      %p305 = por %p303, %p304
      %s307 = sadd.s32 %s306, 1
      %p310 = scmp.eq.s32.totalorder %s31, 1
      %p311 = scmp.ne.s32.totalorder %s306, %s308
      %p312 = scmp.eq.s32.totalorder %s31, 0
      %p313 = por %p311, %p312
      %p314 = scmp.ne.s32.totalorder %s306, %s308
      %p315 = scmp.eq.s32.totalorder %s36, 1
      %p316 = por %p314, %p315
      %p317 = scmp.ne.s32.totalorder %s308, %s309
      %p318 = scmp.eq.s32.totalorder %s36, 0
      %p319 = por %p317, %p318
      %p320 = scmp.ne.s32.totalorder %s308, %s309
      %p321 = scmp.eq.s32.totalorder %s37, 1
      %p322 = por %p320, %p321
      %p324 = scmp.ne.s32.totalorder %s309, %s323
      %p325 = scmp.eq.s32.totalorder %s37, 0
      %p326 = por %p324, %p325
      %s328 = sadd.s32 %s327, 1
      %p331 = scmp.eq.s32.totalorder %s31, 1
      %p332 = scmp.ne.s32.totalorder %s327, %s329
      %p333 = scmp.eq.s32.totalorder %s31, 0
      %p334 = por %p332, %p333
      %p335 = scmp.ne.s32.totalorder %s327, %s329
      %p336 = scmp.eq.s32.totalorder %s36, 1
      %p337 = por %p335, %p336
      %p338 = scmp.ne.s32.totalorder %s329, %s330
      %p339 = scmp.eq.s32.totalorder %s36, 0
      %p340 = por %p338, %p339
      %p341 = scmp.ne.s32.totalorder %s329, %s330
      %p342 = scmp.eq.s32.totalorder %s37, 1
      %p343 = por %p341, %p342
      %p345 = scmp.ne.s32.totalorder %s330, %s344
      %p346 = scmp.eq.s32.totalorder %s37, 0
      %p347 = por %p345, %p346
      %s349 = sadd.s32 %s348, 1
      %p352 = scmp.eq.s32.totalorder %s31, 1
      %p353 = scmp.ne.s32.totalorder %s348, %s350
      %p354 = scmp.eq.s32.totalorder %s31, 0
      %p355 = por %p353, %p354
      %p356 = scmp.ne.s32.totalorder %s348, %s350
      %p357 = scmp.eq.s32.totalorder %s36, 1
      %p358 = por %p356, %p357
      %p359 = scmp.ne.s32.totalorder %s350, %s351
      %p360 = scmp.eq.s32.totalorder %s36, 0
      %p361 = por %p359, %p360
      %p362 = scmp.ne.s32.totalorder %s350, %s351
      %p363 = scmp.eq.s32.totalorder %s37, 1
      %p364 = por %p362, %p363
      %p366 = scmp.ne.s32.totalorder %s351, %s365
      %p367 = scmp.eq.s32.totalorder %s37, 0
      %p368 = por %p366, %p367
      %s370 = sadd.s32 %s369, 1
      %p373 = scmp.eq.s32.totalorder %s31, 1
      %p374 = scmp.ne.s32.totalorder %s369, %s371
      %p375 = scmp.eq.s32.totalorder %s31, 0
      %p376 = por %p374, %p375
      %p377 = scmp.ne.s32.totalorder %s369, %s371
      %p378 = scmp.eq.s32.totalorder %s36, 1
      %p379 = por %p377, %p378
      %p380 = scmp.ne.s32.totalorder %s371, %s372
      %p381 = scmp.eq.s32.totalorder %s36, 0
      %p382 = por %p380, %p381
      %p383 = scmp.ne.s32.totalorder %s371, %s372
      %p384 = scmp.eq.s32.totalorder %s37, 1
      %p385 = por %p383, %p384
      %p387 = scmp.ne.s32.totalorder %s372, %s386
      %p388 = scmp.eq.s32.totalorder %s37, 0
      %p389 = por %p387, %p388
      %s391 = sadd.s32 %s390, 1
      %p394 = scmp.eq.s32.totalorder %s31, 1
      %p395 = scmp.ne.s32.totalorder %s390, %s392
      %p396 = scmp.eq.s32.totalorder %s31, 0
      %p397 = por %p395, %p396
      %p398 = scmp.ne.s32.totalorder %s390, %s392
      %p399 = scmp.eq.s32.totalorder %s36, 1
      %p400 = por %p398, %p399
      %p401 = scmp.ne.s32.totalorder %s392, %s393
      %p402 = scmp.eq.s32.totalorder %s36, 0
      %p403 = por %p401, %p402
      %p404 = scmp.ne.s32.totalorder %s392, %s393
      %p405 = scmp.eq.s32.totalorder %s37, 1
      %p406 = por %p404, %p405
      %p408 = scmp.ne.s32.totalorder %s393, %s407
      %p409 = scmp.eq.s32.totalorder %s37, 0
      %p410 = por %p408, %p409
      %s412 = sadd.s32 %s411, 1
      %p415 = scmp.eq.s32.totalorder %s31, 1
      %p416 = scmp.ne.s32.totalorder %s411, %s413
      %p417 = scmp.eq.s32.totalorder %s31, 0
      %p418 = por %p416, %p417
      %p419 = scmp.ne.s32.totalorder %s411, %s413
      %p420 = scmp.eq.s32.totalorder %s36, 1
      %p421 = por %p419, %p420
      %p422 = scmp.ne.s32.totalorder %s413, %s414
      %p423 = scmp.eq.s32.totalorder %s36, 0
      %p424 = por %p422, %p423
      %p425 = scmp.ne.s32.totalorder %s413, %s414
      %p426 = scmp.eq.s32.totalorder %s37, 1
      %p427 = por %p425, %p426
      %p429 = scmp.ne.s32.totalorder %s414, %s428
      %p430 = scmp.eq.s32.totalorder %s37, 0
      %p431 = por %p429, %p430
      %s433 = sadd.s32 %s432, 1
      %p436 = scmp.eq.s32.totalorder %s31, 1
      %p437 = scmp.ne.s32.totalorder %s432, %s434
      %p438 = scmp.eq.s32.totalorder %s31, 0
      %p439 = por %p437, %p438
      %p440 = scmp.ne.s32.totalorder %s432, %s434
      %p441 = scmp.eq.s32.totalorder %s36, 1
      %p442 = por %p440, %p441
      %p443 = scmp.ne.s32.totalorder %s434, %s435
      %p444 = scmp.eq.s32.totalorder %s36, 0
      %p445 = por %p443, %p444
      %p446 = scmp.ne.s32.totalorder %s434, %s435
      %p447 = scmp.eq.s32.totalorder %s37, 1
      %p448 = por %p446, %p447
      %p450 = scmp.ne.s32.totalorder %s435, %s449
      %p451 = scmp.eq.s32.totalorder %s37, 0
      %p452 = por %p450, %p451
      %s454 = sadd.s32 %s453, 1
      %p457 = scmp.eq.s32.totalorder %s31, 1
      %p458 = scmp.ne.s32.totalorder %s453, %s455
      %p459 = scmp.eq.s32.totalorder %s31, 0
      %p460 = por %p458, %p459
      %p461 = scmp.ne.s32.totalorder %s453, %s455
      %p462 = scmp.eq.s32.totalorder %s36, 1
      %p463 = por %p461, %p462
      %p464 = scmp.ne.s32.totalorder %s455, %s456
      %p465 = scmp.eq.s32.totalorder %s36, 0
      %p466 = por %p464, %p465
      %p467 = scmp.ne.s32.totalorder %s455, %s456
      %p468 = scmp.eq.s32.totalorder %s37, 1
      %p469 = por %p467, %p468
      %p471 = scmp.ne.s32.totalorder %s456, %s470
      %p472 = scmp.eq.s32.totalorder %s37, 0
      %p473 = por %p471, %p472
      %s475 = sadd.s32 %s474, 1
      %p478 = scmp.eq.s32.totalorder %s31, 1
      %p479 = scmp.ne.s32.totalorder %s474, %s476
      %p480 = scmp.eq.s32.totalorder %s31, 0
      %p481 = por %p479, %p480
      %p482 = scmp.ne.s32.totalorder %s474, %s476
      %p483 = scmp.eq.s32.totalorder %s36, 1
      %p484 = por %p482, %p483
      %p485 = scmp.ne.s32.totalorder %s476, %s477
      %p486 = scmp.eq.s32.totalorder %s36, 0
      %p487 = por %p485, %p486
      %p488 = scmp.ne.s32.totalorder %s476, %s477
      %p489 = scmp.eq.s32.totalorder %s37, 1
      %p490 = por %p488, %p489
      %p492 = scmp.ne.s32.totalorder %s477, %s491
      %p493 = scmp.eq.s32.totalorder %s37, 0
      %p494 = por %p492, %p493
      %s496 = sadd.s32 %s495, 1
      %p499 = scmp.eq.s32.totalorder %s31, 1
      %p500 = scmp.ne.s32.totalorder %s495, %s497
      %p501 = scmp.eq.s32.totalorder %s31, 0
      %p502 = por %p500, %p501
      %p503 = scmp.ne.s32.totalorder %s495, %s497
      %p504 = scmp.eq.s32.totalorder %s36, 1
      %p505 = por %p503, %p504
      %p506 = scmp.ne.s32.totalorder %s497, %s498
      %p507 = scmp.eq.s32.totalorder %s36, 0
      %p508 = por %p506, %p507
      %p509 = scmp.ne.s32.totalorder %s497, %s498
      %p510 = scmp.eq.s32.totalorder %s37, 1
      %p511 = por %p509, %p510
      %p513 = scmp.ne.s32.totalorder %s498, %s512
      %p514 = scmp.eq.s32.totalorder %s37, 0
      %p515 = por %p513, %p514
      %s516 = ssub.s32 %s31, %s38
      %p517 = scmp.eq.s32.totalorder %s516, 0
      %s519 = sadd.s32 %s518, 1
      %s520 = scalar_select %p517, %s518, %s519
      %p523 = pneg %p517
      %p524 = scmp.eq.s32.totalorder %s31, 1
      %p525 = por %p523, %p524
      %p526 = scmp.ne.s32.totalorder %s518, %s521
      %p527 = scmp.eq.s32.totalorder %s31, 0
      %p528 = por %p526, %p527
      %p529 = scmp.ne.s32.totalorder %s518, %s521
      %p530 = scmp.eq.s32.totalorder %s36, 1
      %p531 = por %p529, %p530
      %p532 = scmp.ne.s32.totalorder %s521, %s522
      %p533 = scmp.eq.s32.totalorder %s36, 0
      %p534 = por %p532, %p533
      %p535 = scmp.ne.s32.totalorder %s521, %s522
      %p536 = scmp.eq.s32.totalorder %s37, 1
      %p537 = por %p535, %p536
      %p539 = scmp.ne.s32.totalorder %s522, %s538
      %p540 = scmp.eq.s32.totalorder %s37, 0
      %p541 = por %p539, %p540
      %p542 = scmp.le.s32.totalorder 1, %s31
      %p543 = scmp.lt.s32.totalorder %s31, 3
      %p544 = pnand %p542, %p543
      %p545 = pneg %p544
      // Predicated region
      $region9: #{ergpt2_forward.1} parent=5 // pred_check
        _
      $region10: #{ergpt2_forward.1} parent=5 // pred_check_branch
        %547 = sbr.rel (%p544) target = $region12
      $region11: #{ergpt2_forward.1} parent=5 // pred_region
        %s548 = ssub.s32 %s31, 1
        // Predicated region
        $region13: #{ergpt2_forward.1} parent=11 // pred_check
          %p549 = pneg %p130
        $region14: #{ergpt2_forward.1} parent=11 // pred_check_branch
          %551 = sbr.rel (%p549) target = $region16
        $region15: #{ergpt2_forward.1} parent=11 // pred_region
          _
        $region16: #{ergpt2_forward.1} parent=11 // pred_fallthru
          _
        // Predicated region
        $region17: #{ergpt2_forward.1} parent=11 // pred_check
          %p552 = pneg %p151
        $region18: #{ergpt2_forward.1} parent=11 // pred_check_branch
          %554 = sbr.rel (%p552) target = $region20
        $region19: #{ergpt2_forward.1} parent=11 // pred_region
          _
        $region20: #{ergpt2_forward.1} parent=11 // pred_fallthru
          _
        // Predicated region
        $region21: #{ergpt2_forward.1} parent=11 // pred_check
          %p555 = pneg %p172
        $region22: #{ergpt2_forward.1} parent=11 // pred_check_branch
          %557 = sbr.rel (%p555) target = $region24
        $region23: #{ergpt2_forward.1} parent=11 // pred_region
          _
        $region24: #{ergpt2_forward.1} parent=11 // pred_fallthru
          _
        // Predicated region
        $region25: #{ergpt2_forward.1} parent=11 // pred_check
          %p558 = pneg %p193
        $region26: #{ergpt2_forward.1} parent=11 // pred_check_branch
          %560 = sbr.rel (%p558) target = $region28
        $region27: #{ergpt2_forward.1} parent=11 // pred_region
          _
        $region28: #{ergpt2_forward.1} parent=11 // pred_fallthru
          _
        // Predicated region
        $region29: #{ergpt2_forward.1} parent=11 // pred_check
          %p561 = pneg %p214
        $region30: #{ergpt2_forward.1} parent=11 // pred_check_branch
          %563 = sbr.rel (%p561) target = $region32
        $region31: #{ergpt2_forward.1} parent=11 // pred_region
          %s565 = ssub.s32 6144, 6144
          %566 = vsyncadd [#allocation3], %s565
          %s567 = sshll.u32 [#allocation2], 4
          %s568 = int_to_ptr.vmem [resolvable:$true] %s567
          %573 = dma.hbm_to_vmem [thread:$0]  %s7, 6144, %s568, [#allocation3], 192, 192, 12
        $region32: #{ergpt2_forward.1} parent=11 // pred_fallthru
          _
        // Predicated region
        $region33: #{ergpt2_forward.1} parent=11 // pred_check
          %p574 = pneg %p235
        $region34: #{ergpt2_forward.1} parent=11 // pred_check_branch
          %576 = sbr.rel (%p574) target = $region36
        $region35: #{ergpt2_forward.1} parent=11 // pred_region
          _
        $region36: #{ergpt2_forward.1} parent=11 // pred_fallthru
          _
        // Predicated region
        $region37: #{ergpt2_forward.1} parent=11 // pred_check
          %p577 = pneg %p256
        $region38: #{ergpt2_forward.1} parent=11 // pred_check_branch
          %579 = sbr.rel (%p577) target = $region40
        $region39: #{ergpt2_forward.1} parent=11 // pred_region
          _
        $region40: #{ergpt2_forward.1} parent=11 // pred_fallthru
          _
        // Predicated region
        $region41: #{ergpt2_forward.1} parent=11 // pred_check
          %p580 = pneg %p277
        $region42: #{ergpt2_forward.1} parent=11 // pred_check_branch
          %582 = sbr.rel (%p580) target = $region44
        $region43: #{ergpt2_forward.1} parent=11 // pred_region
          _
        $region44: #{ergpt2_forward.1} parent=11 // pred_fallthru
          _
        // Predicated region
        $region45: #{ergpt2_forward.1} parent=11 // pred_check
          %p583 = pneg %p298
        $region46: #{ergpt2_forward.1} parent=11 // pred_check_branch
          %585 = sbr.rel (%p583) target = $region48
        $region47: #{ergpt2_forward.1} parent=11 // pred_region
          %s587 = ssub.s32 2048, 2048
          %588 = vsyncadd [#allocation5], %s587
          %s589 = sshll.u32 [#allocation4], 4
          %s590 = int_to_ptr.vmem [resolvable:$true] %s589
          %595 = dma.hbm_to_vmem [thread:$0]  %s11, 2048, %s590, [#allocation5], 128, 128, 8
        $region48: #{ergpt2_forward.1} parent=11 // pred_fallthru
          _
        // Predicated region
        $region49: #{ergpt2_forward.1} parent=11 // pred_check
          %p596 = pneg %p319
        $region50: #{ergpt2_forward.1} parent=11 // pred_check_branch
          %598 = sbr.rel (%p596) target = $region52
        $region51: #{ergpt2_forward.1} parent=11 // pred_region
          _
        $region52: #{ergpt2_forward.1} parent=11 // pred_fallthru
          _
        // Predicated region
        $region53: #{ergpt2_forward.1} parent=11 // pred_check
          %p599 = pneg %p340
        $region54: #{ergpt2_forward.1} parent=11 // pred_check_branch
          %601 = sbr.rel (%p599) target = $region56
        $region55: #{ergpt2_forward.1} parent=11 // pred_region
          _
        $region56: #{ergpt2_forward.1} parent=11 // pred_fallthru
          _
        // Predicated region
        $region57: #{ergpt2_forward.1} parent=11 // pred_check
          %p602 = pneg %p361
        $region58: #{ergpt2_forward.1} parent=11 // pred_check_branch
          %604 = sbr.rel (%p602) target = $region60
        $region59: #{ergpt2_forward.1} parent=11 // pred_region
          _
        $region60: #{ergpt2_forward.1} parent=11 // pred_fallthru
          _
        // Predicated region
        $region61: #{ergpt2_forward.1} parent=11 // pred_check
          %p605 = pneg %p382
        $region62: #{ergpt2_forward.1} parent=11 // pred_check_branch
          %607 = sbr.rel (%p605) target = $region64
        $region63: #{ergpt2_forward.1} parent=11 // pred_region
          %s609 = ssub.s32 2048, 2048
          %610 = vsyncadd [#allocation5], %s609
          %s611 = sshll.u32 [#allocation6], 4
          %s612 = int_to_ptr.vmem [resolvable:$true] %s611
          %617 = dma.hbm_to_vmem [thread:$0]  %s15, 2048, %s612, [#allocation5], 64, 64, 4
        $region64: #{ergpt2_forward.1} parent=11 // pred_fallthru
          _
        // Predicated region
        $region65: #{ergpt2_forward.1} parent=11 // pred_check
          %p618 = pneg %p403
        $region66: #{ergpt2_forward.1} parent=11 // pred_check_branch
          %620 = sbr.rel (%p618) target = $region68
        $region67: #{ergpt2_forward.1} parent=11 // pred_region
          _
        $region68: #{ergpt2_forward.1} parent=11 // pred_fallthru
          _
        // Predicated region
        $region69: #{ergpt2_forward.1} parent=11 // pred_check
          %p621 = pneg %p424
        $region70: #{ergpt2_forward.1} parent=11 // pred_check_branch
          %623 = sbr.rel (%p621) target = $region72
        $region71: #{ergpt2_forward.1} parent=11 // pred_region
          %s625 = ssub.s32 2048, 2048
          %626 = vsyncadd [#allocation8], %s625
          %s627 = sshll.u32 [#allocation7], 4
          %s628 = int_to_ptr.vmem [resolvable:$true] %s627
          %633 = dma.hbm_to_vmem [thread:$0]  %s17, 2048, %s628, [#allocation8], 64, 64, 4
        $region72: #{ergpt2_forward.1} parent=11 // pred_fallthru
          _
        // Predicated region
        $region73: #{ergpt2_forward.1} parent=11 // pred_check
          %p634 = pneg %p445
        $region74: #{ergpt2_forward.1} parent=11 // pred_check_branch
          %636 = sbr.rel (%p634) target = $region76
        $region75: #{ergpt2_forward.1} parent=11 // pred_region
          _
        $region76: #{ergpt2_forward.1} parent=11 // pred_fallthru
          _
        // Predicated region
        $region77: #{ergpt2_forward.1} parent=11 // pred_check
          %p637 = pneg %p466
        $region78: #{ergpt2_forward.1} parent=11 // pred_check_branch
          %639 = sbr.rel (%p637) target = $region80
        $region79: #{ergpt2_forward.1} parent=11 // pred_region
          _
        $region80: #{ergpt2_forward.1} parent=11 // pred_fallthru
          _
        // Predicated region
        $region81: #{ergpt2_forward.1} parent=11 // pred_check
          %p640 = pneg %p487
        $region82: #{ergpt2_forward.1} parent=11 // pred_check_branch
          %642 = sbr.rel (%p640) target = $region84
        $region83: #{ergpt2_forward.1} parent=11 // pred_region
          _
        $region84: #{ergpt2_forward.1} parent=11 // pred_fallthru
          _
        // Predicated region
        $region85: #{ergpt2_forward.1} parent=11 // pred_check
          %p643 = pneg %p508
        $region86: #{ergpt2_forward.1} parent=11 // pred_check_branch
          %645 = sbr.rel (%p643) target = $region88
        $region87: #{ergpt2_forward.1} parent=11 // pred_region
          _
        $region88: #{ergpt2_forward.1} parent=11 // pred_fallthru
          _
      $region12: #{ergpt2_forward.1} parent=5 // pred_fallthru
        _
      %p646 = scmp.lt.s32.totalorder %s31, 2
      // Predicated region
      $region89: #{ergpt2_forward.1} parent=5 // pred_check
        %p647 = pneg %p646
      $region90: #{ergpt2_forward.1} parent=5 // pred_check_branch
        %649 = sbr.rel (%p647) target = $region92
      $region91: #{ergpt2_forward.1} parent=5 // pred_region
        // Predicated region
        $region93: #{ergpt2_forward.1} parent=91 // pred_check
          %p650 = pneg %p51
        $region94: #{ergpt2_forward.1} parent=91 // pred_check_branch
          %652 = sbr.rel (%p650) target = $region96
        $region95: #{ergpt2_forward.1} parent=91 // pred_region
          %p653 = scmp.lt.s32.totalorder %s31, 1
          %s654 = scalar_select %p653, %s31, 1
          %s655 = smul.addr %s654, 4
          %s656 = scalar_lea.vmem %s0, %s655
        $region96: #{ergpt2_forward.1} parent=91 // pred_fallthru
          _
        // Predicated region
        $region97: #{ergpt2_forward.1} parent=91 // pred_check
          %p657 = pneg %p77
        $region98: #{ergpt2_forward.1} parent=91 // pred_check_branch
          %659 = sbr.rel (%p657) target = $region100
        $region99: #{ergpt2_forward.1} parent=91 // pred_region
          %p660 = scmp.lt.s32.totalorder %s31, 1
          %s661 = scalar_select %p660, %s31, 1
          %s662 = smul.addr %s661, 8
          %s663 = scalar_lea.vmem %s1, %s662
        $region100: #{ergpt2_forward.1} parent=91 // pred_fallthru
          _
        // Predicated region
        $region101: #{ergpt2_forward.1} parent=91 // pred_check
          %p664 = pneg %p103
        $region102: #{ergpt2_forward.1} parent=91 // pred_check_branch
          %666 = sbr.rel (%p664) target = $region104
        $region103: #{ergpt2_forward.1} parent=91 // pred_region
          %p667 = scmp.lt.s32.totalorder %s31, 1
          %s668 = scalar_select %p667, %s31, 1
          %s669 = scalar_lea.vmem %s2, %s668
        $region104: #{ergpt2_forward.1} parent=91 // pred_fallthru
          _
      $region92: #{ergpt2_forward.1} parent=5 // pred_fallthru
        _
      %p670 = scmp.le.s32.totalorder 1, %s31
      %p671 = scmp.lt.s32.totalorder %s31, 3
      %p672 = pnand %p670, %p671
      %p673 = pneg %p672
      // Predicated region
      $region105: #{ergpt2_forward.1} parent=5 // pred_check
        _
      $region106: #{ergpt2_forward.1} parent=5 // pred_check_branch
        %675 = sbr.rel (%p672) target = $region108
      $region107: #{ergpt2_forward.1} parent=5 // pred_region
        %s676 = ssub.s32 %s31, 1
        // Predicated region
        $region109: #{ergpt2_forward.1} parent=107 // pred_check
          %p677 = pneg %p214
        $region110: #{ergpt2_forward.1} parent=107 // pred_check_branch
          %679 = sbr.rel (%p677) target = $region112
        $region111: #{ergpt2_forward.1} parent=107 // pred_region
          %680 = dma.done [#allocation3], 6144
        $region112: #{ergpt2_forward.1} parent=107 // pred_fallthru
          _
        // Predicated region
        $region113: #{ergpt2_forward.1} parent=107 // pred_check
          %p681 = pneg %p298
        $region114: #{ergpt2_forward.1} parent=107 // pred_check_branch
          %683 = sbr.rel (%p681) target = $region116
        $region115: #{ergpt2_forward.1} parent=107 // pred_region
          %684 = dma.done [#allocation5], 2048
        $region116: #{ergpt2_forward.1} parent=107 // pred_fallthru
          _
        // Predicated region
        $region117: #{ergpt2_forward.1} parent=107 // pred_check
          %p685 = pneg %p382
        $region118: #{ergpt2_forward.1} parent=107 // pred_check_branch
          %687 = sbr.rel (%p685) target = $region120
        $region119: #{ergpt2_forward.1} parent=107 // pred_region
          %688 = dma.done [#allocation5], 2048
        $region120: #{ergpt2_forward.1} parent=107 // pred_fallthru
          _
        // Predicated region
        $region121: #{ergpt2_forward.1} parent=107 // pred_check
          %p689 = pneg %p424
        $region122: #{ergpt2_forward.1} parent=107 // pred_check_branch
          %691 = sbr.rel (%p689) target = $region124
        $region123: #{ergpt2_forward.1} parent=107 // pred_region
          %692 = dma.done [#allocation8], 2048
        $region124: #{ergpt2_forward.1} parent=107 // pred_fallthru
          _
        %p693 = scmp.lt.s32.totalorder %s36, 1
        %s694 = scalar_select %p693, %s36, 1
        %s695 = smul.addr %s694, 4
        %s696 = scalar_lea.vmem %s0, %s695
        %p697 = pneg %p57
        %p698 = pneg %p54
        %p699 = scmp.lt.s32.totalorder %s36, 1
        %s700 = scalar_select %p699, %s36, 1
        %s701 = smul.addr %s700, 8
        %s702 = scalar_lea.vmem %s1, %s701
        %p703 = pneg %p83
        %p704 = pneg %p80
        %p705 = scmp.lt.s32.totalorder %s36, 1
        %s706 = scalar_select %p705, %s36, 1
        %s707 = scalar_lea.vmem %s2, %s706
        %p708 = pneg %p109
        %p709 = pneg %p106
        %p710 = pneg %p130
        %p711 = pneg %p127
        %p712 = pneg %p151
        %p713 = pneg %p148
        %p714 = pneg %p172
        %p715 = pneg %p169
        %p716 = pneg %p193
        %p717 = pneg %p190
        %p718 = pneg %p214
        %p719 = pneg %p211
        %p720 = pneg %p235
        %p721 = pneg %p232
        %p722 = pneg %p256
        %p723 = pneg %p253
        %p724 = pneg %p277
        %p725 = pneg %p274
        %p726 = pneg %p298
        %p727 = pneg %p295
        %p728 = pneg %p319
        %p729 = pneg %p316
        %p730 = pneg %p340
        %p731 = pneg %p337
        %p732 = pneg %p361
        %p733 = pneg %p358
        %p734 = pneg %p382
        %p735 = pneg %p379
        %p736 = pneg %p403
        %p737 = pneg %p400
        %p738 = pneg %p424
        %p739 = pneg %p421
        %p740 = pneg %p445
        %p741 = pneg %p442
        %p742 = pneg %p466
        %p743 = pneg %p463
        %p744 = pneg %p487
        %p745 = pneg %p484
        %p746 = pneg %p508
        %p747 = pneg %p505
        %p748 = pneg %p534
        %p749 = pneg %p531
        %p750 = scmp.lt.s32.totalorder %s36, 1
        %s751 = scalar_select %p750, %s36, 1
        %s752 = smul.addr %s751, 8
        %s753 = scalar_lea.vmem %s22, %s752
        %p754 = scmp.lt.s32.totalorder %s36, 1
        %s755 = scalar_select %p754, %s36, 1
        %s756 = smul.addr %s755, 4
        %s757 = scalar_lea.vmem %s0, %s756
        %p758 = scmp.lt.s32.totalorder %s36, 1
        %s759 = scalar_select %p758, %s36, 1
        %s760 = smul.addr %s759, 8
        %s761 = scalar_lea.vmem %s1, %s760
        %p762 = scmp.lt.s32.totalorder %s36, 1
        %s763 = scalar_select %p762, %s36, 1
        %s764 = scalar_lea.vmem %s2, %s763
        %p765 = scmp.lt.s32.totalorder %s36, 1
        %s766 = scalar_select %p765, %s36, 1
        %s767 = smul.addr %s766, 8
        %s768 = scalar_lea.vmem %s22, %s767
        %v770 = vlaneseq
        %v771 = vand.u32 %v770, 127
        %vm772 = vcmp.lt.s32.totalorder %v771, 32
        %v773 = vsel %vm772, 1, 0
        %v774 = vcvt.s32.f32 %v773
        %v775 = vld [vmem:[%s757] sm:$0xf]
        %vm776 = vcmask 125952
        %v777 = vsel %vm776, %v775, 0.0
        %778 = vadd.xlane.f32.xlu0 %v777
        %v779 = vpop.xlane.xlu0 %778
        %v780 = vmul.f32 %v779, 0.0625
        %v781 = vld [vmem:[%s3] sm:$0x3]
        %v782 = vpack.c.bf16 %v780, %v780
        %v783 = vld [vmem:[%s4] sm:$0x1]
        %v785 = vunpack.c.l.b16 %v782
        %v786 = vlaneseq
        %v787 = vshrl.u32 %v786, 7
        %v788 = vsub.s32 %v771, %v787
        %v789 = vrot.slane %v785, %v788
        %v790 = vpack.c.b16 %v789, %v789
        %vm791 = vcmask 31744
        %v793 = vsel %vm791, %v790, 0
        %vm795 = vcmask 1041408
        %v797 = vsel %vm795, %v781, 0
        %799 = vmatprep.subr.bf16.mxu0 0
        %800 = vmatpush1.bf16.msra.mxu0 %v797
        %801 = vmatprep.subr.bf16.mxu0 0
        %802 = vmatpush1.bf16.msra.mxu0 0
        %803 = vmatprep.subr.bf16.mxu0 0
        %804 = vmatpush1.bf16.msra.mxu0 0
        %805 = vmatprep.subr.bf16.mxu0 0
        %806 = vmatpush1.bf16.msra.mxu0 0
        %807 = vmatprep.subr.bf16.mxu0 0
        %808 = vmatpush1.bf16.msra.mxu0 0
        %809 = vmatprep.subr.bf16.mxu0 0
        %810 = vmatpush1.bf16.msra.mxu0 0
        %811 = vmatprep.subr.bf16.mxu0 0
        %812 = vmatpush1.bf16.msra.mxu0 0
        %813 = vmatprep.subr.bf16.mxu0 0
        %814 = vmatpush1.bf16.msra.mxu0 0
        %815 = vmatprep.subr.bf16.mxu0 0
        %816 = vmatpush1.bf16.msra.mxu0 0
        %817 = vmatprep.subr.bf16.mxu0 0
        %818 = vmatpush1.bf16.msra.mxu0 0
        %819 = vmatprep.subr.bf16.mxu0 0
        %820 = vmatpush1.bf16.msra.mxu0 0
        %821 = vmatprep.subr.bf16.mxu0 0
        %822 = vmatpush1.bf16.msra.mxu0 0
        %823 = vmatprep.subr.bf16.mxu0 0
        %824 = vmatpush1.bf16.msra.mxu0 0
        %825 = vmatprep.subr.bf16.mxu0 0
        %826 = vmatpush1.bf16.msra.mxu0 0
        %827 = vmatprep.subr.bf16.mxu0 0
        %828 = vmatpush1.bf16.msra.mxu0 0
        %829 = vmatprep.subr.bf16.mxu0 0
        %830 = vmatpush1.bf16.msra.mxu0 0
        %831 = vmatprep.mubr.bf16.mxu0 0
        %832 = vmatmul.mubr.bf16.gmra.mrb[0].mxu0 %v793
        %v833 = vpop.f32.mrb[0].mxu0
        %v834 = vadd.f32 %v783, %v833
        %v835 = vpop.f32.mrb[0].mxu0
        %v836 = vpop.f32.mrb[0].mxu0
        %v837 = vpop.f32.mrb[0].mxu0
        %838 = vdwg.mxu0
        %v839 = vld [vmem:[#allocation4] sm:$0xff]
        %v840 = vld [vmem:[#allocation4 + $0x8] sm:$0xff]
        %v841 = vld [vmem:[#allocation4 + $0x10] sm:$0xff]
        %v842 = vld [vmem:[#allocation4 + $0x18] sm:$0xff]
        %v843 = vld [vmem:[#allocation4 + $0x20] sm:$0xff]
        %v844 = vld [vmem:[#allocation4 + $0x28] sm:$0xff]
        %v845 = vld [vmem:[#allocation4 + $0x30] sm:$0xff]
        %v846 = vld [vmem:[#allocation4 + $0x38] sm:$0xff]
        %v847 = vld [vmem:[#allocation4 + $0x40] sm:$0xff]
        %v848 = vld [vmem:[#allocation4 + $0x48] sm:$0xff]
        %v849 = vld [vmem:[#allocation4 + $0x50] sm:$0xff]
        %v850 = vld [vmem:[#allocation4 + $0x58] sm:$0xff]
        %v851 = vld [vmem:[#allocation4 + $0x60] sm:$0xff]
        %v852 = vld [vmem:[#allocation4 + $0x68] sm:$0xff]
        %v853 = vld [vmem:[#allocation4 + $0x70] sm:$0xff]
        %v854 = vld [vmem:[#allocation4 + $0x78] sm:$0xff]
        %v855 = vpack.c.bf16 %v834, %v834
        %v856 = vld [vmem:[%s12] sm:$0x3]
        %v873 = vunpack.c.l.b16 %v839
        %v874 = vunpack.c.h.b16 %v839
        %v875 = vunpack.c.l.b16 %v840
        %v876 = vunpack.c.h.b16 %v840
        %v877 = vunpack.c.l.b16 %v841
        %v878 = vunpack.c.h.b16 %v841
        %v879 = vunpack.c.l.b16 %v842
        %v880 = vunpack.c.h.b16 %v842
        %v881 = vunpack.c.l.b16 %v843
        %v882 = vunpack.c.h.b16 %v843
        %v883 = vunpack.c.l.b16 %v844
        %v884 = vunpack.c.h.b16 %v844
        %v885 = vunpack.c.l.b16 %v845
        %v886 = vunpack.c.h.b16 %v845
        %v887 = vunpack.c.l.b16 %v846
        %v888 = vunpack.c.h.b16 %v846
        %v889 = vunpack.c.l.b16 %v847
        %v890 = vunpack.c.h.b16 %v847
        %v891 = vunpack.c.l.b16 %v848
        %v892 = vunpack.c.h.b16 %v848
        %v893 = vunpack.c.l.b16 %v849
        %v894 = vunpack.c.h.b16 %v849
        %v895 = vunpack.c.l.b16 %v850
        %v896 = vunpack.c.h.b16 %v850
        %v897 = vunpack.c.l.b16 %v851
        %v898 = vunpack.c.h.b16 %v851
        %v899 = vunpack.c.l.b16 %v852
        %v900 = vunpack.c.h.b16 %v852
        %v901 = vunpack.c.l.b16 %v853
        %v902 = vunpack.c.h.b16 %v853
        %v903 = vunpack.c.l.b16 %v854
        %v904 = vunpack.c.h.b16 %v854
        %v905 = vpack.c.b16 %v875, %v873
        %v906 = vpack.c.b16 %v876, %v874
        %v907 = vpack.c.b16 %v879, %v877
        %v908 = vpack.c.b16 %v880, %v878
        %v909 = vpack.c.b16 %v883, %v881
        %v910 = vpack.c.b16 %v884, %v882
        %v911 = vpack.c.b16 %v887, %v885
        %v912 = vpack.c.b16 %v888, %v886
        %v913 = vpack.c.b16 %v891, %v889
        %v914 = vpack.c.b16 %v892, %v890
        %v915 = vpack.c.b16 %v895, %v893
        %v916 = vpack.c.b16 %v896, %v894
        %v917 = vpack.c.b16 %v899, %v897
        %v918 = vpack.c.b16 %v900, %v898
        %v919 = vpack.c.b16 %v903, %v901
        %v920 = vpack.c.b16 %v904, %v902
        %v938 = vlaneseq
        %v939 = vshrl.u32 %v938, 7
        %v940 = vsub.s32 0, %v939
        %v941 = vrot.slane %v856, %v940
        %v942 = vlaneseq
        %v943 = vshrl.u32 %v942, 7
        %v944 = vsub.s32 1, %v943
        %v945 = vrot.slane %v856, %v944
        %948 = vmatprep.subr.bf16.mxu0 %v906
        %949 = vmatpush1.bf16.msra.mxu0 %v905
        %950 = vmatprep.subr.bf16.mxu0 %v908
        %951 = vmatpush1.bf16.msra.mxu0 %v907
        %952 = vmatprep.subr.bf16.mxu0 %v910
        %953 = vmatpush1.bf16.msra.mxu0 %v909
        %954 = vmatprep.subr.bf16.mxu0 %v912
        %955 = vmatpush1.bf16.msra.mxu0 %v911
        %956 = vmatprep.subr.bf16.mxu0 %v914
        %957 = vmatpush1.bf16.msra.mxu0 %v913
        %958 = vmatprep.subr.bf16.mxu0 %v916
        %959 = vmatpush1.bf16.msra.mxu0 %v915
        %960 = vmatprep.subr.bf16.mxu0 %v918
        %961 = vmatpush1.bf16.msra.mxu0 %v917
        %962 = vmatprep.subr.bf16.mxu0 %v920
        %963 = vmatpush1.bf16.msra.mxu0 %v919
        %964 = vmatprep.subr.bf16.mxu0 0
        %965 = vmatpush1.bf16.msra.mxu0 0
        %966 = vmatprep.subr.bf16.mxu0 0
        %967 = vmatpush1.bf16.msra.mxu0 0
        %968 = vmatprep.subr.bf16.mxu0 0
        %969 = vmatpush1.bf16.msra.mxu0 0
        %970 = vmatprep.subr.bf16.mxu0 0
        %971 = vmatpush1.bf16.msra.mxu0 0
        %972 = vmatprep.subr.bf16.mxu0 0
        %973 = vmatpush1.bf16.msra.mxu0 0
        %974 = vmatprep.subr.bf16.mxu0 0
        %975 = vmatpush1.bf16.msra.mxu0 0
        %976 = vmatprep.subr.bf16.mxu0 0
        %977 = vmatpush1.bf16.msra.mxu0 0
        %978 = vmatprep.subr.bf16.mxu0 0
        %979 = vmatpush1.bf16.msra.mxu0 0
        %980 = vmatprep.mubr.bf16.mxu0 0
        %981 = vmatmul.mubr.bf16.gmra.mrb[0].mxu0 %v855
        %v982 = vpop.f32.mrb[0].mxu0
        %v983 = vadd.f32 %v941, %v982
        %v984 = vpop.f32.mrb[0].mxu0
        %v985 = vadd.f32 %v945, %v984
        %v986 = vpop.f32.mrb[0].mxu0
        %v987 = vpop.f32.mrb[0].mxu0
        %988 = vdwg.mxu0
        %v989 = vlaneseq
        %v990 = vshrl.u32 %v989, 7
        %vm991 = vcmp.le.s32.totalorder %v771, %v990
        %v992 = vsel %vm991, 1, 0
        %v993 = vcvt.s32.f32 %v992
        %v994 = vld [vmem:[%s764] sm:$0x1]
        %v996 = vlaneseq
        %v997 = vshrl.u32 %v996, 7
        %v998 = vsub.s32 0, %v997
        %v999 = vrot.slane %v994, %v998
        %v1001 = vmul.f32 %v993, %v999
        %v1002 = vsub.f32 1.0, %v1001
        %v1003 = vmul.f32 %v1002, -1e+09
        %vm1004 = vcmp.ge.s32.totalorder %v771, 0
        %vm1005 = vcmp.lt.s32.totalorder %v771, 8
        %vm1006 = vmand %vm1004, %vm1005
        %v1007 = vsel %vm1006, 1, 0
        %v1008 = vcvt.s32.f32 %v1007
        %vm1009 = vcmp.ge.s32.totalorder %v771, 8
        %vm1010 = vcmp.lt.s32.totalorder %v771, 16
        %vm1011 = vmand %vm1009, %vm1010
        %v1012 = vsel %vm1011, 1, 0
        %v1013 = vcvt.s32.f32 %v1012
        %vm1014 = vcmp.ge.s32.totalorder %v771, 16
        %vm1015 = vcmp.lt.s32.totalorder %v771, 24
        %vm1016 = vmand %vm1014, %vm1015
        %v1017 = vsel %vm1016, 1, 0
        %v1018 = vcvt.s32.f32 %v1017
        %vm1019 = vcmp.ge.s32.totalorder %v771, 24
        %vm1020 = vmand %vm1019, %vm772
        %v1021 = vsel %vm1020, 1, 0
        %v1022 = vcvt.s32.f32 %v1021
        %v1023 = vld [vmem:[%s761] sm:$0xff]
        %v1024 = vld [vmem:[%s5] sm:$0x1]
        %v1025 = vld [vmem:[%s6] sm:$0x1]
        %v1026 = vmul.f32 %v1023, %v774
        %1027 = vadd.xlane.f32.xlu0 %v1026
        %v1028 = vpop.xlane.xlu0 %1027
        %v1029 = vmul.f32 %v1028, 0.03125
        %v1030 = vsub.f32 %v1026, %v1029
        %v1031 = vmul.f32 %v1030, %v774
        %v1032 = vmul.f32 %v1031, %v1031
        %1033 = vadd.xlane.f32.xlu0 %v1032
        %v1034 = vpop.xlane.xlu0 %1033
        %v1035 = vmul.f32 %v1034, 0.03125
        %v1036 = vadd.f32 %v1035, 1e-05
        %v1037 = vrsqrt.pop %v1036
        %v1038 = vmul.f32 %v1031, %v1037
        %v1040 = vlaneseq
        %v1041 = vshrl.u32 %v1040, 7
        %v1042 = vsub.s32 0, %v1041
        %v1043 = vrot.slane %v1024, %v1042
        %v1045 = vmul.f32 %v1038, %v1043
        %v1047 = vlaneseq
        %v1048 = vshrl.u32 %v1047, 7
        %v1049 = vsub.s32 0, %v1048
        %v1050 = vrot.slane %v1025, %v1049
        %v1052 = vadd.f32 %v1045, %v1050
        %v1053 = vld [vmem:[#allocation2] sm:$0xff]
        %v1054 = vld [vmem:[#allocation2 + $0x8] sm:$0xf]
        %v1055 = vld [vmem:[#allocation2 + $0xc] sm:$0xff]
        %v1056 = vld [vmem:[#allocation2 + $0x14] sm:$0xf]
        %v1057 = vld [vmem:[#allocation2 + $0x18] sm:$0xff]
        %v1058 = vld [vmem:[#allocation2 + $0x20] sm:$0xf]
        %v1059 = vld [vmem:[#allocation2 + $0x24] sm:$0xff]
        %v1060 = vld [vmem:[#allocation2 + $0x2c] sm:$0xf]
        %v1061 = vld [vmem:[#allocation2 + $0x30] sm:$0xff]
        %v1062 = vld [vmem:[#allocation2 + $0x38] sm:$0xf]
        %v1063 = vld [vmem:[#allocation2 + $0x3c] sm:$0xff]
        %v1064 = vld [vmem:[#allocation2 + $0x44] sm:$0xf]
        %v1065 = vld [vmem:[#allocation2 + $0x48] sm:$0xff]
        %v1066 = vld [vmem:[#allocation2 + $0x50] sm:$0xf]
        %v1067 = vld [vmem:[#allocation2 + $0x54] sm:$0xff]
        %v1068 = vld [vmem:[#allocation2 + $0x5c] sm:$0xf]
        %v1069 = vld [vmem:[#allocation2 + $0x60] sm:$0xff]
        %v1070 = vld [vmem:[#allocation2 + $0x68] sm:$0xf]
        %v1071 = vld [vmem:[#allocation2 + $0x6c] sm:$0xff]
        %v1072 = vld [vmem:[#allocation2 + $0x74] sm:$0xf]
        %v1073 = vld [vmem:[#allocation2 + $0x78] sm:$0xff]
        %v1074 = vld [vmem:[#allocation2 + $0x80] sm:$0xf]
        %v1075 = vld [vmem:[#allocation2 + $0x84] sm:$0xff]
        %v1076 = vld [vmem:[#allocation2 + $0x8c] sm:$0xf]
        %v1077 = vld [vmem:[#allocation2 + $0x90] sm:$0xff]
        %v1078 = vld [vmem:[#allocation2 + $0x98] sm:$0xf]
        %v1079 = vld [vmem:[#allocation2 + $0x9c] sm:$0xff]
        %v1080 = vld [vmem:[#allocation2 + $0xa4] sm:$0xf]
        %v1081 = vld [vmem:[#allocation2 + $0xa8] sm:$0xff]
        %v1082 = vld [vmem:[#allocation2 + $0xb0] sm:$0xf]
        %v1083 = vld [vmem:[#allocation2 + $0xb4] sm:$0xff]
        %v1084 = vld [vmem:[#allocation2 + $0xbc] sm:$0xf]
        %v1085 = vpack.c.bf16 %v1052, %v1052
        %v1086 = vld [vmem:[%s8] sm:$0x7]
        %v1088 = vlaneseq
        %v1089 = vshrl.u32 %v1088, 7
        %v1090 = vsub.s32 0, %v1089
        %v1091 = vrot.slane %v1086, %v1090
        %v1092 = vlaneseq
        %v1093 = vshrl.u32 %v1092, 7
        %v1094 = vsub.s32 1, %v1093
        %v1095 = vrot.slane %v1086, %v1094
        %v1096 = vlaneseq
        %v1097 = vshrl.u32 %v1096, 7
        %v1098 = vsub.s32 2, %v1097
        %v1099 = vrot.slane %v1086, %v1098
        %v1135 = vunpack.c.l.b16 %v1053
        %v1136 = vunpack.c.h.b16 %v1053
        %v1137 = vunpack.c.l.b16 %v1054
        %v1138 = vunpack.c.l.b16 %v1055
        %v1139 = vunpack.c.h.b16 %v1055
        %v1140 = vunpack.c.l.b16 %v1056
        %v1141 = vunpack.c.l.b16 %v1057
        %v1142 = vunpack.c.h.b16 %v1057
        %v1143 = vunpack.c.l.b16 %v1058
        %v1144 = vunpack.c.l.b16 %v1059
        %v1145 = vunpack.c.h.b16 %v1059
        %v1146 = vunpack.c.l.b16 %v1060
        %v1147 = vunpack.c.l.b16 %v1061
        %v1148 = vunpack.c.h.b16 %v1061
        %v1149 = vunpack.c.l.b16 %v1062
        %v1150 = vunpack.c.l.b16 %v1063
        %v1151 = vunpack.c.h.b16 %v1063
        %v1152 = vunpack.c.l.b16 %v1064
        %v1153 = vunpack.c.l.b16 %v1065
        %v1154 = vunpack.c.h.b16 %v1065
        %v1155 = vunpack.c.l.b16 %v1066
        %v1156 = vunpack.c.l.b16 %v1067
        %v1157 = vunpack.c.h.b16 %v1067
        %v1158 = vunpack.c.l.b16 %v1068
        %v1159 = vunpack.c.l.b16 %v1069
        %v1160 = vunpack.c.h.b16 %v1069
        %v1161 = vunpack.c.l.b16 %v1070
        %v1162 = vunpack.c.l.b16 %v1071
        %v1163 = vunpack.c.h.b16 %v1071
        %v1164 = vunpack.c.l.b16 %v1072
        %v1165 = vunpack.c.l.b16 %v1073
        %v1166 = vunpack.c.h.b16 %v1073
        %v1167 = vunpack.c.l.b16 %v1074
        %v1168 = vunpack.c.l.b16 %v1075
        %v1169 = vunpack.c.h.b16 %v1075
        %v1170 = vunpack.c.l.b16 %v1076
        %v1171 = vunpack.c.l.b16 %v1077
        %v1172 = vunpack.c.h.b16 %v1077
        %v1173 = vunpack.c.l.b16 %v1078
        %v1174 = vunpack.c.l.b16 %v1079
        %v1175 = vunpack.c.h.b16 %v1079
        %v1176 = vunpack.c.l.b16 %v1080
        %v1177 = vunpack.c.l.b16 %v1081
        %v1178 = vunpack.c.h.b16 %v1081
        %v1179 = vunpack.c.l.b16 %v1082
        %v1180 = vunpack.c.l.b16 %v1083
        %v1181 = vunpack.c.h.b16 %v1083
        %v1182 = vunpack.c.l.b16 %v1084
        %v1183 = vpack.c.b16 %v1138, %v1135
        %v1184 = vpack.c.b16 %v1139, %v1136
        %v1185 = vpack.c.b16 %v1140, %v1137
        %v1186 = vpack.c.b16 %v1144, %v1141
        %v1187 = vpack.c.b16 %v1145, %v1142
        %v1188 = vpack.c.b16 %v1146, %v1143
        %v1189 = vpack.c.b16 %v1150, %v1147
        %v1190 = vpack.c.b16 %v1151, %v1148
        %v1191 = vpack.c.b16 %v1152, %v1149
        %v1192 = vpack.c.b16 %v1156, %v1153
        %v1193 = vpack.c.b16 %v1157, %v1154
        %v1194 = vpack.c.b16 %v1158, %v1155
        %v1195 = vpack.c.b16 %v1162, %v1159
        %v1196 = vpack.c.b16 %v1163, %v1160
        %v1197 = vpack.c.b16 %v1164, %v1161
        %v1198 = vpack.c.b16 %v1168, %v1165
        %v1199 = vpack.c.b16 %v1169, %v1166
        %v1200 = vpack.c.b16 %v1170, %v1167
        %v1201 = vpack.c.b16 %v1174, %v1171
        %v1202 = vpack.c.b16 %v1175, %v1172
        %v1203 = vpack.c.b16 %v1176, %v1173
        %v1204 = vpack.c.b16 %v1180, %v1177
        %v1205 = vpack.c.b16 %v1181, %v1178
        %v1206 = vpack.c.b16 %v1182, %v1179
        %1231 = vmatprep.subr.bf16.mxu0 %v1184
        %1232 = vmatpush1.bf16.msra.mxu0 %v1183
        %1233 = vmatprep.subr.bf16.mxu0 %v1187
        %1234 = vmatpush1.bf16.msra.mxu0 %v1186
        %1235 = vmatprep.subr.bf16.mxu0 %v1190
        %1236 = vmatpush1.bf16.msra.mxu0 %v1189
        %1237 = vmatprep.subr.bf16.mxu0 %v1193
        %1238 = vmatpush1.bf16.msra.mxu0 %v1192
        %1239 = vmatprep.subr.bf16.mxu0 %v1196
        %1240 = vmatpush1.bf16.msra.mxu0 %v1195
        %1241 = vmatprep.subr.bf16.mxu0 %v1199
        %1242 = vmatpush1.bf16.msra.mxu0 %v1198
        %1243 = vmatprep.subr.bf16.mxu0 %v1202
        %1244 = vmatpush1.bf16.msra.mxu0 %v1201
        %1245 = vmatprep.subr.bf16.mxu0 %v1205
        %1246 = vmatpush1.bf16.msra.mxu0 %v1204
        %1247 = vmatprep.subr.bf16.mxu0 0
        %1248 = vmatpush1.bf16.msra.mxu0 0
        %1249 = vmatprep.subr.bf16.mxu0 0
        %1250 = vmatpush1.bf16.msra.mxu0 0
        %1251 = vmatprep.subr.bf16.mxu0 0
        %1252 = vmatpush1.bf16.msra.mxu0 0
        %1253 = vmatprep.subr.bf16.mxu0 0
        %1254 = vmatpush1.bf16.msra.mxu0 0
        %1255 = vmatprep.subr.bf16.mxu0 0
        %1256 = vmatpush1.bf16.msra.mxu0 0
        %1257 = vmatprep.subr.bf16.mxu0 0
        %1258 = vmatpush1.bf16.msra.mxu0 0
        %1259 = vmatprep.subr.bf16.mxu0 0
        %1260 = vmatpush1.bf16.msra.mxu0 0
        %1261 = vmatprep.subr.bf16.mxu0 0
        %1262 = vmatpush1.bf16.msra.mxu0 0
        %1263 = vmatprep.mubr.bf16.mxu0 0
        %1264 = vmatmul.mubr.bf16.gmra.mrb[0].mxu0 %v1085
        %v1265 = vpop.f32.mrb[0].mxu0
        %v1266 = vadd.f32 %v1091, %v1265
        %v1267 = vpop.f32.mrb[0].mxu0
        %v1268 = vadd.f32 %v1095, %v1267
        %v1269 = vpop.f32.mrb[0].mxu0
        %v1270 = vpop.f32.mrb[0].mxu0
        %1271 = vdwg.mxu0
        %1272 = vmatprep.subr.bf16.mxu0 0
        %1273 = vmatpush1.bf16.msra.mxu0 %v1185
        %1274 = vmatprep.subr.bf16.mxu0 0
        %1275 = vmatpush1.bf16.msra.mxu0 %v1188
        %1276 = vmatprep.subr.bf16.mxu0 0
        %1277 = vmatpush1.bf16.msra.mxu0 %v1191
        %1278 = vmatprep.subr.bf16.mxu0 0
        %1279 = vmatpush1.bf16.msra.mxu0 %v1194
        %1280 = vmatprep.subr.bf16.mxu0 0
        %1281 = vmatpush1.bf16.msra.mxu0 %v1197
        %1282 = vmatprep.subr.bf16.mxu0 0
        %1283 = vmatpush1.bf16.msra.mxu0 %v1200
        %1284 = vmatprep.subr.bf16.mxu0 0
        %1285 = vmatpush1.bf16.msra.mxu0 %v1203
        %1286 = vmatprep.subr.bf16.mxu0 0
        %1287 = vmatpush1.bf16.msra.mxu0 %v1206
        %1288 = vmatprep.subr.bf16.mxu0 0
        %1289 = vmatpush1.bf16.msra.mxu0 0
        %1290 = vmatprep.subr.bf16.mxu0 0
        %1291 = vmatpush1.bf16.msra.mxu0 0
        %1292 = vmatprep.subr.bf16.mxu0 0
        %1293 = vmatpush1.bf16.msra.mxu0 0
        %1294 = vmatprep.subr.bf16.mxu0 0
        %1295 = vmatpush1.bf16.msra.mxu0 0
        %1296 = vmatprep.subr.bf16.mxu0 0
        %1297 = vmatpush1.bf16.msra.mxu0 0
        %1298 = vmatprep.subr.bf16.mxu0 0
        %1299 = vmatpush1.bf16.msra.mxu0 0
        %1300 = vmatprep.subr.bf16.mxu0 0
        %1301 = vmatpush1.bf16.msra.mxu0 0
        %1302 = vmatprep.subr.bf16.mxu0 0
        %1303 = vmatpush1.bf16.msra.mxu0 0
        %1304 = vmatprep.mubr.bf16.mxu0 0
        %1305 = vmatmul.mubr.bf16.gmra.mrb[0].mxu0 %v1085
        %v1306 = vpop.f32.mrb[0].mxu0
        %v1307 = vadd.f32 %v1099, %v1306
        %v1308 = vpop.f32.mrb[0].mxu0
        %v1309 = vpop.f32.mrb[0].mxu0
        %v1310 = vpop.f32.mrb[0].mxu0
        %1311 = vdwg.mxu0
        %vm1312 = vcmask 64512
        %v1314 = vsel %vm1312, %v1266, 0
        %v1317 = vsel %vm1312, %v1268, 0
        %1319 = vmatprep.subr.mxu0 0.0
        %1320 = vmatpush1.xpose.msra.mxu0 %v1317
        %1321 = vmatprep.subr.mxu0 0.0
        %1322 = vmatpush1.xpose.msra.mxu0 0.0
        %1323 = vmatprep.subr.mxu0 0.0
        %1324 = vmatpush1.xpose.msra.mxu0 0.0
        %1325 = vmatprep.subr.mxu0 0.0
        %1326 = vmatpush1.xpose.msra.mxu0 0.0
        %1327 = vmatprep.subr.mxu0 0.0
        %1328 = vmatpush1.xpose.msra.mxu0 0.0
        %1329 = vmatprep.subr.mxu0 0.0
        %1330 = vmatpush1.xpose.msra.mxu0 0.0
        %1331 = vmatprep.subr.mxu0 0.0
        %1332 = vmatpush1.xpose.msra.mxu0 0.0
        %1333 = vmatprep.subr.mxu0 0.0
        %1334 = vmatpush1.xpose.msra.mxu0 0.0
        %1335 = vmatprep.subr.mxu0 0.0
        %1336 = vmatpush1.xpose.msra.mxu0 0.0
        %1337 = vmatprep.subr.mxu0 0.0
        %1338 = vmatpush1.xpose.msra.mxu0 0.0
        %1339 = vmatprep.subr.mxu0 0.0
        %1340 = vmatpush1.xpose.msra.mxu0 0.0
        %1341 = vmatprep.subr.mxu0 0.0
        %1342 = vmatpush1.xpose.msra.mxu0 0.0
        %1343 = vmatprep.subr.mxu0 0.0
        %1344 = vmatpush1.xpose.msra.mxu0 0.0
        %1345 = vmatprep.subr.mxu0 0.0
        %1346 = vmatpush1.xpose.msra.mxu0 0.0
        %1347 = vmatprep.subr.mxu0 0.0
        %1348 = vmatpush1.xpose.msra.mxu0 0.0
        %1349 = vmatprep.subr.mxu0 0.0
        %1350 = vmatpush1.xpose.msra.mxu0 0.0
        %1351 = vmatprep.subr.mxu0 0.0
        %1352 = vmatpush1.xpose.msra.mxu0 0.0
        %1353 = vmatprep.subr.mxu0 0.0
        %1354 = vmatpush1.xpose.msra.mxu0 0.0
        %1355 = vmatprep.subr.mxu0 0.0
        %1356 = vmatpush1.xpose.msra.mxu0 0.0
        %1357 = vmatprep.subr.mxu0 0.0
        %1358 = vmatpush1.xpose.msra.mxu0 0.0
        %1359 = vmatprep.subr.mxu0 0.0
        %1360 = vmatpush1.xpose.msra.mxu0 0.0
        %1361 = vmatprep.subr.mxu0 0.0
        %1362 = vmatpush1.xpose.msra.mxu0 0.0
        %1363 = vmatprep.subr.mxu0 0.0
        %1364 = vmatpush1.xpose.msra.mxu0 0.0
        %1365 = vmatprep.subr.mxu0 0.0
        %1366 = vmatpush1.xpose.msra.mxu0 0.0
        %1367 = vmatprep.subr.mxu0 0.0
        %1368 = vmatpush1.xpose.msra.mxu0 0.0
        %1369 = vmatprep.subr.mxu0 0.0
        %1370 = vmatpush1.xpose.msra.mxu0 0.0
        %1371 = vmatprep.subr.mxu0 0.0
        %1372 = vmatpush1.xpose.msra.mxu0 0.0
        %1373 = vmatprep.subr.mxu0 0.0
        %1374 = vmatpush1.xpose.msra.mxu0 0.0
        %1375 = vmatprep.subr.mxu0 0.0
        %1376 = vmatpush1.xpose.msra.mxu0 0.0
        %1377 = vmatprep.subr.mxu0 0.0
        %1378 = vmatpush1.xpose.msra.mxu0 0.0
        %1379 = vmatprep.subr.mxu0 0.0
        %1380 = vmatpush1.xpose.msra.mxu0 0.0
        %1381 = vmatprep.subr.mxu0 0.0
        %1382 = vmatpush1.xpose.msra.mxu0 0.0
        %1383 = vmatprep.mubr.f32.mxu0 0.0
        %1384 = vmatmul.mubr.f32.gmra.mrb[0].mxu0 %v1314
        %v1385 = vpop.f32.mrb[0].mxu0
        %v1386 = vadd.f32 0.0, %v1385
        %v1387 = vpop.f32.mrb[0].mxu0
        %1388 = vdwg.mxu0
        %v1389 = vmul.f32 %v1386, 0.35355338
        %v1390 = vadd.f32 %v1389, %v1003
        %v1391 = vsel %vm1312, %v1390, -inf
        %1392 = vmax.xlane.f32.xlu0 %v1391
        %v1393 = vpop.xlane.xlu0 %1392
        %v1394 = vsub.f32 %v1390, %v1393
        %v1395 = vmul.f32 %v1394, 1.442695
        %v1396 = vpow.pop %v1395
        %v1397 = vsel %vm1312, %v1396, 0.0
        %1398 = vadd.xlane.f32.xlu0 %v1397
        %v1399 = vpop.xlane.xlu0 %1398
        %v1400 = vrcp.pop %v1399
        %v1401 = vmul.f32 %v1396, %v1400
        %v1403 = vsel %vm1312, %v1401, 0
        %1405 = vmatprep.subr.mxu0 0.0
        %1406 = vmatpush1.msra.mxu0 %v1307
        %1407 = vmatprep.subr.mxu0 0.0
        %1408 = vmatpush1.msra.mxu0 0.0
        %1409 = vmatprep.subr.mxu0 0.0
        %1410 = vmatpush1.msra.mxu0 0.0
        %1411 = vmatprep.subr.mxu0 0.0
        %1412 = vmatpush1.msra.mxu0 0.0
        %1413 = vmatprep.subr.mxu0 0.0
        %1414 = vmatpush1.msra.mxu0 0.0
        %1415 = vmatprep.subr.mxu0 0.0
        %1416 = vmatpush1.msra.mxu0 0.0
        %1417 = vmatprep.subr.mxu0 0.0
        %1418 = vmatpush1.msra.mxu0 0.0
        %1419 = vmatprep.subr.mxu0 0.0
        %1420 = vmatpush1.msra.mxu0 0.0
        %1421 = vmatprep.subr.mxu0 0.0
        %1422 = vmatpush1.msra.mxu0 0.0
        %1423 = vmatprep.subr.mxu0 0.0
        %1424 = vmatpush1.msra.mxu0 0.0
        %1425 = vmatprep.subr.mxu0 0.0
        %1426 = vmatpush1.msra.mxu0 0.0
        %1427 = vmatprep.subr.mxu0 0.0
        %1428 = vmatpush1.msra.mxu0 0.0
        %1429 = vmatprep.subr.mxu0 0.0
        %1430 = vmatpush1.msra.mxu0 0.0
        %1431 = vmatprep.subr.mxu0 0.0
        %1432 = vmatpush1.msra.mxu0 0.0
        %1433 = vmatprep.subr.mxu0 0.0
        %1434 = vmatpush1.msra.mxu0 0.0
        %1435 = vmatprep.subr.mxu0 0.0
        %1436 = vmatpush1.msra.mxu0 0.0
        %1437 = vmatprep.subr.mxu0 0.0
        %1438 = vmatpush1.msra.mxu0 0.0
        %1439 = vmatprep.subr.mxu0 0.0
        %1440 = vmatpush1.msra.mxu0 0.0
        %1441 = vmatprep.subr.mxu0 0.0
        %1442 = vmatpush1.msra.mxu0 0.0
        %1443 = vmatprep.subr.mxu0 0.0
        %1444 = vmatpush1.msra.mxu0 0.0
        %1445 = vmatprep.subr.mxu0 0.0
        %1446 = vmatpush1.msra.mxu0 0.0
        %1447 = vmatprep.subr.mxu0 0.0
        %1448 = vmatpush1.msra.mxu0 0.0
        %1449 = vmatprep.subr.mxu0 0.0
        %1450 = vmatpush1.msra.mxu0 0.0
        %1451 = vmatprep.subr.mxu0 0.0
        %1452 = vmatpush1.msra.mxu0 0.0
        %1453 = vmatprep.subr.mxu0 0.0
        %1454 = vmatpush1.msra.mxu0 0.0
        %1455 = vmatprep.subr.mxu0 0.0
        %1456 = vmatpush1.msra.mxu0 0.0
        %1457 = vmatprep.subr.mxu0 0.0
        %1458 = vmatpush1.msra.mxu0 0.0
        %1459 = vmatprep.subr.mxu0 0.0
        %1460 = vmatpush1.msra.mxu0 0.0
        %1461 = vmatprep.subr.mxu0 0.0
        %1462 = vmatpush1.msra.mxu0 0.0
        %1463 = vmatprep.subr.mxu0 0.0
        %1464 = vmatpush1.msra.mxu0 0.0
        %1465 = vmatprep.subr.mxu0 0.0
        %1466 = vmatpush1.msra.mxu0 0.0
        %1467 = vmatprep.subr.mxu0 0.0
        %1468 = vmatpush1.msra.mxu0 0.0
        %1469 = vmatprep.mubr.f32.mxu0 0.0
        %1470 = vmatmul.mubr.f32.gmra.mrb[0].mxu0 %v1403
        %v1471 = vpop.f32.mrb[0].mxu0
        %v1472 = vadd.f32 0.0, %v1471
        %v1473 = vpop.f32.mrb[0].mxu0
        %1474 = vdwg.mxu0
        %v1475 = vmul.f32 %v1472, %v1008
        %1476 = vrot.lane.b32.xlu0 %v1266, 120
        %v1477 = vpop.permute.xlu0 %1476
        %1478 = vrot.lane.b32.xlu0 %v1268, 120
        %v1479 = vpop.permute.xlu0 %1478
        %v1480 = vsel %vm1312, %v1477, 0
        %v1482 = vsel %vm1312, %v1479, 0
        %1484 = vmatprep.subr.mxu0 0.0
        %1485 = vmatpush1.xpose.msra.mxu0 %v1482
        %1486 = vmatprep.subr.mxu0 0.0
        %1487 = vmatpush1.xpose.msra.mxu0 0.0
        %1488 = vmatprep.subr.mxu0 0.0
        %1489 = vmatpush1.xpose.msra.mxu0 0.0
        %1490 = vmatprep.subr.mxu0 0.0
        %1491 = vmatpush1.xpose.msra.mxu0 0.0
        %1492 = vmatprep.subr.mxu0 0.0
        %1493 = vmatpush1.xpose.msra.mxu0 0.0
        %1494 = vmatprep.subr.mxu0 0.0
        %1495 = vmatpush1.xpose.msra.mxu0 0.0
        %1496 = vmatprep.subr.mxu0 0.0
        %1497 = vmatpush1.xpose.msra.mxu0 0.0
        %1498 = vmatprep.subr.mxu0 0.0
        %1499 = vmatpush1.xpose.msra.mxu0 0.0
        %1500 = vmatprep.subr.mxu0 0.0
        %1501 = vmatpush1.xpose.msra.mxu0 0.0
        %1502 = vmatprep.subr.mxu0 0.0
        %1503 = vmatpush1.xpose.msra.mxu0 0.0
        %1504 = vmatprep.subr.mxu0 0.0
        %1505 = vmatpush1.xpose.msra.mxu0 0.0
        %1506 = vmatprep.subr.mxu0 0.0
        %1507 = vmatpush1.xpose.msra.mxu0 0.0
        %1508 = vmatprep.subr.mxu0 0.0
        %1509 = vmatpush1.xpose.msra.mxu0 0.0
        %1510 = vmatprep.subr.mxu0 0.0
        %1511 = vmatpush1.xpose.msra.mxu0 0.0
        %1512 = vmatprep.subr.mxu0 0.0
        %1513 = vmatpush1.xpose.msra.mxu0 0.0
        %1514 = vmatprep.subr.mxu0 0.0
        %1515 = vmatpush1.xpose.msra.mxu0 0.0
        %1516 = vmatprep.subr.mxu0 0.0
        %1517 = vmatpush1.xpose.msra.mxu0 0.0
        %1518 = vmatprep.subr.mxu0 0.0
        %1519 = vmatpush1.xpose.msra.mxu0 0.0
        %1520 = vmatprep.subr.mxu0 0.0
        %1521 = vmatpush1.xpose.msra.mxu0 0.0
        %1522 = vmatprep.subr.mxu0 0.0
        %1523 = vmatpush1.xpose.msra.mxu0 0.0
        %1524 = vmatprep.subr.mxu0 0.0
        %1525 = vmatpush1.xpose.msra.mxu0 0.0
        %1526 = vmatprep.subr.mxu0 0.0
        %1527 = vmatpush1.xpose.msra.mxu0 0.0
        %1528 = vmatprep.subr.mxu0 0.0
        %1529 = vmatpush1.xpose.msra.mxu0 0.0
        %1530 = vmatprep.subr.mxu0 0.0
        %1531 = vmatpush1.xpose.msra.mxu0 0.0
        %1532 = vmatprep.subr.mxu0 0.0
        %1533 = vmatpush1.xpose.msra.mxu0 0.0
        %1534 = vmatprep.subr.mxu0 0.0
        %1535 = vmatpush1.xpose.msra.mxu0 0.0
        %1536 = vmatprep.subr.mxu0 0.0
        %1537 = vmatpush1.xpose.msra.mxu0 0.0
        %1538 = vmatprep.subr.mxu0 0.0
        %1539 = vmatpush1.xpose.msra.mxu0 0.0
        %1540 = vmatprep.subr.mxu0 0.0
        %1541 = vmatpush1.xpose.msra.mxu0 0.0
        %1542 = vmatprep.subr.mxu0 0.0
        %1543 = vmatpush1.xpose.msra.mxu0 0.0
        %1544 = vmatprep.subr.mxu0 0.0
        %1545 = vmatpush1.xpose.msra.mxu0 0.0
        %1546 = vmatprep.subr.mxu0 0.0
        %1547 = vmatpush1.xpose.msra.mxu0 0.0
        %1548 = vmatprep.mubr.f32.mxu0 0.0
        %1549 = vmatmul.mubr.f32.gmra.mrb[0].mxu0 %v1480
        %v1550 = vpop.f32.mrb[0].mxu0
        %v1551 = vadd.f32 0.0, %v1550
        %v1552 = vpop.f32.mrb[0].mxu0
        %1553 = vdwg.mxu0
        %v1554 = vmul.f32 %v1551, 0.35355338
        %v1555 = vadd.f32 %v1554, %v1003
        %v1556 = vsel %vm1312, %v1555, -inf
        %1557 = vmax.xlane.f32.xlu0 %v1556
        %v1558 = vpop.xlane.xlu0 %1557
        %v1559 = vsub.f32 %v1555, %v1558
        %v1560 = vmul.f32 %v1559, 1.442695
        %v1561 = vpow.pop %v1560
        %v1562 = vsel %vm1312, %v1561, 0.0
        %1563 = vadd.xlane.f32.xlu0 %v1562
        %v1564 = vpop.xlane.xlu0 %1563
        %v1565 = vrcp.pop %v1564
        %v1566 = vmul.f32 %v1561, %v1565
        %v1568 = vsel %vm1312, %v1566, 0
        %1570 = vmatprep.subr.mxu0 0.0
        %1571 = vmatpush1.msra.mxu0 %v1307
        %1572 = vmatprep.subr.mxu0 0.0
        %1573 = vmatpush1.msra.mxu0 0.0
        %1574 = vmatprep.subr.mxu0 0.0
        %1575 = vmatpush1.msra.mxu0 0.0
        %1576 = vmatprep.subr.mxu0 0.0
        %1577 = vmatpush1.msra.mxu0 0.0
        %1578 = vmatprep.subr.mxu0 0.0
        %1579 = vmatpush1.msra.mxu0 0.0
        %1580 = vmatprep.subr.mxu0 0.0
        %1581 = vmatpush1.msra.mxu0 0.0
        %1582 = vmatprep.subr.mxu0 0.0
        %1583 = vmatpush1.msra.mxu0 0.0
        %1584 = vmatprep.subr.mxu0 0.0
        %1585 = vmatpush1.msra.mxu0 0.0
        %1586 = vmatprep.subr.mxu0 0.0
        %1587 = vmatpush1.msra.mxu0 0.0
        %1588 = vmatprep.subr.mxu0 0.0
        %1589 = vmatpush1.msra.mxu0 0.0
        %1590 = vmatprep.subr.mxu0 0.0
        %1591 = vmatpush1.msra.mxu0 0.0
        %1592 = vmatprep.subr.mxu0 0.0
        %1593 = vmatpush1.msra.mxu0 0.0
        %1594 = vmatprep.subr.mxu0 0.0
        %1595 = vmatpush1.msra.mxu0 0.0
        %1596 = vmatprep.subr.mxu0 0.0
        %1597 = vmatpush1.msra.mxu0 0.0
        %1598 = vmatprep.subr.mxu0 0.0
        %1599 = vmatpush1.msra.mxu0 0.0
        %1600 = vmatprep.subr.mxu0 0.0
        %1601 = vmatpush1.msra.mxu0 0.0
        %1602 = vmatprep.subr.mxu0 0.0
        %1603 = vmatpush1.msra.mxu0 0.0
        %1604 = vmatprep.subr.mxu0 0.0
        %1605 = vmatpush1.msra.mxu0 0.0
        %1606 = vmatprep.subr.mxu0 0.0
        %1607 = vmatpush1.msra.mxu0 0.0
        %1608 = vmatprep.subr.mxu0 0.0
        %1609 = vmatpush1.msra.mxu0 0.0
        %1610 = vmatprep.subr.mxu0 0.0
        %1611 = vmatpush1.msra.mxu0 0.0
        %1612 = vmatprep.subr.mxu0 0.0
        %1613 = vmatpush1.msra.mxu0 0.0
        %1614 = vmatprep.subr.mxu0 0.0
        %1615 = vmatpush1.msra.mxu0 0.0
        %1616 = vmatprep.subr.mxu0 0.0
        %1617 = vmatpush1.msra.mxu0 0.0
        %1618 = vmatprep.subr.mxu0 0.0
        %1619 = vmatpush1.msra.mxu0 0.0
        %1620 = vmatprep.subr.mxu0 0.0
        %1621 = vmatpush1.msra.mxu0 0.0
        %1622 = vmatprep.subr.mxu0 0.0
        %1623 = vmatpush1.msra.mxu0 0.0
        %1624 = vmatprep.subr.mxu0 0.0
        %1625 = vmatpush1.msra.mxu0 0.0
        %1626 = vmatprep.subr.mxu0 0.0
        %1627 = vmatpush1.msra.mxu0 0.0
        %1628 = vmatprep.subr.mxu0 0.0
        %1629 = vmatpush1.msra.mxu0 0.0
        %1630 = vmatprep.subr.mxu0 0.0
        %1631 = vmatpush1.msra.mxu0 0.0
        %1632 = vmatprep.subr.mxu0 0.0
        %1633 = vmatpush1.msra.mxu0 0.0
        %1634 = vmatprep.mubr.f32.mxu0 0.0
        %1635 = vmatmul.mubr.f32.gmra.mrb[0].mxu0 %v1568
        %v1636 = vpop.f32.mrb[0].mxu0
        %v1637 = vadd.f32 0.0, %v1636
        %v1638 = vpop.f32.mrb[0].mxu0
        %1639 = vdwg.mxu0
        %v1640 = vmul.f32 %v1637, %v1013
        %v1641 = vadd.f32 %v1475, %v1640
        %1642 = vrot.lane.b32.xlu0 %v1266, 112
        %v1643 = vpop.permute.xlu0 %1642
        %1644 = vrot.lane.b32.xlu0 %v1268, 112
        %v1645 = vpop.permute.xlu0 %1644
        %v1646 = vsel %vm1312, %v1643, 0
        %v1648 = vsel %vm1312, %v1645, 0
        %1650 = vmatprep.subr.mxu0 0.0
        %1651 = vmatpush1.xpose.msra.mxu0 %v1648
        %1652 = vmatprep.subr.mxu0 0.0
        %1653 = vmatpush1.xpose.msra.mxu0 0.0
        %1654 = vmatprep.subr.mxu0 0.0
        %1655 = vmatpush1.xpose.msra.mxu0 0.0
        %1656 = vmatprep.subr.mxu0 0.0
        %1657 = vmatpush1.xpose.msra.mxu0 0.0
        %1658 = vmatprep.subr.mxu0 0.0
        %1659 = vmatpush1.xpose.msra.mxu0 0.0
        %1660 = vmatprep.subr.mxu0 0.0
        %1661 = vmatpush1.xpose.msra.mxu0 0.0
        %1662 = vmatprep.subr.mxu0 0.0
        %1663 = vmatpush1.xpose.msra.mxu0 0.0
        %1664 = vmatprep.subr.mxu0 0.0
        %1665 = vmatpush1.xpose.msra.mxu0 0.0
        %1666 = vmatprep.subr.mxu0 0.0
        %1667 = vmatpush1.xpose.msra.mxu0 0.0
        %1668 = vmatprep.subr.mxu0 0.0
        %1669 = vmatpush1.xpose.msra.mxu0 0.0
        %1670 = vmatprep.subr.mxu0 0.0
        %1671 = vmatpush1.xpose.msra.mxu0 0.0
        %1672 = vmatprep.subr.mxu0 0.0
        %1673 = vmatpush1.xpose.msra.mxu0 0.0
        %1674 = vmatprep.subr.mxu0 0.0
        %1675 = vmatpush1.xpose.msra.mxu0 0.0
        %1676 = vmatprep.subr.mxu0 0.0
        %1677 = vmatpush1.xpose.msra.mxu0 0.0
        %1678 = vmatprep.subr.mxu0 0.0
        %1679 = vmatpush1.xpose.msra.mxu0 0.0
        %1680 = vmatprep.subr.mxu0 0.0
        %1681 = vmatpush1.xpose.msra.mxu0 0.0
        %1682 = vmatprep.subr.mxu0 0.0
        %1683 = vmatpush1.xpose.msra.mxu0 0.0
        %1684 = vmatprep.subr.mxu0 0.0
        %1685 = vmatpush1.xpose.msra.mxu0 0.0
        %1686 = vmatprep.subr.mxu0 0.0
        %1687 = vmatpush1.xpose.msra.mxu0 0.0
        %1688 = vmatprep.subr.mxu0 0.0
        %1689 = vmatpush1.xpose.msra.mxu0 0.0
        %1690 = vmatprep.subr.mxu0 0.0
        %1691 = vmatpush1.xpose.msra.mxu0 0.0
        %1692 = vmatprep.subr.mxu0 0.0
        %1693 = vmatpush1.xpose.msra.mxu0 0.0
        %1694 = vmatprep.subr.mxu0 0.0
        %1695 = vmatpush1.xpose.msra.mxu0 0.0
        %1696 = vmatprep.subr.mxu0 0.0
        %1697 = vmatpush1.xpose.msra.mxu0 0.0
        %1698 = vmatprep.subr.mxu0 0.0
        %1699 = vmatpush1.xpose.msra.mxu0 0.0
        %1700 = vmatprep.subr.mxu0 0.0
        %1701 = vmatpush1.xpose.msra.mxu0 0.0
        %1702 = vmatprep.subr.mxu0 0.0
        %1703 = vmatpush1.xpose.msra.mxu0 0.0
        %1704 = vmatprep.subr.mxu0 0.0
        %1705 = vmatpush1.xpose.msra.mxu0 0.0
        %1706 = vmatprep.subr.mxu0 0.0
        %1707 = vmatpush1.xpose.msra.mxu0 0.0
        %1708 = vmatprep.subr.mxu0 0.0
        %1709 = vmatpush1.xpose.msra.mxu0 0.0
        %1710 = vmatprep.subr.mxu0 0.0
        %1711 = vmatpush1.xpose.msra.mxu0 0.0
        %1712 = vmatprep.subr.mxu0 0.0
        %1713 = vmatpush1.xpose.msra.mxu0 0.0
        %1714 = vmatprep.mubr.f32.mxu0 0.0
        %1715 = vmatmul.mubr.f32.gmra.mrb[0].mxu0 %v1646
        %v1716 = vpop.f32.mrb[0].mxu0
        %v1717 = vadd.f32 0.0, %v1716
        %v1718 = vpop.f32.mrb[0].mxu0
        %1719 = vdwg.mxu0
        %v1720 = vmul.f32 %v1717, 0.35355338
        %v1721 = vadd.f32 %v1720, %v1003
        %v1722 = vsel %vm1312, %v1721, -inf
        %1723 = vmax.xlane.f32.xlu0 %v1722
        %v1724 = vpop.xlane.xlu0 %1723
        %v1725 = vsub.f32 %v1721, %v1724
        %v1726 = vmul.f32 %v1725, 1.442695
        %v1727 = vpow.pop %v1726
        %v1728 = vsel %vm1312, %v1727, 0.0
        %1729 = vadd.xlane.f32.xlu0 %v1728
        %v1730 = vpop.xlane.xlu0 %1729
        %v1731 = vrcp.pop %v1730
        %v1732 = vmul.f32 %v1727, %v1731
        %v1734 = vsel %vm1312, %v1732, 0
        %1736 = vmatprep.subr.mxu0 0.0
        %1737 = vmatpush1.msra.mxu0 %v1307
        %1738 = vmatprep.subr.mxu0 0.0
        %1739 = vmatpush1.msra.mxu0 0.0
        %1740 = vmatprep.subr.mxu0 0.0
        %1741 = vmatpush1.msra.mxu0 0.0
        %1742 = vmatprep.subr.mxu0 0.0
        %1743 = vmatpush1.msra.mxu0 0.0
        %1744 = vmatprep.subr.mxu0 0.0
        %1745 = vmatpush1.msra.mxu0 0.0
        %1746 = vmatprep.subr.mxu0 0.0
        %1747 = vmatpush1.msra.mxu0 0.0
        %1748 = vmatprep.subr.mxu0 0.0
        %1749 = vmatpush1.msra.mxu0 0.0
        %1750 = vmatprep.subr.mxu0 0.0
        %1751 = vmatpush1.msra.mxu0 0.0
        %1752 = vmatprep.subr.mxu0 0.0
        %1753 = vmatpush1.msra.mxu0 0.0
        %1754 = vmatprep.subr.mxu0 0.0
        %1755 = vmatpush1.msra.mxu0 0.0
        %1756 = vmatprep.subr.mxu0 0.0
        %1757 = vmatpush1.msra.mxu0 0.0
        %1758 = vmatprep.subr.mxu0 0.0
        %1759 = vmatpush1.msra.mxu0 0.0
        %1760 = vmatprep.subr.mxu0 0.0
        %1761 = vmatpush1.msra.mxu0 0.0
        %1762 = vmatprep.subr.mxu0 0.0
        %1763 = vmatpush1.msra.mxu0 0.0
        %1764 = vmatprep.subr.mxu0 0.0
        %1765 = vmatpush1.msra.mxu0 0.0
        %1766 = vmatprep.subr.mxu0 0.0
        %1767 = vmatpush1.msra.mxu0 0.0
        %1768 = vmatprep.subr.mxu0 0.0
        %1769 = vmatpush1.msra.mxu0 0.0
        %1770 = vmatprep.subr.mxu0 0.0
        %1771 = vmatpush1.msra.mxu0 0.0
        %1772 = vmatprep.subr.mxu0 0.0
        %1773 = vmatpush1.msra.mxu0 0.0
        %1774 = vmatprep.subr.mxu0 0.0
        %1775 = vmatpush1.msra.mxu0 0.0
        %1776 = vmatprep.subr.mxu0 0.0
        %1777 = vmatpush1.msra.mxu0 0.0
        %1778 = vmatprep.subr.mxu0 0.0
        %1779 = vmatpush1.msra.mxu0 0.0
        %1780 = vmatprep.subr.mxu0 0.0
        %1781 = vmatpush1.msra.mxu0 0.0
        %1782 = vmatprep.subr.mxu0 0.0
        %1783 = vmatpush1.msra.mxu0 0.0
        %1784 = vmatprep.subr.mxu0 0.0
        %1785 = vmatpush1.msra.mxu0 0.0
        %1786 = vmatprep.subr.mxu0 0.0
        %1787 = vmatpush1.msra.mxu0 0.0
        %1788 = vmatprep.subr.mxu0 0.0
        %1789 = vmatpush1.msra.mxu0 0.0
        %1790 = vmatprep.subr.mxu0 0.0
        %1791 = vmatpush1.msra.mxu0 0.0
        %1792 = vmatprep.subr.mxu0 0.0
        %1793 = vmatpush1.msra.mxu0 0.0
        %1794 = vmatprep.subr.mxu0 0.0
        %1795 = vmatpush1.msra.mxu0 0.0
        %1796 = vmatprep.subr.mxu0 0.0
        %1797 = vmatpush1.msra.mxu0 0.0
        %1798 = vmatprep.subr.mxu0 0.0
        %1799 = vmatpush1.msra.mxu0 0.0
        %1800 = vmatprep.mubr.f32.mxu0 0.0
        %1801 = vmatmul.mubr.f32.gmra.mrb[0].mxu0 %v1734
        %v1802 = vpop.f32.mrb[0].mxu0
        %v1803 = vadd.f32 0.0, %v1802
        %v1804 = vpop.f32.mrb[0].mxu0
        %1805 = vdwg.mxu0
        %v1806 = vmul.f32 %v1803, %v1018
        %v1807 = vadd.f32 %v1641, %v1806
        %1808 = vrot.lane.b32.xlu0 %v1266, 104
        %v1809 = vpop.permute.xlu0 %1808
        %1810 = vrot.lane.b32.xlu0 %v1268, 104
        %v1811 = vpop.permute.xlu0 %1810
        %v1812 = vsel %vm1312, %v1809, 0
        %v1814 = vsel %vm1312, %v1811, 0
        %1816 = vmatprep.subr.mxu0 0.0
        %1817 = vmatpush1.xpose.msra.mxu0 %v1814
        %1818 = vmatprep.subr.mxu0 0.0
        %1819 = vmatpush1.xpose.msra.mxu0 0.0
        %1820 = vmatprep.subr.mxu0 0.0
        %1821 = vmatpush1.xpose.msra.mxu0 0.0
        %1822 = vmatprep.subr.mxu0 0.0
        %1823 = vmatpush1.xpose.msra.mxu0 0.0
        %1824 = vmatprep.subr.mxu0 0.0
        %1825 = vmatpush1.xpose.msra.mxu0 0.0
        %1826 = vmatprep.subr.mxu0 0.0
        %1827 = vmatpush1.xpose.msra.mxu0 0.0
        %1828 = vmatprep.subr.mxu0 0.0
        %1829 = vmatpush1.xpose.msra.mxu0 0.0
        %1830 = vmatprep.subr.mxu0 0.0
        %1831 = vmatpush1.xpose.msra.mxu0 0.0
        %1832 = vmatprep.subr.mxu0 0.0
        %1833 = vmatpush1.xpose.msra.mxu0 0.0
        %1834 = vmatprep.subr.mxu0 0.0
        %1835 = vmatpush1.xpose.msra.mxu0 0.0
        %1836 = vmatprep.subr.mxu0 0.0
        %1837 = vmatpush1.xpose.msra.mxu0 0.0
        %1838 = vmatprep.subr.mxu0 0.0
        %1839 = vmatpush1.xpose.msra.mxu0 0.0
        %1840 = vmatprep.subr.mxu0 0.0
        %1841 = vmatpush1.xpose.msra.mxu0 0.0
        %1842 = vmatprep.subr.mxu0 0.0
        %1843 = vmatpush1.xpose.msra.mxu0 0.0
        %1844 = vmatprep.subr.mxu0 0.0
        %1845 = vmatpush1.xpose.msra.mxu0 0.0
        %1846 = vmatprep.subr.mxu0 0.0
        %1847 = vmatpush1.xpose.msra.mxu0 0.0
        %1848 = vmatprep.subr.mxu0 0.0
        %1849 = vmatpush1.xpose.msra.mxu0 0.0
        %1850 = vmatprep.subr.mxu0 0.0
        %1851 = vmatpush1.xpose.msra.mxu0 0.0
        %1852 = vmatprep.subr.mxu0 0.0
        %1853 = vmatpush1.xpose.msra.mxu0 0.0
        %1854 = vmatprep.subr.mxu0 0.0
        %1855 = vmatpush1.xpose.msra.mxu0 0.0
        %1856 = vmatprep.subr.mxu0 0.0
        %1857 = vmatpush1.xpose.msra.mxu0 0.0
        %1858 = vmatprep.subr.mxu0 0.0
        %1859 = vmatpush1.xpose.msra.mxu0 0.0
        %1860 = vmatprep.subr.mxu0 0.0
        %1861 = vmatpush1.xpose.msra.mxu0 0.0
        %1862 = vmatprep.subr.mxu0 0.0
        %1863 = vmatpush1.xpose.msra.mxu0 0.0
        %1864 = vmatprep.subr.mxu0 0.0
        %1865 = vmatpush1.xpose.msra.mxu0 0.0
        %1866 = vmatprep.subr.mxu0 0.0
        %1867 = vmatpush1.xpose.msra.mxu0 0.0
        %1868 = vmatprep.subr.mxu0 0.0
        %1869 = vmatpush1.xpose.msra.mxu0 0.0
        %1870 = vmatprep.subr.mxu0 0.0
        %1871 = vmatpush1.xpose.msra.mxu0 0.0
        %1872 = vmatprep.subr.mxu0 0.0
        %1873 = vmatpush1.xpose.msra.mxu0 0.0
        %1874 = vmatprep.subr.mxu0 0.0
        %1875 = vmatpush1.xpose.msra.mxu0 0.0
        %1876 = vmatprep.subr.mxu0 0.0
        %1877 = vmatpush1.xpose.msra.mxu0 0.0
        %1878 = vmatprep.subr.mxu0 0.0
        %1879 = vmatpush1.xpose.msra.mxu0 0.0
        %1880 = vmatprep.mubr.f32.mxu0 0.0
        %1881 = vmatmul.mubr.f32.gmra.mrb[0].mxu0 %v1812
        %v1882 = vpop.f32.mrb[0].mxu0
        %v1883 = vadd.f32 0.0, %v1882
        %v1884 = vpop.f32.mrb[0].mxu0
        %1885 = vdwg.mxu0
        %v1886 = vmul.f32 %v1883, 0.35355338
        %v1887 = vadd.f32 %v1886, %v1003
        %v1888 = vsel %vm1312, %v1887, -inf
        %1889 = vmax.xlane.f32.xlu0 %v1888
        %v1890 = vpop.xlane.xlu0 %1889
        %v1891 = vsub.f32 %v1887, %v1890
        %v1892 = vmul.f32 %v1891, 1.442695
        %v1893 = vpow.pop %v1892
        %v1894 = vsel %vm1312, %v1893, 0.0
        %1895 = vadd.xlane.f32.xlu0 %v1894
        %v1896 = vpop.xlane.xlu0 %1895
        %v1897 = vrcp.pop %v1896
        %v1898 = vmul.f32 %v1893, %v1897
        %v1900 = vsel %vm1312, %v1898, 0
        %1902 = vmatprep.subr.mxu0 0.0
        %1903 = vmatpush1.msra.mxu0 %v1307
        %1904 = vmatprep.subr.mxu0 0.0
        %1905 = vmatpush1.msra.mxu0 0.0
        %1906 = vmatprep.subr.mxu0 0.0
        %1907 = vmatpush1.msra.mxu0 0.0
        %1908 = vmatprep.subr.mxu0 0.0
        %1909 = vmatpush1.msra.mxu0 0.0
        %1910 = vmatprep.subr.mxu0 0.0
        %1911 = vmatpush1.msra.mxu0 0.0
        %1912 = vmatprep.subr.mxu0 0.0
        %1913 = vmatpush1.msra.mxu0 0.0
        %1914 = vmatprep.subr.mxu0 0.0
        %1915 = vmatpush1.msra.mxu0 0.0
        %1916 = vmatprep.subr.mxu0 0.0
        %1917 = vmatpush1.msra.mxu0 0.0
        %1918 = vmatprep.subr.mxu0 0.0
        %1919 = vmatpush1.msra.mxu0 0.0
        %1920 = vmatprep.subr.mxu0 0.0
        %1921 = vmatpush1.msra.mxu0 0.0
        %1922 = vmatprep.subr.mxu0 0.0
        %1923 = vmatpush1.msra.mxu0 0.0
        %1924 = vmatprep.subr.mxu0 0.0
        %1925 = vmatpush1.msra.mxu0 0.0
        %1926 = vmatprep.subr.mxu0 0.0
        %1927 = vmatpush1.msra.mxu0 0.0
        %1928 = vmatprep.subr.mxu0 0.0
        %1929 = vmatpush1.msra.mxu0 0.0
        %1930 = vmatprep.subr.mxu0 0.0
        %1931 = vmatpush1.msra.mxu0 0.0
        %1932 = vmatprep.subr.mxu0 0.0
        %1933 = vmatpush1.msra.mxu0 0.0
        %1934 = vmatprep.subr.mxu0 0.0
        %1935 = vmatpush1.msra.mxu0 0.0
        %1936 = vmatprep.subr.mxu0 0.0
        %1937 = vmatpush1.msra.mxu0 0.0
        %1938 = vmatprep.subr.mxu0 0.0
        %1939 = vmatpush1.msra.mxu0 0.0
        %1940 = vmatprep.subr.mxu0 0.0
        %1941 = vmatpush1.msra.mxu0 0.0
        %1942 = vmatprep.subr.mxu0 0.0
        %1943 = vmatpush1.msra.mxu0 0.0
        %1944 = vmatprep.subr.mxu0 0.0
        %1945 = vmatpush1.msra.mxu0 0.0
        %1946 = vmatprep.subr.mxu0 0.0
        %1947 = vmatpush1.msra.mxu0 0.0
        %1948 = vmatprep.subr.mxu0 0.0
        %1949 = vmatpush1.msra.mxu0 0.0
        %1950 = vmatprep.subr.mxu0 0.0
        %1951 = vmatpush1.msra.mxu0 0.0
        %1952 = vmatprep.subr.mxu0 0.0
        %1953 = vmatpush1.msra.mxu0 0.0
        %1954 = vmatprep.subr.mxu0 0.0
        %1955 = vmatpush1.msra.mxu0 0.0
        %1956 = vmatprep.subr.mxu0 0.0
        %1957 = vmatpush1.msra.mxu0 0.0
        %1958 = vmatprep.subr.mxu0 0.0
        %1959 = vmatpush1.msra.mxu0 0.0
        %1960 = vmatprep.subr.mxu0 0.0
        %1961 = vmatpush1.msra.mxu0 0.0
        %1962 = vmatprep.subr.mxu0 0.0
        %1963 = vmatpush1.msra.mxu0 0.0
        %1964 = vmatprep.subr.mxu0 0.0
        %1965 = vmatpush1.msra.mxu0 0.0
        %1966 = vmatprep.mubr.f32.mxu0 0.0
        %1967 = vmatmul.mubr.f32.gmra.mrb[0].mxu0 %v1900
        %v1968 = vpop.f32.mrb[0].mxu0
        %v1969 = vadd.f32 0.0, %v1968
        %v1970 = vpop.f32.mrb[0].mxu0
        %1971 = vdwg.mxu0
        %v1972 = vmul.f32 %v1969, %v1022
        %v1973 = vadd.f32 %v1807, %v1972
        %v1974 = vld [vmem:[%s9] sm:$0xf]
        %v1975 = vld [vmem:[%s9 + $0x4] sm:$0xf]
        %v1976 = vld [vmem:[%s9 + $0x8] sm:$0xf]
        %v1977 = vld [vmem:[%s9 + $0xc] sm:$0xf]
        %v1978 = vld [vmem:[%s9 + $0x10] sm:$0xf]
        %v1979 = vld [vmem:[%s9 + $0x14] sm:$0xf]
        %v1980 = vld [vmem:[%s9 + $0x18] sm:$0xf]
        %v1981 = vld [vmem:[%s9 + $0x1c] sm:$0xf]
        %v1982 = vld [vmem:[%s9 + $0x20] sm:$0xf]
        %v1983 = vld [vmem:[%s9 + $0x24] sm:$0xf]
        %v1984 = vld [vmem:[%s9 + $0x28] sm:$0xf]
        %v1985 = vld [vmem:[%s9 + $0x2c] sm:$0xf]
        %v1986 = vld [vmem:[%s9 + $0x30] sm:$0xf]
        %v1987 = vld [vmem:[%s9 + $0x34] sm:$0xf]
        %v1988 = vld [vmem:[%s9 + $0x38] sm:$0xf]
        %v1989 = vld [vmem:[%s9 + $0x3c] sm:$0xf]
        %v1990 = vpack.c.bf16 %v1973, %v1973
        %v1991 = vld [vmem:[%s10] sm:$0x1]
        %v1993 = vlaneseq
        %v1994 = vshrl.u32 %v1993, 7
        %v1995 = vsub.s32 0, %v1994
        %v1996 = vrot.slane %v1991, %v1995
        %v2014 = vunpack.c.l.b16 %v1974
        %v2015 = vunpack.c.l.b16 %v1975
        %v2016 = vunpack.c.l.b16 %v1976
        %v2017 = vunpack.c.l.b16 %v1977
        %v2018 = vunpack.c.l.b16 %v1978
        %v2019 = vunpack.c.l.b16 %v1979
        %v2020 = vunpack.c.l.b16 %v1980
        %v2021 = vunpack.c.l.b16 %v1981
        %v2022 = vunpack.c.l.b16 %v1982
        %v2023 = vunpack.c.l.b16 %v1983
        %v2024 = vunpack.c.l.b16 %v1984
        %v2025 = vunpack.c.l.b16 %v1985
        %v2026 = vunpack.c.l.b16 %v1986
        %v2027 = vunpack.c.l.b16 %v1987
        %v2028 = vunpack.c.l.b16 %v1988
        %v2029 = vunpack.c.l.b16 %v1989
        %v2030 = vpack.c.b16 %v2015, %v2014
        %v2031 = vpack.c.b16 %v2017, %v2016
        %v2032 = vpack.c.b16 %v2019, %v2018
        %v2033 = vpack.c.b16 %v2021, %v2020
        %v2034 = vpack.c.b16 %v2023, %v2022
        %v2035 = vpack.c.b16 %v2025, %v2024
        %v2036 = vpack.c.b16 %v2027, %v2026
        %v2037 = vpack.c.b16 %v2029, %v2028
        %2046 = vmatprep.subr.bf16.mxu0 0
        %2047 = vmatpush1.bf16.msra.mxu0 %v2030
        %2048 = vmatprep.subr.bf16.mxu0 0
        %2049 = vmatpush1.bf16.msra.mxu0 %v2031
        %2050 = vmatprep.subr.bf16.mxu0 0
        %2051 = vmatpush1.bf16.msra.mxu0 %v2032
        %2052 = vmatprep.subr.bf16.mxu0 0
        %2053 = vmatpush1.bf16.msra.mxu0 %v2033
        %2054 = vmatprep.subr.bf16.mxu0 0
        %2055 = vmatpush1.bf16.msra.mxu0 %v2034
        %2056 = vmatprep.subr.bf16.mxu0 0
        %2057 = vmatpush1.bf16.msra.mxu0 %v2035
        %2058 = vmatprep.subr.bf16.mxu0 0
        %2059 = vmatpush1.bf16.msra.mxu0 %v2036
        %2060 = vmatprep.subr.bf16.mxu0 0
        %2061 = vmatpush1.bf16.msra.mxu0 %v2037
        %2062 = vmatprep.subr.bf16.mxu0 0
        %2063 = vmatpush1.bf16.msra.mxu0 0
        %2064 = vmatprep.subr.bf16.mxu0 0
        %2065 = vmatpush1.bf16.msra.mxu0 0
        %2066 = vmatprep.subr.bf16.mxu0 0
        %2067 = vmatpush1.bf16.msra.mxu0 0
        %2068 = vmatprep.subr.bf16.mxu0 0
        %2069 = vmatpush1.bf16.msra.mxu0 0
        %2070 = vmatprep.subr.bf16.mxu0 0
        %2071 = vmatpush1.bf16.msra.mxu0 0
        %2072 = vmatprep.subr.bf16.mxu0 0
        %2073 = vmatpush1.bf16.msra.mxu0 0
        %2074 = vmatprep.subr.bf16.mxu0 0
        %2075 = vmatpush1.bf16.msra.mxu0 0
        %2076 = vmatprep.subr.bf16.mxu0 0
        %2077 = vmatpush1.bf16.msra.mxu0 0
        %2078 = vmatprep.mubr.bf16.mxu0 0
        %2079 = vmatmul.mubr.bf16.gmra.mrb[0].mxu0 %v1990
        %v2080 = vpop.f32.mrb[0].mxu0
        %v2081 = vadd.f32 %v1996, %v2080
        %v2082 = vpop.f32.mrb[0].mxu0
        %v2083 = vpop.f32.mrb[0].mxu0
        %v2084 = vpop.f32.mrb[0].mxu0
        %2085 = vdwg.mxu0
        %v2086 = vadd.f32 %v1023, %v2081
        %v2087 = vlaneseq
        %v2088 = vshrl.u32 %v2087, 7
        %v2089 = vsub.s32 0, %v2088
        %v2090 = vrot.slane %v983, %v2089
        %v2091 = vadd.f32 %v2086, %v2090
        %v2092 = vld [vmem:[%s13] sm:$0x1]
        %v2093 = vld [vmem:[%s14] sm:$0x1]
        %v2094 = vmul.f32 %v2091, %v774
        %2095 = vadd.xlane.f32.xlu0 %v2094
        %v2096 = vpop.xlane.xlu0 %2095
        %v2097 = vmul.f32 %v2096, 0.03125
        %v2098 = vsub.f32 %v2094, %v2097
        %v2099 = vmul.f32 %v2098, %v774
        %v2100 = vmul.f32 %v2099, %v2099
        %2101 = vadd.xlane.f32.xlu0 %v2100
        %v2102 = vpop.xlane.xlu0 %2101
        %v2103 = vmul.f32 %v2102, 0.03125
        %v2104 = vadd.f32 %v2103, 1e-05
        %v2105 = vrsqrt.pop %v2104
        %v2106 = vmul.f32 %v2099, %v2105
        %v2108 = vlaneseq
        %v2109 = vshrl.u32 %v2108, 7
        %v2110 = vsub.s32 0, %v2109
        %v2111 = vrot.slane %v2092, %v2110
        %v2113 = vmul.f32 %v2106, %v2111
        %v2115 = vlaneseq
        %v2116 = vshrl.u32 %v2115, 7
        %v2117 = vsub.s32 0, %v2116
        %v2118 = vrot.slane %v2093, %v2117
        %v2120 = vadd.f32 %v2113, %v2118
        %v2121 = vld [vmem:[#allocation6] sm:$0xf]
        %v2122 = vld [vmem:[#allocation6 + $0x4] sm:$0xf]
        %v2123 = vld [vmem:[#allocation6 + $0x8] sm:$0xf]
        %v2124 = vld [vmem:[#allocation6 + $0xc] sm:$0xf]
        %v2125 = vld [vmem:[#allocation6 + $0x10] sm:$0xf]
        %v2126 = vld [vmem:[#allocation6 + $0x14] sm:$0xf]
        %v2127 = vld [vmem:[#allocation6 + $0x18] sm:$0xf]
        %v2128 = vld [vmem:[#allocation6 + $0x1c] sm:$0xf]
        %v2129 = vld [vmem:[#allocation6 + $0x20] sm:$0xf]
        %v2130 = vld [vmem:[#allocation6 + $0x24] sm:$0xf]
        %v2131 = vld [vmem:[#allocation6 + $0x28] sm:$0xf]
        %v2132 = vld [vmem:[#allocation6 + $0x2c] sm:$0xf]
        %v2133 = vld [vmem:[#allocation6 + $0x30] sm:$0xf]
        %v2134 = vld [vmem:[#allocation6 + $0x34] sm:$0xf]
        %v2135 = vld [vmem:[#allocation6 + $0x38] sm:$0xf]
        %v2136 = vld [vmem:[#allocation6 + $0x3c] sm:$0xf]
        %v2137 = vpack.c.bf16 %v2120, %v2120
        %v2138 = vld [vmem:[%s16] sm:$0x1]
        %v2140 = vlaneseq
        %v2141 = vshrl.u32 %v2140, 7
        %v2142 = vsub.s32 0, %v2141
        %v2143 = vrot.slane %v2138, %v2142
        %v2161 = vunpack.c.l.b16 %v2121
        %v2162 = vunpack.c.l.b16 %v2122
        %v2163 = vunpack.c.l.b16 %v2123
        %v2164 = vunpack.c.l.b16 %v2124
        %v2165 = vunpack.c.l.b16 %v2125
        %v2166 = vunpack.c.l.b16 %v2126
        %v2167 = vunpack.c.l.b16 %v2127
        %v2168 = vunpack.c.l.b16 %v2128
        %v2169 = vunpack.c.l.b16 %v2129
        %v2170 = vunpack.c.l.b16 %v2130
        %v2171 = vunpack.c.l.b16 %v2131
        %v2172 = vunpack.c.l.b16 %v2132
        %v2173 = vunpack.c.l.b16 %v2133
        %v2174 = vunpack.c.l.b16 %v2134
        %v2175 = vunpack.c.l.b16 %v2135
        %v2176 = vunpack.c.l.b16 %v2136
        %v2177 = vpack.c.b16 %v2162, %v2161
        %v2178 = vpack.c.b16 %v2164, %v2163
        %v2179 = vpack.c.b16 %v2166, %v2165
        %v2180 = vpack.c.b16 %v2168, %v2167
        %v2181 = vpack.c.b16 %v2170, %v2169
        %v2182 = vpack.c.b16 %v2172, %v2171
        %v2183 = vpack.c.b16 %v2174, %v2173
        %v2184 = vpack.c.b16 %v2176, %v2175
        %2193 = vmatprep.subr.bf16.mxu0 0
        %2194 = vmatpush1.bf16.msra.mxu0 %v2177
        %2195 = vmatprep.subr.bf16.mxu0 0
        %2196 = vmatpush1.bf16.msra.mxu0 %v2178
        %2197 = vmatprep.subr.bf16.mxu0 0
        %2198 = vmatpush1.bf16.msra.mxu0 %v2179
        %2199 = vmatprep.subr.bf16.mxu0 0
        %2200 = vmatpush1.bf16.msra.mxu0 %v2180
        %2201 = vmatprep.subr.bf16.mxu0 0
        %2202 = vmatpush1.bf16.msra.mxu0 %v2181
        %2203 = vmatprep.subr.bf16.mxu0 0
        %2204 = vmatpush1.bf16.msra.mxu0 %v2182
        %2205 = vmatprep.subr.bf16.mxu0 0
        %2206 = vmatpush1.bf16.msra.mxu0 %v2183
        %2207 = vmatprep.subr.bf16.mxu0 0
        %2208 = vmatpush1.bf16.msra.mxu0 %v2184
        %2209 = vmatprep.subr.bf16.mxu0 0
        %2210 = vmatpush1.bf16.msra.mxu0 0
        %2211 = vmatprep.subr.bf16.mxu0 0
        %2212 = vmatpush1.bf16.msra.mxu0 0
        %2213 = vmatprep.subr.bf16.mxu0 0
        %2214 = vmatpush1.bf16.msra.mxu0 0
        %2215 = vmatprep.subr.bf16.mxu0 0
        %2216 = vmatpush1.bf16.msra.mxu0 0
        %2217 = vmatprep.subr.bf16.mxu0 0
        %2218 = vmatpush1.bf16.msra.mxu0 0
        %2219 = vmatprep.subr.bf16.mxu0 0
        %2220 = vmatpush1.bf16.msra.mxu0 0
        %2221 = vmatprep.subr.bf16.mxu0 0
        %2222 = vmatpush1.bf16.msra.mxu0 0
        %2223 = vmatprep.subr.bf16.mxu0 0
        %2224 = vmatpush1.bf16.msra.mxu0 0
        %2225 = vmatprep.mubr.bf16.mxu0 0
        %2226 = vmatmul.mubr.bf16.gmra.mrb[0].mxu0 %v2137
        %v2227 = vpop.f32.mrb[0].mxu0
        %v2228 = vadd.f32 %v2143, %v2227
        %v2229 = vpop.f32.mrb[0].mxu0
        %v2230 = vpop.f32.mrb[0].mxu0
        %v2231 = vpop.f32.mrb[0].mxu0
        %2232 = vdwg.mxu0
        %v2233 = vmul.f32 %v2228, 0.5
        %v2234 = vmul.f32 %v2228, 0.044715
        %v2235 = vmul.f32 %v2234, %v2228
        %v2236 = vmul.f32 %v2235, %v2228
        %v2237 = vadd.f32 %v2228, %v2236
        %v2238 = vmul.f32 %v2237, 0.7978846
        %v2239 = vtanh.pop %v2238
        %v2240 = vadd.f32 %v2239, 1.0
        %v2241 = vmul.f32 %v2233, %v2240
        %v2242 = vld [vmem:[#allocation7] sm:$0xf]
        %v2243 = vld [vmem:[#allocation7 + $0x4] sm:$0xf]
        %v2244 = vld [vmem:[#allocation7 + $0x8] sm:$0xf]
        %v2245 = vld [vmem:[#allocation7 + $0xc] sm:$0xf]
        %v2246 = vld [vmem:[#allocation7 + $0x10] sm:$0xf]
        %v2247 = vld [vmem:[#allocation7 + $0x14] sm:$0xf]
        %v2248 = vld [vmem:[#allocation7 + $0x18] sm:$0xf]
        %v2249 = vld [vmem:[#allocation7 + $0x1c] sm:$0xf]
        %v2250 = vld [vmem:[#allocation7 + $0x20] sm:$0xf]
        %v2251 = vld [vmem:[#allocation7 + $0x24] sm:$0xf]
        %v2252 = vld [vmem:[#allocation7 + $0x28] sm:$0xf]
        %v2253 = vld [vmem:[#allocation7 + $0x2c] sm:$0xf]
        %v2254 = vld [vmem:[#allocation7 + $0x30] sm:$0xf]
        %v2255 = vld [vmem:[#allocation7 + $0x34] sm:$0xf]
        %v2256 = vld [vmem:[#allocation7 + $0x38] sm:$0xf]
        %v2257 = vld [vmem:[#allocation7 + $0x3c] sm:$0xf]
        %v2258 = vpack.c.bf16 %v2241, %v2241
        %v2275 = vunpack.c.l.b16 %v2242
        %v2276 = vunpack.c.l.b16 %v2243
        %v2277 = vunpack.c.l.b16 %v2244
        %v2278 = vunpack.c.l.b16 %v2245
        %v2279 = vunpack.c.l.b16 %v2246
        %v2280 = vunpack.c.l.b16 %v2247
        %v2281 = vunpack.c.l.b16 %v2248
        %v2282 = vunpack.c.l.b16 %v2249
        %v2283 = vunpack.c.l.b16 %v2250
        %v2284 = vunpack.c.l.b16 %v2251
        %v2285 = vunpack.c.l.b16 %v2252
        %v2286 = vunpack.c.l.b16 %v2253
        %v2287 = vunpack.c.l.b16 %v2254
        %v2288 = vunpack.c.l.b16 %v2255
        %v2289 = vunpack.c.l.b16 %v2256
        %v2290 = vunpack.c.l.b16 %v2257
        %v2291 = vpack.c.b16 %v2276, %v2275
        %v2292 = vpack.c.b16 %v2278, %v2277
        %v2293 = vpack.c.b16 %v2280, %v2279
        %v2294 = vpack.c.b16 %v2282, %v2281
        %v2295 = vpack.c.b16 %v2284, %v2283
        %v2296 = vpack.c.b16 %v2286, %v2285
        %v2297 = vpack.c.b16 %v2288, %v2287
        %v2298 = vpack.c.b16 %v2290, %v2289
        %2307 = vmatprep.subr.bf16.mxu0 0
        %2308 = vmatpush1.bf16.msra.mxu0 %v2291
        %2309 = vmatprep.subr.bf16.mxu0 0
        %2310 = vmatpush1.bf16.msra.mxu0 %v2292
        %2311 = vmatprep.subr.bf16.mxu0 0
        %2312 = vmatpush1.bf16.msra.mxu0 %v2293
        %2313 = vmatprep.subr.bf16.mxu0 0
        %2314 = vmatpush1.bf16.msra.mxu0 %v2294
        %2315 = vmatprep.subr.bf16.mxu0 0
        %2316 = vmatpush1.bf16.msra.mxu0 %v2295
        %2317 = vmatprep.subr.bf16.mxu0 0
        %2318 = vmatpush1.bf16.msra.mxu0 %v2296
        %2319 = vmatprep.subr.bf16.mxu0 0
        %2320 = vmatpush1.bf16.msra.mxu0 %v2297
        %2321 = vmatprep.subr.bf16.mxu0 0
        %2322 = vmatpush1.bf16.msra.mxu0 %v2298
        %2323 = vmatprep.subr.bf16.mxu0 0
        %2324 = vmatpush1.bf16.msra.mxu0 0
        %2325 = vmatprep.subr.bf16.mxu0 0
        %2326 = vmatpush1.bf16.msra.mxu0 0
        %2327 = vmatprep.subr.bf16.mxu0 0
        %2328 = vmatpush1.bf16.msra.mxu0 0
        %2329 = vmatprep.subr.bf16.mxu0 0
        %2330 = vmatpush1.bf16.msra.mxu0 0
        %2331 = vmatprep.subr.bf16.mxu0 0
        %2332 = vmatpush1.bf16.msra.mxu0 0
        %2333 = vmatprep.subr.bf16.mxu0 0
        %2334 = vmatpush1.bf16.msra.mxu0 0
        %2335 = vmatprep.subr.bf16.mxu0 0
        %2336 = vmatpush1.bf16.msra.mxu0 0
        %2337 = vmatprep.subr.bf16.mxu0 0
        %2338 = vmatpush1.bf16.msra.mxu0 0
        %2339 = vmatprep.mubr.bf16.mxu0 0
        %2340 = vmatmul.mubr.bf16.gmra.mrb[0].mxu0 %v2258
        %v2341 = vpop.f32.mrb[0].mxu0
        %v2342 = vadd.f32 0.0, %v2341
        %v2343 = vpop.f32.mrb[0].mxu0
        %v2344 = vpop.f32.mrb[0].mxu0
        %v2345 = vpop.f32.mrb[0].mxu0
        %2346 = vdwg.mxu0
        %v2347 = vadd.f32 %v2091, %v2342
        %v2348 = vld [vmem:[%s18] sm:$0x1]
        %v2350 = vlaneseq
        %v2351 = vshrl.u32 %v2350, 7
        %v2352 = vsub.s32 0, %v2351
        %v2353 = vrot.slane %v2348, %v2352
        %v2355 = vadd.f32 %v2347, %v2353
        %s2356 = scalar_lea.vmem %s5, 1
        %v2357 = vld [vmem:[%s2356] sm:$0x1]
        %s2358 = scalar_lea.vmem %s6, 1
        %v2359 = vld [vmem:[%s2358] sm:$0x1]
        %v2360 = vmul.f32 %v2355, %v774
        %2361 = vadd.xlane.f32.xlu0 %v2360
        %v2362 = vpop.xlane.xlu0 %2361
        %v2363 = vmul.f32 %v2362, 0.03125
        %v2364 = vsub.f32 %v2360, %v2363
        %v2365 = vmul.f32 %v2364, %v774
        %v2366 = vmul.f32 %v2365, %v2365
        %2367 = vadd.xlane.f32.xlu0 %v2366
        %v2368 = vpop.xlane.xlu0 %2367
        %v2369 = vmul.f32 %v2368, 0.03125
        %v2370 = vadd.f32 %v2369, 1e-05
        %v2371 = vrsqrt.pop %v2370
        %v2372 = vmul.f32 %v2365, %v2371
        %v2374 = vlaneseq
        %v2375 = vshrl.u32 %v2374, 7
        %v2376 = vsub.s32 0, %v2375
        %v2377 = vrot.slane %v2357, %v2376
        %v2379 = vmul.f32 %v2372, %v2377
        %v2381 = vlaneseq
        %v2382 = vshrl.u32 %v2381, 7
        %v2383 = vsub.s32 0, %v2382
        %v2384 = vrot.slane %v2359, %v2383
        %v2386 = vadd.f32 %v2379, %v2384
        %s2387 = scalar_lea.vmem [#allocation2], 192
        %v2388 = vld [vmem:[%s2387] sm:$0xff]
        %v2389 = vld [vmem:[%s2387 + $0x8] sm:$0xf]
        %v2390 = vld [vmem:[%s2387 + $0xc] sm:$0xff]
        %v2391 = vld [vmem:[%s2387 + $0x14] sm:$0xf]
        %v2392 = vld [vmem:[%s2387 + $0x18] sm:$0xff]
        %v2393 = vld [vmem:[%s2387 + $0x20] sm:$0xf]
        %v2394 = vld [vmem:[%s2387 + $0x24] sm:$0xff]
        %v2395 = vld [vmem:[%s2387 + $0x2c] sm:$0xf]
        %v2396 = vld [vmem:[%s2387 + $0x30] sm:$0xff]
        %v2397 = vld [vmem:[%s2387 + $0x38] sm:$0xf]
        %v2398 = vld [vmem:[%s2387 + $0x3c] sm:$0xff]
        %v2399 = vld [vmem:[%s2387 + $0x44] sm:$0xf]
        %v2400 = vld [vmem:[%s2387 + $0x48] sm:$0xff]
        %v2401 = vld [vmem:[%s2387 + $0x50] sm:$0xf]
        %v2402 = vld [vmem:[%s2387 + $0x54] sm:$0xff]
        %v2403 = vld [vmem:[%s2387 + $0x5c] sm:$0xf]
        %v2404 = vld [vmem:[%s2387 + $0x60] sm:$0xff]
        %v2405 = vld [vmem:[%s2387 + $0x68] sm:$0xf]
        %v2406 = vld [vmem:[%s2387 + $0x6c] sm:$0xff]
        %v2407 = vld [vmem:[%s2387 + $0x74] sm:$0xf]
        %v2408 = vld [vmem:[%s2387 + $0x78] sm:$0xff]
        %v2409 = vld [vmem:[%s2387 + $0x80] sm:$0xf]
        %v2410 = vld [vmem:[%s2387 + $0x84] sm:$0xff]
        %v2411 = vld [vmem:[%s2387 + $0x8c] sm:$0xf]
        %v2412 = vld [vmem:[%s2387 + $0x90] sm:$0xff]
        %v2413 = vld [vmem:[%s2387 + $0x98] sm:$0xf]
        %v2414 = vld [vmem:[%s2387 + $0x9c] sm:$0xff]
        %v2415 = vld [vmem:[%s2387 + $0xa4] sm:$0xf]
        %v2416 = vld [vmem:[%s2387 + $0xa8] sm:$0xff]
        %v2417 = vld [vmem:[%s2387 + $0xb0] sm:$0xf]
        %v2418 = vld [vmem:[%s2387 + $0xb4] sm:$0xff]
        %v2419 = vld [vmem:[%s2387 + $0xbc] sm:$0xf]
        %v2420 = vpack.c.bf16 %v2386, %v2386
        %s2421 = scalar_lea.vmem %s8, 3
        %v2422 = vld [vmem:[%s2421] sm:$0x7]
        %v2424 = vlaneseq
        %v2425 = vshrl.u32 %v2424, 7
        %v2426 = vsub.s32 0, %v2425
        %v2427 = vrot.slane %v2422, %v2426
        %v2428 = vlaneseq
        %v2429 = vshrl.u32 %v2428, 7
        %v2430 = vsub.s32 1, %v2429
        %v2431 = vrot.slane %v2422, %v2430
        %v2432 = vlaneseq
        %v2433 = vshrl.u32 %v2432, 7
        %v2434 = vsub.s32 2, %v2433
        %v2435 = vrot.slane %v2422, %v2434
        %v2471 = vunpack.c.l.b16 %v2388
        %v2472 = vunpack.c.h.b16 %v2388
        %v2473 = vunpack.c.l.b16 %v2389
        %v2474 = vunpack.c.l.b16 %v2390
        %v2475 = vunpack.c.h.b16 %v2390
        %v2476 = vunpack.c.l.b16 %v2391
        %v2477 = vunpack.c.l.b16 %v2392
        %v2478 = vunpack.c.h.b16 %v2392
        %v2479 = vunpack.c.l.b16 %v2393
        %v2480 = vunpack.c.l.b16 %v2394
        %v2481 = vunpack.c.h.b16 %v2394
        %v2482 = vunpack.c.l.b16 %v2395
        %v2483 = vunpack.c.l.b16 %v2396
        %v2484 = vunpack.c.h.b16 %v2396
        %v2485 = vunpack.c.l.b16 %v2397
        %v2486 = vunpack.c.l.b16 %v2398
        %v2487 = vunpack.c.h.b16 %v2398
        %v2488 = vunpack.c.l.b16 %v2399
        %v2489 = vunpack.c.l.b16 %v2400
        %v2490 = vunpack.c.h.b16 %v2400
        %v2491 = vunpack.c.l.b16 %v2401
        %v2492 = vunpack.c.l.b16 %v2402
        %v2493 = vunpack.c.h.b16 %v2402
        %v2494 = vunpack.c.l.b16 %v2403
        %v2495 = vunpack.c.l.b16 %v2404
        %v2496 = vunpack.c.h.b16 %v2404
        %v2497 = vunpack.c.l.b16 %v2405
        %v2498 = vunpack.c.l.b16 %v2406
        %v2499 = vunpack.c.h.b16 %v2406
        %v2500 = vunpack.c.l.b16 %v2407
        %v2501 = vunpack.c.l.b16 %v2408
        %v2502 = vunpack.c.h.b16 %v2408
        %v2503 = vunpack.c.l.b16 %v2409
        %v2504 = vunpack.c.l.b16 %v2410
        %v2505 = vunpack.c.h.b16 %v2410
        %v2506 = vunpack.c.l.b16 %v2411
        %v2507 = vunpack.c.l.b16 %v2412
        %v2508 = vunpack.c.h.b16 %v2412
        %v2509 = vunpack.c.l.b16 %v2413
        %v2510 = vunpack.c.l.b16 %v2414
        %v2511 = vunpack.c.h.b16 %v2414
        %v2512 = vunpack.c.l.b16 %v2415
        %v2513 = vunpack.c.l.b16 %v2416
        %v2514 = vunpack.c.h.b16 %v2416
        %v2515 = vunpack.c.l.b16 %v2417
        %v2516 = vunpack.c.l.b16 %v2418
        %v2517 = vunpack.c.h.b16 %v2418
        %v2518 = vunpack.c.l.b16 %v2419
        %v2519 = vpack.c.b16 %v2474, %v2471
        %v2520 = vpack.c.b16 %v2475, %v2472
        %v2521 = vpack.c.b16 %v2476, %v2473
        %v2522 = vpack.c.b16 %v2480, %v2477
        %v2523 = vpack.c.b16 %v2481, %v2478
        %v2524 = vpack.c.b16 %v2482, %v2479
        %v2525 = vpack.c.b16 %v2486, %v2483
        %v2526 = vpack.c.b16 %v2487, %v2484
        %v2527 = vpack.c.b16 %v2488, %v2485
        %v2528 = vpack.c.b16 %v2492, %v2489
        %v2529 = vpack.c.b16 %v2493, %v2490
        %v2530 = vpack.c.b16 %v2494, %v2491
        %v2531 = vpack.c.b16 %v2498, %v2495
        %v2532 = vpack.c.b16 %v2499, %v2496
        %v2533 = vpack.c.b16 %v2500, %v2497
        %v2534 = vpack.c.b16 %v2504, %v2501
        %v2535 = vpack.c.b16 %v2505, %v2502
        %v2536 = vpack.c.b16 %v2506, %v2503
        %v2537 = vpack.c.b16 %v2510, %v2507
        %v2538 = vpack.c.b16 %v2511, %v2508
        %v2539 = vpack.c.b16 %v2512, %v2509
        %v2540 = vpack.c.b16 %v2516, %v2513
        %v2541 = vpack.c.b16 %v2517, %v2514
        %v2542 = vpack.c.b16 %v2518, %v2515
        %2567 = vmatprep.subr.bf16.mxu0 %v2520
        %2568 = vmatpush1.bf16.msra.mxu0 %v2519
        %2569 = vmatprep.subr.bf16.mxu0 %v2523
        %2570 = vmatpush1.bf16.msra.mxu0 %v2522
        %2571 = vmatprep.subr.bf16.mxu0 %v2526
        %2572 = vmatpush1.bf16.msra.mxu0 %v2525
        %2573 = vmatprep.subr.bf16.mxu0 %v2529
        %2574 = vmatpush1.bf16.msra.mxu0 %v2528
        %2575 = vmatprep.subr.bf16.mxu0 %v2532
        %2576 = vmatpush1.bf16.msra.mxu0 %v2531
        %2577 = vmatprep.subr.bf16.mxu0 %v2535
        %2578 = vmatpush1.bf16.msra.mxu0 %v2534
        %2579 = vmatprep.subr.bf16.mxu0 %v2538
        %2580 = vmatpush1.bf16.msra.mxu0 %v2537
        %2581 = vmatprep.subr.bf16.mxu0 %v2541
        %2582 = vmatpush1.bf16.msra.mxu0 %v2540
        %2583 = vmatprep.subr.bf16.mxu0 0
        %2584 = vmatpush1.bf16.msra.mxu0 0
        %2585 = vmatprep.subr.bf16.mxu0 0
        %2586 = vmatpush1.bf16.msra.mxu0 0
        %2587 = vmatprep.subr.bf16.mxu0 0
        %2588 = vmatpush1.bf16.msra.mxu0 0
        %2589 = vmatprep.subr.bf16.mxu0 0
        %2590 = vmatpush1.bf16.msra.mxu0 0
        %2591 = vmatprep.subr.bf16.mxu0 0
        %2592 = vmatpush1.bf16.msra.mxu0 0
        %2593 = vmatprep.subr.bf16.mxu0 0
        %2594 = vmatpush1.bf16.msra.mxu0 0
        %2595 = vmatprep.subr.bf16.mxu0 0
        %2596 = vmatpush1.bf16.msra.mxu0 0
        %2597 = vmatprep.subr.bf16.mxu0 0
        %2598 = vmatpush1.bf16.msra.mxu0 0
        %2599 = vmatprep.mubr.bf16.mxu0 0
        %2600 = vmatmul.mubr.bf16.gmra.mrb[0].mxu0 %v2420
        %v2601 = vpop.f32.mrb[0].mxu0
        %v2602 = vadd.f32 %v2427, %v2601
        %v2603 = vpop.f32.mrb[0].mxu0
        %v2604 = vadd.f32 %v2431, %v2603
        %v2605 = vpop.f32.mrb[0].mxu0
        %v2606 = vpop.f32.mrb[0].mxu0
        %2607 = vdwg.mxu0
        %2608 = vmatprep.subr.bf16.mxu0 0
        %2609 = vmatpush1.bf16.msra.mxu0 %v2521
        %2610 = vmatprep.subr.bf16.mxu0 0
        %2611 = vmatpush1.bf16.msra.mxu0 %v2524
        %2612 = vmatprep.subr.bf16.mxu0 0
        %2613 = vmatpush1.bf16.msra.mxu0 %v2527
        %2614 = vmatprep.subr.bf16.mxu0 0
        %2615 = vmatpush1.bf16.msra.mxu0 %v2530
        %2616 = vmatprep.subr.bf16.mxu0 0
        %2617 = vmatpush1.bf16.msra.mxu0 %v2533
        %2618 = vmatprep.subr.bf16.mxu0 0
        %2619 = vmatpush1.bf16.msra.mxu0 %v2536
        %2620 = vmatprep.subr.bf16.mxu0 0
        %2621 = vmatpush1.bf16.msra.mxu0 %v2539
        %2622 = vmatprep.subr.bf16.mxu0 0
        %2623 = vmatpush1.bf16.msra.mxu0 %v2542
        %2624 = vmatprep.subr.bf16.mxu0 0
        %2625 = vmatpush1.bf16.msra.mxu0 0
        %2626 = vmatprep.subr.bf16.mxu0 0
        %2627 = vmatpush1.bf16.msra.mxu0 0
        %2628 = vmatprep.subr.bf16.mxu0 0
        %2629 = vmatpush1.bf16.msra.mxu0 0
        %2630 = vmatprep.subr.bf16.mxu0 0
        %2631 = vmatpush1.bf16.msra.mxu0 0
        %2632 = vmatprep.subr.bf16.mxu0 0
        %2633 = vmatpush1.bf16.msra.mxu0 0
        %2634 = vmatprep.subr.bf16.mxu0 0
        %2635 = vmatpush1.bf16.msra.mxu0 0
        %2636 = vmatprep.subr.bf16.mxu0 0
        %2637 = vmatpush1.bf16.msra.mxu0 0
        %2638 = vmatprep.subr.bf16.mxu0 0
        %2639 = vmatpush1.bf16.msra.mxu0 0
        %2640 = vmatprep.mubr.bf16.mxu0 0
        %2641 = vmatmul.mubr.bf16.gmra.mrb[0].mxu0 %v2420
        %v2642 = vpop.f32.mrb[0].mxu0
        %v2643 = vadd.f32 %v2435, %v2642
        %v2644 = vpop.f32.mrb[0].mxu0
        %v2645 = vpop.f32.mrb[0].mxu0
        %v2646 = vpop.f32.mrb[0].mxu0
        %2647 = vdwg.mxu0
        %v2649 = vsel %vm1312, %v2602, 0
        %v2652 = vsel %vm1312, %v2604, 0
        %2654 = vmatprep.subr.mxu0 0.0
        %2655 = vmatpush1.xpose.msra.mxu0 %v2652
        %2656 = vmatprep.subr.mxu0 0.0
        %2657 = vmatpush1.xpose.msra.mxu0 0.0
        %2658 = vmatprep.subr.mxu0 0.0
        %2659 = vmatpush1.xpose.msra.mxu0 0.0
        %2660 = vmatprep.subr.mxu0 0.0
        %2661 = vmatpush1.xpose.msra.mxu0 0.0
        %2662 = vmatprep.subr.mxu0 0.0
        %2663 = vmatpush1.xpose.msra.mxu0 0.0
        %2664 = vmatprep.subr.mxu0 0.0
        %2665 = vmatpush1.xpose.msra.mxu0 0.0
        %2666 = vmatprep.subr.mxu0 0.0
        %2667 = vmatpush1.xpose.msra.mxu0 0.0
        %2668 = vmatprep.subr.mxu0 0.0
        %2669 = vmatpush1.xpose.msra.mxu0 0.0
        %2670 = vmatprep.subr.mxu0 0.0
        %2671 = vmatpush1.xpose.msra.mxu0 0.0
        %2672 = vmatprep.subr.mxu0 0.0
        %2673 = vmatpush1.xpose.msra.mxu0 0.0
        %2674 = vmatprep.subr.mxu0 0.0
        %2675 = vmatpush1.xpose.msra.mxu0 0.0
        %2676 = vmatprep.subr.mxu0 0.0
        %2677 = vmatpush1.xpose.msra.mxu0 0.0
        %2678 = vmatprep.subr.mxu0 0.0
        %2679 = vmatpush1.xpose.msra.mxu0 0.0
        %2680 = vmatprep.subr.mxu0 0.0
        %2681 = vmatpush1.xpose.msra.mxu0 0.0
        %2682 = vmatprep.subr.mxu0 0.0
        %2683 = vmatpush1.xpose.msra.mxu0 0.0
        %2684 = vmatprep.subr.mxu0 0.0
        %2685 = vmatpush1.xpose.msra.mxu0 0.0
        %2686 = vmatprep.subr.mxu0 0.0
        %2687 = vmatpush1.xpose.msra.mxu0 0.0
        %2688 = vmatprep.subr.mxu0 0.0
        %2689 = vmatpush1.xpose.msra.mxu0 0.0
        %2690 = vmatprep.subr.mxu0 0.0
        %2691 = vmatpush1.xpose.msra.mxu0 0.0
        %2692 = vmatprep.subr.mxu0 0.0
        %2693 = vmatpush1.xpose.msra.mxu0 0.0
        %2694 = vmatprep.subr.mxu0 0.0
        %2695 = vmatpush1.xpose.msra.mxu0 0.0
        %2696 = vmatprep.subr.mxu0 0.0
        %2697 = vmatpush1.xpose.msra.mxu0 0.0
        %2698 = vmatprep.subr.mxu0 0.0
        %2699 = vmatpush1.xpose.msra.mxu0 0.0
        %2700 = vmatprep.subr.mxu0 0.0
        %2701 = vmatpush1.xpose.msra.mxu0 0.0
        %2702 = vmatprep.subr.mxu0 0.0
        %2703 = vmatpush1.xpose.msra.mxu0 0.0
        %2704 = vmatprep.subr.mxu0 0.0
        %2705 = vmatpush1.xpose.msra.mxu0 0.0
        %2706 = vmatprep.subr.mxu0 0.0
        %2707 = vmatpush1.xpose.msra.mxu0 0.0
        %2708 = vmatprep.subr.mxu0 0.0
        %2709 = vmatpush1.xpose.msra.mxu0 0.0
        %2710 = vmatprep.subr.mxu0 0.0
        %2711 = vmatpush1.xpose.msra.mxu0 0.0
        %2712 = vmatprep.subr.mxu0 0.0
        %2713 = vmatpush1.xpose.msra.mxu0 0.0
        %2714 = vmatprep.subr.mxu0 0.0
        %2715 = vmatpush1.xpose.msra.mxu0 0.0
        %2716 = vmatprep.subr.mxu0 0.0
        %2717 = vmatpush1.xpose.msra.mxu0 0.0
        %2718 = vmatprep.mubr.f32.mxu0 0.0
        %2719 = vmatmul.mubr.f32.gmra.mrb[0].mxu0 %v2649
        %v2720 = vpop.f32.mrb[0].mxu0
        %v2721 = vadd.f32 0.0, %v2720
        %v2722 = vpop.f32.mrb[0].mxu0
        %2723 = vdwg.mxu0
        %v2724 = vmul.f32 %v2721, 0.35355338
        %v2725 = vadd.f32 %v2724, %v1003
        %v2726 = vsel %vm1312, %v2725, -inf
        %2727 = vmax.xlane.f32.xlu0 %v2726
        %v2728 = vpop.xlane.xlu0 %2727
        %v2729 = vsub.f32 %v2725, %v2728
        %v2730 = vmul.f32 %v2729, 1.442695
        %v2731 = vpow.pop %v2730
        %v2732 = vsel %vm1312, %v2731, 0.0
        %2733 = vadd.xlane.f32.xlu0 %v2732
        %v2734 = vpop.xlane.xlu0 %2733
        %v2735 = vrcp.pop %v2734
        %v2736 = vmul.f32 %v2731, %v2735
        %v2738 = vsel %vm1312, %v2736, 0
        %2740 = vmatprep.subr.mxu0 0.0
        %2741 = vmatpush1.msra.mxu0 %v2643
        %2742 = vmatprep.subr.mxu0 0.0
        %2743 = vmatpush1.msra.mxu0 0.0
        %2744 = vmatprep.subr.mxu0 0.0
        %2745 = vmatpush1.msra.mxu0 0.0
        %2746 = vmatprep.subr.mxu0 0.0
        %2747 = vmatpush1.msra.mxu0 0.0
        %2748 = vmatprep.subr.mxu0 0.0
        %2749 = vmatpush1.msra.mxu0 0.0
        %2750 = vmatprep.subr.mxu0 0.0
        %2751 = vmatpush1.msra.mxu0 0.0
        %2752 = vmatprep.subr.mxu0 0.0
        %2753 = vmatpush1.msra.mxu0 0.0
        %2754 = vmatprep.subr.mxu0 0.0
        %2755 = vmatpush1.msra.mxu0 0.0
        %2756 = vmatprep.subr.mxu0 0.0
        %2757 = vmatpush1.msra.mxu0 0.0
        %2758 = vmatprep.subr.mxu0 0.0
        %2759 = vmatpush1.msra.mxu0 0.0
        %2760 = vmatprep.subr.mxu0 0.0
        %2761 = vmatpush1.msra.mxu0 0.0
        %2762 = vmatprep.subr.mxu0 0.0
        %2763 = vmatpush1.msra.mxu0 0.0
        %2764 = vmatprep.subr.mxu0 0.0
        %2765 = vmatpush1.msra.mxu0 0.0
        %2766 = vmatprep.subr.mxu0 0.0
        %2767 = vmatpush1.msra.mxu0 0.0
        %2768 = vmatprep.subr.mxu0 0.0
        %2769 = vmatpush1.msra.mxu0 0.0
        %2770 = vmatprep.subr.mxu0 0.0
        %2771 = vmatpush1.msra.mxu0 0.0
        %2772 = vmatprep.subr.mxu0 0.0
        %2773 = vmatpush1.msra.mxu0 0.0
        %2774 = vmatprep.subr.mxu0 0.0
        %2775 = vmatpush1.msra.mxu0 0.0
        %2776 = vmatprep.subr.mxu0 0.0
        %2777 = vmatpush1.msra.mxu0 0.0
        %2778 = vmatprep.subr.mxu0 0.0
        %2779 = vmatpush1.msra.mxu0 0.0
        %2780 = vmatprep.subr.mxu0 0.0
        %2781 = vmatpush1.msra.mxu0 0.0
        %2782 = vmatprep.subr.mxu0 0.0
        %2783 = vmatpush1.msra.mxu0 0.0
        %2784 = vmatprep.subr.mxu0 0.0
        %2785 = vmatpush1.msra.mxu0 0.0
        %2786 = vmatprep.subr.mxu0 0.0
        %2787 = vmatpush1.msra.mxu0 0.0
        %2788 = vmatprep.subr.mxu0 0.0
        %2789 = vmatpush1.msra.mxu0 0.0
        %2790 = vmatprep.subr.mxu0 0.0
        %2791 = vmatpush1.msra.mxu0 0.0
        %2792 = vmatprep.subr.mxu0 0.0
        %2793 = vmatpush1.msra.mxu0 0.0
        %2794 = vmatprep.subr.mxu0 0.0
        %2795 = vmatpush1.msra.mxu0 0.0
        %2796 = vmatprep.subr.mxu0 0.0
        %2797 = vmatpush1.msra.mxu0 0.0
        %2798 = vmatprep.subr.mxu0 0.0
        %2799 = vmatpush1.msra.mxu0 0.0
        %2800 = vmatprep.subr.mxu0 0.0
        %2801 = vmatpush1.msra.mxu0 0.0
        %2802 = vmatprep.subr.mxu0 0.0
        %2803 = vmatpush1.msra.mxu0 0.0
        %2804 = vmatprep.mubr.f32.mxu0 0.0
        %2805 = vmatmul.mubr.f32.gmra.mrb[0].mxu0 %v2738
        %v2806 = vpop.f32.mrb[0].mxu0
        %v2807 = vadd.f32 0.0, %v2806
        %v2808 = vpop.f32.mrb[0].mxu0
        %2809 = vdwg.mxu0
        %v2810 = vmul.f32 %v2807, %v1008
        %2811 = vrot.lane.b32.xlu0 %v2602, 120
        %v2812 = vpop.permute.xlu0 %2811
        %2813 = vrot.lane.b32.xlu0 %v2604, 120
        %v2814 = vpop.permute.xlu0 %2813
        %v2815 = vsel %vm1312, %v2812, 0
        %v2817 = vsel %vm1312, %v2814, 0
        %2819 = vmatprep.subr.mxu0 0.0
        %2820 = vmatpush1.xpose.msra.mxu0 %v2817
        %2821 = vmatprep.subr.mxu0 0.0
        %2822 = vmatpush1.xpose.msra.mxu0 0.0
        %2823 = vmatprep.subr.mxu0 0.0
        %2824 = vmatpush1.xpose.msra.mxu0 0.0
        %2825 = vmatprep.subr.mxu0 0.0
        %2826 = vmatpush1.xpose.msra.mxu0 0.0
        %2827 = vmatprep.subr.mxu0 0.0
        %2828 = vmatpush1.xpose.msra.mxu0 0.0
        %2829 = vmatprep.subr.mxu0 0.0
        %2830 = vmatpush1.xpose.msra.mxu0 0.0
        %2831 = vmatprep.subr.mxu0 0.0
        %2832 = vmatpush1.xpose.msra.mxu0 0.0
        %2833 = vmatprep.subr.mxu0 0.0
        %2834 = vmatpush1.xpose.msra.mxu0 0.0
        %2835 = vmatprep.subr.mxu0 0.0
        %2836 = vmatpush1.xpose.msra.mxu0 0.0
        %2837 = vmatprep.subr.mxu0 0.0
        %2838 = vmatpush1.xpose.msra.mxu0 0.0
        %2839 = vmatprep.subr.mxu0 0.0
        %2840 = vmatpush1.xpose.msra.mxu0 0.0
        %2841 = vmatprep.subr.mxu0 0.0
        %2842 = vmatpush1.xpose.msra.mxu0 0.0
        %2843 = vmatprep.subr.mxu0 0.0
        %2844 = vmatpush1.xpose.msra.mxu0 0.0
        %2845 = vmatprep.subr.mxu0 0.0
        %2846 = vmatpush1.xpose.msra.mxu0 0.0
        %2847 = vmatprep.subr.mxu0 0.0
        %2848 = vmatpush1.xpose.msra.mxu0 0.0
        %2849 = vmatprep.subr.mxu0 0.0
        %2850 = vmatpush1.xpose.msra.mxu0 0.0
        %2851 = vmatprep.subr.mxu0 0.0
        %2852 = vmatpush1.xpose.msra.mxu0 0.0
        %2853 = vmatprep.subr.mxu0 0.0
        %2854 = vmatpush1.xpose.msra.mxu0 0.0
        %2855 = vmatprep.subr.mxu0 0.0
        %2856 = vmatpush1.xpose.msra.mxu0 0.0
        %2857 = vmatprep.subr.mxu0 0.0
        %2858 = vmatpush1.xpose.msra.mxu0 0.0
        %2859 = vmatprep.subr.mxu0 0.0
        %2860 = vmatpush1.xpose.msra.mxu0 0.0
        %2861 = vmatprep.subr.mxu0 0.0
        %2862 = vmatpush1.xpose.msra.mxu0 0.0
        %2863 = vmatprep.subr.mxu0 0.0
        %2864 = vmatpush1.xpose.msra.mxu0 0.0
        %2865 = vmatprep.subr.mxu0 0.0
        %2866 = vmatpush1.xpose.msra.mxu0 0.0
        %2867 = vmatprep.subr.mxu0 0.0
        %2868 = vmatpush1.xpose.msra.mxu0 0.0
        %2869 = vmatprep.subr.mxu0 0.0
        %2870 = vmatpush1.xpose.msra.mxu0 0.0
        %2871 = vmatprep.subr.mxu0 0.0
        %2872 = vmatpush1.xpose.msra.mxu0 0.0
        %2873 = vmatprep.subr.mxu0 0.0
        %2874 = vmatpush1.xpose.msra.mxu0 0.0
        %2875 = vmatprep.subr.mxu0 0.0
        %2876 = vmatpush1.xpose.msra.mxu0 0.0
        %2877 = vmatprep.subr.mxu0 0.0
        %2878 = vmatpush1.xpose.msra.mxu0 0.0
        %2879 = vmatprep.subr.mxu0 0.0
        %2880 = vmatpush1.xpose.msra.mxu0 0.0
        %2881 = vmatprep.subr.mxu0 0.0
        %2882 = vmatpush1.xpose.msra.mxu0 0.0
        %2883 = vmatprep.mubr.f32.mxu0 0.0
        %2884 = vmatmul.mubr.f32.gmra.mrb[0].mxu0 %v2815
        %v2885 = vpop.f32.mrb[0].mxu0
        %v2886 = vadd.f32 0.0, %v2885
        %v2887 = vpop.f32.mrb[0].mxu0
        %2888 = vdwg.mxu0
        %v2889 = vmul.f32 %v2886, 0.35355338
        %v2890 = vadd.f32 %v2889, %v1003
        %v2891 = vsel %vm1312, %v2890, -inf
        %2892 = vmax.xlane.f32.xlu0 %v2891
        %v2893 = vpop.xlane.xlu0 %2892
        %v2894 = vsub.f32 %v2890, %v2893
        %v2895 = vmul.f32 %v2894, 1.442695
        %v2896 = vpow.pop %v2895
        %v2897 = vsel %vm1312, %v2896, 0.0
        %2898 = vadd.xlane.f32.xlu0 %v2897
        %v2899 = vpop.xlane.xlu0 %2898
        %v2900 = vrcp.pop %v2899
        %v2901 = vmul.f32 %v2896, %v2900
        %v2903 = vsel %vm1312, %v2901, 0
        %2905 = vmatprep.subr.mxu0 0.0
        %2906 = vmatpush1.msra.mxu0 %v2643
        %2907 = vmatprep.subr.mxu0 0.0
        %2908 = vmatpush1.msra.mxu0 0.0
        %2909 = vmatprep.subr.mxu0 0.0
        %2910 = vmatpush1.msra.mxu0 0.0
        %2911 = vmatprep.subr.mxu0 0.0
        %2912 = vmatpush1.msra.mxu0 0.0
        %2913 = vmatprep.subr.mxu0 0.0
        %2914 = vmatpush1.msra.mxu0 0.0
        %2915 = vmatprep.subr.mxu0 0.0
        %2916 = vmatpush1.msra.mxu0 0.0
        %2917 = vmatprep.subr.mxu0 0.0
        %2918 = vmatpush1.msra.mxu0 0.0
        %2919 = vmatprep.subr.mxu0 0.0
        %2920 = vmatpush1.msra.mxu0 0.0
        %2921 = vmatprep.subr.mxu0 0.0
        %2922 = vmatpush1.msra.mxu0 0.0
        %2923 = vmatprep.subr.mxu0 0.0
        %2924 = vmatpush1.msra.mxu0 0.0
        %2925 = vmatprep.subr.mxu0 0.0
        %2926 = vmatpush1.msra.mxu0 0.0
        %2927 = vmatprep.subr.mxu0 0.0
        %2928 = vmatpush1.msra.mxu0 0.0
        %2929 = vmatprep.subr.mxu0 0.0
        %2930 = vmatpush1.msra.mxu0 0.0
        %2931 = vmatprep.subr.mxu0 0.0
        %2932 = vmatpush1.msra.mxu0 0.0
        %2933 = vmatprep.subr.mxu0 0.0
        %2934 = vmatpush1.msra.mxu0 0.0
        %2935 = vmatprep.subr.mxu0 0.0
        %2936 = vmatpush1.msra.mxu0 0.0
        %2937 = vmatprep.subr.mxu0 0.0
        %2938 = vmatpush1.msra.mxu0 0.0
        %2939 = vmatprep.subr.mxu0 0.0
        %2940 = vmatpush1.msra.mxu0 0.0
        %2941 = vmatprep.subr.mxu0 0.0
        %2942 = vmatpush1.msra.mxu0 0.0
        %2943 = vmatprep.subr.mxu0 0.0
        %2944 = vmatpush1.msra.mxu0 0.0
        %2945 = vmatprep.subr.mxu0 0.0
        %2946 = vmatpush1.msra.mxu0 0.0
        %2947 = vmatprep.subr.mxu0 0.0
        %2948 = vmatpush1.msra.mxu0 0.0
        %2949 = vmatprep.subr.mxu0 0.0
        %2950 = vmatpush1.msra.mxu0 0.0
        %2951 = vmatprep.subr.mxu0 0.0
        %2952 = vmatpush1.msra.mxu0 0.0
        %2953 = vmatprep.subr.mxu0 0.0
        %2954 = vmatpush1.msra.mxu0 0.0
        %2955 = vmatprep.subr.mxu0 0.0
        %2956 = vmatpush1.msra.mxu0 0.0
        %2957 = vmatprep.subr.mxu0 0.0
        %2958 = vmatpush1.msra.mxu0 0.0
        %2959 = vmatprep.subr.mxu0 0.0
        %2960 = vmatpush1.msra.mxu0 0.0
        %2961 = vmatprep.subr.mxu0 0.0
        %2962 = vmatpush1.msra.mxu0 0.0
        %2963 = vmatprep.subr.mxu0 0.0
        %2964 = vmatpush1.msra.mxu0 0.0
        %2965 = vmatprep.subr.mxu0 0.0
        %2966 = vmatpush1.msra.mxu0 0.0
        %2967 = vmatprep.subr.mxu0 0.0
        %2968 = vmatpush1.msra.mxu0 0.0
        %2969 = vmatprep.mubr.f32.mxu0 0.0
        %2970 = vmatmul.mubr.f32.gmra.mrb[0].mxu0 %v2903
        %v2971 = vpop.f32.mrb[0].mxu0
        %v2972 = vadd.f32 0.0, %v2971
        %v2973 = vpop.f32.mrb[0].mxu0
        %2974 = vdwg.mxu0
        %v2975 = vmul.f32 %v2972, %v1013
        %v2976 = vadd.f32 %v2810, %v2975
        %2977 = vrot.lane.b32.xlu0 %v2602, 112
        %v2978 = vpop.permute.xlu0 %2977
        %2979 = vrot.lane.b32.xlu0 %v2604, 112
        %v2980 = vpop.permute.xlu0 %2979
        %v2981 = vsel %vm1312, %v2978, 0
        %v2983 = vsel %vm1312, %v2980, 0
        %2985 = vmatprep.subr.mxu0 0.0
        %2986 = vmatpush1.xpose.msra.mxu0 %v2983
        %2987 = vmatprep.subr.mxu0 0.0
        %2988 = vmatpush1.xpose.msra.mxu0 0.0
        %2989 = vmatprep.subr.mxu0 0.0
        %2990 = vmatpush1.xpose.msra.mxu0 0.0
        %2991 = vmatprep.subr.mxu0 0.0
        %2992 = vmatpush1.xpose.msra.mxu0 0.0
        %2993 = vmatprep.subr.mxu0 0.0
        %2994 = vmatpush1.xpose.msra.mxu0 0.0
        %2995 = vmatprep.subr.mxu0 0.0
        %2996 = vmatpush1.xpose.msra.mxu0 0.0
        %2997 = vmatprep.subr.mxu0 0.0
        %2998 = vmatpush1.xpose.msra.mxu0 0.0
        %2999 = vmatprep.subr.mxu0 0.0
        %3000 = vmatpush1.xpose.msra.mxu0 0.0
        %3001 = vmatprep.subr.mxu0 0.0
        %3002 = vmatpush1.xpose.msra.mxu0 0.0
        %3003 = vmatprep.subr.mxu0 0.0
        %3004 = vmatpush1.xpose.msra.mxu0 0.0
        %3005 = vmatprep.subr.mxu0 0.0
        %3006 = vmatpush1.xpose.msra.mxu0 0.0
        %3007 = vmatprep.subr.mxu0 0.0
        %3008 = vmatpush1.xpose.msra.mxu0 0.0
        %3009 = vmatprep.subr.mxu0 0.0
        %3010 = vmatpush1.xpose.msra.mxu0 0.0
        %3011 = vmatprep.subr.mxu0 0.0
        %3012 = vmatpush1.xpose.msra.mxu0 0.0
        %3013 = vmatprep.subr.mxu0 0.0
        %3014 = vmatpush1.xpose.msra.mxu0 0.0
        %3015 = vmatprep.subr.mxu0 0.0
        %3016 = vmatpush1.xpose.msra.mxu0 0.0
        %3017 = vmatprep.subr.mxu0 0.0
        %3018 = vmatpush1.xpose.msra.mxu0 0.0
        %3019 = vmatprep.subr.mxu0 0.0
        %3020 = vmatpush1.xpose.msra.mxu0 0.0
        %3021 = vmatprep.subr.mxu0 0.0
        %3022 = vmatpush1.xpose.msra.mxu0 0.0
        %3023 = vmatprep.subr.mxu0 0.0
        %3024 = vmatpush1.xpose.msra.mxu0 0.0
        %3025 = vmatprep.subr.mxu0 0.0
        %3026 = vmatpush1.xpose.msra.mxu0 0.0
        %3027 = vmatprep.subr.mxu0 0.0
        %3028 = vmatpush1.xpose.msra.mxu0 0.0
        %3029 = vmatprep.subr.mxu0 0.0
        %3030 = vmatpush1.xpose.msra.mxu0 0.0
        %3031 = vmatprep.subr.mxu0 0.0
        %3032 = vmatpush1.xpose.msra.mxu0 0.0
        %3033 = vmatprep.subr.mxu0 0.0
        %3034 = vmatpush1.xpose.msra.mxu0 0.0
        %3035 = vmatprep.subr.mxu0 0.0
        %3036 = vmatpush1.xpose.msra.mxu0 0.0
        %3037 = vmatprep.subr.mxu0 0.0
        %3038 = vmatpush1.xpose.msra.mxu0 0.0
        %3039 = vmatprep.subr.mxu0 0.0
        %3040 = vmatpush1.xpose.msra.mxu0 0.0
        %3041 = vmatprep.subr.mxu0 0.0
        %3042 = vmatpush1.xpose.msra.mxu0 0.0
        %3043 = vmatprep.subr.mxu0 0.0
        %3044 = vmatpush1.xpose.msra.mxu0 0.0
        %3045 = vmatprep.subr.mxu0 0.0
        %3046 = vmatpush1.xpose.msra.mxu0 0.0
        %3047 = vmatprep.subr.mxu0 0.0
        %3048 = vmatpush1.xpose.msra.mxu0 0.0
        %3049 = vmatprep.mubr.f32.mxu0 0.0
        %3050 = vmatmul.mubr.f32.gmra.mrb[0].mxu0 %v2981
        %v3051 = vpop.f32.mrb[0].mxu0
        %v3052 = vadd.f32 0.0, %v3051
        %v3053 = vpop.f32.mrb[0].mxu0
        %3054 = vdwg.mxu0
        %v3055 = vmul.f32 %v3052, 0.35355338
        %v3056 = vadd.f32 %v3055, %v1003
        %v3057 = vsel %vm1312, %v3056, -inf
        %3058 = vmax.xlane.f32.xlu0 %v3057
        %v3059 = vpop.xlane.xlu0 %3058
        %v3060 = vsub.f32 %v3056, %v3059
        %v3061 = vmul.f32 %v3060, 1.442695
        %v3062 = vpow.pop %v3061
        %v3063 = vsel %vm1312, %v3062, 0.0
        %3064 = vadd.xlane.f32.xlu0 %v3063
        %v3065 = vpop.xlane.xlu0 %3064
        %v3066 = vrcp.pop %v3065
        %v3067 = vmul.f32 %v3062, %v3066
        %v3069 = vsel %vm1312, %v3067, 0
        %3071 = vmatprep.subr.mxu0 0.0
        %3072 = vmatpush1.msra.mxu0 %v2643
        %3073 = vmatprep.subr.mxu0 0.0
        %3074 = vmatpush1.msra.mxu0 0.0
        %3075 = vmatprep.subr.mxu0 0.0
        %3076 = vmatpush1.msra.mxu0 0.0
        %3077 = vmatprep.subr.mxu0 0.0
        %3078 = vmatpush1.msra.mxu0 0.0
        %3079 = vmatprep.subr.mxu0 0.0
        %3080 = vmatpush1.msra.mxu0 0.0
        %3081 = vmatprep.subr.mxu0 0.0
        %3082 = vmatpush1.msra.mxu0 0.0
        %3083 = vmatprep.subr.mxu0 0.0
        %3084 = vmatpush1.msra.mxu0 0.0
        %3085 = vmatprep.subr.mxu0 0.0
        %3086 = vmatpush1.msra.mxu0 0.0
        %3087 = vmatprep.subr.mxu0 0.0
        %3088 = vmatpush1.msra.mxu0 0.0
        %3089 = vmatprep.subr.mxu0 0.0
        %3090 = vmatpush1.msra.mxu0 0.0
        %3091 = vmatprep.subr.mxu0 0.0
        %3092 = vmatpush1.msra.mxu0 0.0
        %3093 = vmatprep.subr.mxu0 0.0
        %3094 = vmatpush1.msra.mxu0 0.0
        %3095 = vmatprep.subr.mxu0 0.0
        %3096 = vmatpush1.msra.mxu0 0.0
        %3097 = vmatprep.subr.mxu0 0.0
        %3098 = vmatpush1.msra.mxu0 0.0
        %3099 = vmatprep.subr.mxu0 0.0
        %3100 = vmatpush1.msra.mxu0 0.0
        %3101 = vmatprep.subr.mxu0 0.0
        %3102 = vmatpush1.msra.mxu0 0.0
        %3103 = vmatprep.subr.mxu0 0.0
        %3104 = vmatpush1.msra.mxu0 0.0
        %3105 = vmatprep.subr.mxu0 0.0
        %3106 = vmatpush1.msra.mxu0 0.0
        %3107 = vmatprep.subr.mxu0 0.0
        %3108 = vmatpush1.msra.mxu0 0.0
        %3109 = vmatprep.subr.mxu0 0.0
        %3110 = vmatpush1.msra.mxu0 0.0
        %3111 = vmatprep.subr.mxu0 0.0
        %3112 = vmatpush1.msra.mxu0 0.0
        %3113 = vmatprep.subr.mxu0 0.0
        %3114 = vmatpush1.msra.mxu0 0.0
        %3115 = vmatprep.subr.mxu0 0.0
        %3116 = vmatpush1.msra.mxu0 0.0
        %3117 = vmatprep.subr.mxu0 0.0
        %3118 = vmatpush1.msra.mxu0 0.0
        %3119 = vmatprep.subr.mxu0 0.0
        %3120 = vmatpush1.msra.mxu0 0.0
        %3121 = vmatprep.subr.mxu0 0.0
        %3122 = vmatpush1.msra.mxu0 0.0
        %3123 = vmatprep.subr.mxu0 0.0
        %3124 = vmatpush1.msra.mxu0 0.0
        %3125 = vmatprep.subr.mxu0 0.0
        %3126 = vmatpush1.msra.mxu0 0.0
        %3127 = vmatprep.subr.mxu0 0.0
        %3128 = vmatpush1.msra.mxu0 0.0
        %3129 = vmatprep.subr.mxu0 0.0
        %3130 = vmatpush1.msra.mxu0 0.0
        %3131 = vmatprep.subr.mxu0 0.0
        %3132 = vmatpush1.msra.mxu0 0.0
        %3133 = vmatprep.subr.mxu0 0.0
        %3134 = vmatpush1.msra.mxu0 0.0
        %3135 = vmatprep.mubr.f32.mxu0 0.0
        %3136 = vmatmul.mubr.f32.gmra.mrb[0].mxu0 %v3069
        %v3137 = vpop.f32.mrb[0].mxu0
        %v3138 = vadd.f32 0.0, %v3137
        %v3139 = vpop.f32.mrb[0].mxu0
        %3140 = vdwg.mxu0
        %v3141 = vmul.f32 %v3138, %v1018
        %v3142 = vadd.f32 %v2976, %v3141
        %3143 = vrot.lane.b32.xlu0 %v2602, 104
        %v3144 = vpop.permute.xlu0 %3143
        %3145 = vrot.lane.b32.xlu0 %v2604, 104
        %v3146 = vpop.permute.xlu0 %3145
        %v3147 = vsel %vm1312, %v3144, 0
        %v3149 = vsel %vm1312, %v3146, 0
        %3151 = vmatprep.subr.mxu0 0.0
        %3152 = vmatpush1.xpose.msra.mxu0 %v3149
        %3153 = vmatprep.subr.mxu0 0.0
        %3154 = vmatpush1.xpose.msra.mxu0 0.0
        %3155 = vmatprep.subr.mxu0 0.0
        %3156 = vmatpush1.xpose.msra.mxu0 0.0
        %3157 = vmatprep.subr.mxu0 0.0
        %3158 = vmatpush1.xpose.msra.mxu0 0.0
        %3159 = vmatprep.subr.mxu0 0.0
        %3160 = vmatpush1.xpose.msra.mxu0 0.0
        %3161 = vmatprep.subr.mxu0 0.0
        %3162 = vmatpush1.xpose.msra.mxu0 0.0
        %3163 = vmatprep.subr.mxu0 0.0
        %3164 = vmatpush1.xpose.msra.mxu0 0.0
        %3165 = vmatprep.subr.mxu0 0.0
        %3166 = vmatpush1.xpose.msra.mxu0 0.0
        %3167 = vmatprep.subr.mxu0 0.0
        %3168 = vmatpush1.xpose.msra.mxu0 0.0
        %3169 = vmatprep.subr.mxu0 0.0
        %3170 = vmatpush1.xpose.msra.mxu0 0.0
        %3171 = vmatprep.subr.mxu0 0.0
        %3172 = vmatpush1.xpose.msra.mxu0 0.0
        %3173 = vmatprep.subr.mxu0 0.0
        %3174 = vmatpush1.xpose.msra.mxu0 0.0
        %3175 = vmatprep.subr.mxu0 0.0
        %3176 = vmatpush1.xpose.msra.mxu0 0.0
        %3177 = vmatprep.subr.mxu0 0.0
        %3178 = vmatpush1.xpose.msra.mxu0 0.0
        %3179 = vmatprep.subr.mxu0 0.0
        %3180 = vmatpush1.xpose.msra.mxu0 0.0
        %3181 = vmatprep.subr.mxu0 0.0
        %3182 = vmatpush1.xpose.msra.mxu0 0.0
        %3183 = vmatprep.subr.mxu0 0.0
        %3184 = vmatpush1.xpose.msra.mxu0 0.0
        %3185 = vmatprep.subr.mxu0 0.0
        %3186 = vmatpush1.xpose.msra.mxu0 0.0
        %3187 = vmatprep.subr.mxu0 0.0
        %3188 = vmatpush1.xpose.msra.mxu0 0.0
        %3189 = vmatprep.subr.mxu0 0.0
        %3190 = vmatpush1.xpose.msra.mxu0 0.0
        %3191 = vmatprep.subr.mxu0 0.0
        %3192 = vmatpush1.xpose.msra.mxu0 0.0
        %3193 = vmatprep.subr.mxu0 0.0
        %3194 = vmatpush1.xpose.msra.mxu0 0.0
        %3195 = vmatprep.subr.mxu0 0.0
        %3196 = vmatpush1.xpose.msra.mxu0 0.0
        %3197 = vmatprep.subr.mxu0 0.0
        %3198 = vmatpush1.xpose.msra.mxu0 0.0
        %3199 = vmatprep.subr.mxu0 0.0
        %3200 = vmatpush1.xpose.msra.mxu0 0.0
        %3201 = vmatprep.subr.mxu0 0.0
        %3202 = vmatpush1.xpose.msra.mxu0 0.0
        %3203 = vmatprep.subr.mxu0 0.0
        %3204 = vmatpush1.xpose.msra.mxu0 0.0
        %3205 = vmatprep.subr.mxu0 0.0
        %3206 = vmatpush1.xpose.msra.mxu0 0.0
        %3207 = vmatprep.subr.mxu0 0.0
        %3208 = vmatpush1.xpose.msra.mxu0 0.0
        %3209 = vmatprep.subr.mxu0 0.0
        %3210 = vmatpush1.xpose.msra.mxu0 0.0
        %3211 = vmatprep.subr.mxu0 0.0
        %3212 = vmatpush1.xpose.msra.mxu0 0.0
        %3213 = vmatprep.subr.mxu0 0.0
        %3214 = vmatpush1.xpose.msra.mxu0 0.0
        %3215 = vmatprep.mubr.f32.mxu0 0.0
        %3216 = vmatmul.mubr.f32.gmra.mrb[0].mxu0 %v3147
        %v3217 = vpop.f32.mrb[0].mxu0
        %v3218 = vadd.f32 0.0, %v3217
        %v3219 = vpop.f32.mrb[0].mxu0
        %3220 = vdwg.mxu0
        %v3221 = vmul.f32 %v3218, 0.35355338
        %v3222 = vadd.f32 %v3221, %v1003
        %v3223 = vsel %vm1312, %v3222, -inf
        %3224 = vmax.xlane.f32.xlu0 %v3223
        %v3225 = vpop.xlane.xlu0 %3224
        %v3226 = vsub.f32 %v3222, %v3225
        %v3227 = vmul.f32 %v3226, 1.442695
        %v3228 = vpow.pop %v3227
        %v3229 = vsel %vm1312, %v3228, 0.0
        %3230 = vadd.xlane.f32.xlu0 %v3229
        %v3231 = vpop.xlane.xlu0 %3230
        %v3232 = vrcp.pop %v3231
        %v3233 = vmul.f32 %v3228, %v3232
        %v3235 = vsel %vm1312, %v3233, 0
        %3237 = vmatprep.subr.mxu0 0.0
        %3238 = vmatpush1.msra.mxu0 %v2643
        %3239 = vmatprep.subr.mxu0 0.0
        %3240 = vmatpush1.msra.mxu0 0.0
        %3241 = vmatprep.subr.mxu0 0.0
        %3242 = vmatpush1.msra.mxu0 0.0
        %3243 = vmatprep.subr.mxu0 0.0
        %3244 = vmatpush1.msra.mxu0 0.0
        %3245 = vmatprep.subr.mxu0 0.0
        %3246 = vmatpush1.msra.mxu0 0.0
        %3247 = vmatprep.subr.mxu0 0.0
        %3248 = vmatpush1.msra.mxu0 0.0
        %3249 = vmatprep.subr.mxu0 0.0
        %3250 = vmatpush1.msra.mxu0 0.0
        %3251 = vmatprep.subr.mxu0 0.0
        %3252 = vmatpush1.msra.mxu0 0.0
        %3253 = vmatprep.subr.mxu0 0.0
        %3254 = vmatpush1.msra.mxu0 0.0
        %3255 = vmatprep.subr.mxu0 0.0
        %3256 = vmatpush1.msra.mxu0 0.0
        %3257 = vmatprep.subr.mxu0 0.0
        %3258 = vmatpush1.msra.mxu0 0.0
        %3259 = vmatprep.subr.mxu0 0.0
        %3260 = vmatpush1.msra.mxu0 0.0
        %3261 = vmatprep.subr.mxu0 0.0
        %3262 = vmatpush1.msra.mxu0 0.0
        %3263 = vmatprep.subr.mxu0 0.0
        %3264 = vmatpush1.msra.mxu0 0.0
        %3265 = vmatprep.subr.mxu0 0.0
        %3266 = vmatpush1.msra.mxu0 0.0
        %3267 = vmatprep.subr.mxu0 0.0
        %3268 = vmatpush1.msra.mxu0 0.0
        %3269 = vmatprep.subr.mxu0 0.0
        %3270 = vmatpush1.msra.mxu0 0.0
        %3271 = vmatprep.subr.mxu0 0.0
        %3272 = vmatpush1.msra.mxu0 0.0
        %3273 = vmatprep.subr.mxu0 0.0
        %3274 = vmatpush1.msra.mxu0 0.0
        %3275 = vmatprep.subr.mxu0 0.0
        %3276 = vmatpush1.msra.mxu0 0.0
        %3277 = vmatprep.subr.mxu0 0.0
        %3278 = vmatpush1.msra.mxu0 0.0
        %3279 = vmatprep.subr.mxu0 0.0
        %3280 = vmatpush1.msra.mxu0 0.0
        %3281 = vmatprep.subr.mxu0 0.0
        %3282 = vmatpush1.msra.mxu0 0.0
        %3283 = vmatprep.subr.mxu0 0.0
        %3284 = vmatpush1.msra.mxu0 0.0
        %3285 = vmatprep.subr.mxu0 0.0
        %3286 = vmatpush1.msra.mxu0 0.0
        %3287 = vmatprep.subr.mxu0 0.0
        %3288 = vmatpush1.msra.mxu0 0.0
        %3289 = vmatprep.subr.mxu0 0.0
        %3290 = vmatpush1.msra.mxu0 0.0
        %3291 = vmatprep.subr.mxu0 0.0
        %3292 = vmatpush1.msra.mxu0 0.0
        %3293 = vmatprep.subr.mxu0 0.0
        %3294 = vmatpush1.msra.mxu0 0.0
        %3295 = vmatprep.subr.mxu0 0.0
        %3296 = vmatpush1.msra.mxu0 0.0
        %3297 = vmatprep.subr.mxu0 0.0
        %3298 = vmatpush1.msra.mxu0 0.0
        %3299 = vmatprep.subr.mxu0 0.0
        %3300 = vmatpush1.msra.mxu0 0.0
        %3301 = vmatprep.mubr.f32.mxu0 0.0
        %3302 = vmatmul.mubr.f32.gmra.mrb[0].mxu0 %v3235
        %v3303 = vpop.f32.mrb[0].mxu0
        %v3304 = vadd.f32 0.0, %v3303
        %v3305 = vpop.f32.mrb[0].mxu0
        %3306 = vdwg.mxu0
        %v3307 = vmul.f32 %v3304, %v1022
        %v3308 = vadd.f32 %v3142, %v3307
        %s3309 = scalar_lea.vmem %s9, 64
        %v3310 = vld [vmem:[%s3309] sm:$0xf]
        %v3311 = vld [vmem:[%s3309 + $0x4] sm:$0xf]
        %v3312 = vld [vmem:[%s3309 + $0x8] sm:$0xf]
        %v3313 = vld [vmem:[%s3309 + $0xc] sm:$0xf]
        %v3314 = vld [vmem:[%s3309 + $0x10] sm:$0xf]
        %v3315 = vld [vmem:[%s3309 + $0x14] sm:$0xf]
        %v3316 = vld [vmem:[%s3309 + $0x18] sm:$0xf]
        %v3317 = vld [vmem:[%s3309 + $0x1c] sm:$0xf]
        %v3318 = vld [vmem:[%s3309 + $0x20] sm:$0xf]
        %v3319 = vld [vmem:[%s3309 + $0x24] sm:$0xf]
        %v3320 = vld [vmem:[%s3309 + $0x28] sm:$0xf]
        %v3321 = vld [vmem:[%s3309 + $0x2c] sm:$0xf]
        %v3322 = vld [vmem:[%s3309 + $0x30] sm:$0xf]
        %v3323 = vld [vmem:[%s3309 + $0x34] sm:$0xf]
        %v3324 = vld [vmem:[%s3309 + $0x38] sm:$0xf]
        %v3325 = vld [vmem:[%s3309 + $0x3c] sm:$0xf]
        %v3326 = vpack.c.bf16 %v3308, %v3308
        %s3327 = scalar_lea.vmem %s10, 1
        %v3328 = vld [vmem:[%s3327] sm:$0x1]
        %v3330 = vlaneseq
        %v3331 = vshrl.u32 %v3330, 7
        %v3332 = vsub.s32 0, %v3331
        %v3333 = vrot.slane %v3328, %v3332
        %v3351 = vunpack.c.l.b16 %v3310
        %v3352 = vunpack.c.l.b16 %v3311
        %v3353 = vunpack.c.l.b16 %v3312
        %v3354 = vunpack.c.l.b16 %v3313
        %v3355 = vunpack.c.l.b16 %v3314
        %v3356 = vunpack.c.l.b16 %v3315
        %v3357 = vunpack.c.l.b16 %v3316
        %v3358 = vunpack.c.l.b16 %v3317
        %v3359 = vunpack.c.l.b16 %v3318
        %v3360 = vunpack.c.l.b16 %v3319
        %v3361 = vunpack.c.l.b16 %v3320
        %v3362 = vunpack.c.l.b16 %v3321
        %v3363 = vunpack.c.l.b16 %v3322
        %v3364 = vunpack.c.l.b16 %v3323
        %v3365 = vunpack.c.l.b16 %v3324
        %v3366 = vunpack.c.l.b16 %v3325
        %v3367 = vpack.c.b16 %v3352, %v3351
        %v3368 = vpack.c.b16 %v3354, %v3353
        %v3369 = vpack.c.b16 %v3356, %v3355
        %v3370 = vpack.c.b16 %v3358, %v3357
        %v3371 = vpack.c.b16 %v3360, %v3359
        %v3372 = vpack.c.b16 %v3362, %v3361
        %v3373 = vpack.c.b16 %v3364, %v3363
        %v3374 = vpack.c.b16 %v3366, %v3365
        %3383 = vmatprep.subr.bf16.mxu0 0
        %3384 = vmatpush1.bf16.msra.mxu0 %v3367
        %3385 = vmatprep.subr.bf16.mxu0 0
        %3386 = vmatpush1.bf16.msra.mxu0 %v3368
        %3387 = vmatprep.subr.bf16.mxu0 0
        %3388 = vmatpush1.bf16.msra.mxu0 %v3369
        %3389 = vmatprep.subr.bf16.mxu0 0
        %3390 = vmatpush1.bf16.msra.mxu0 %v3370
        %3391 = vmatprep.subr.bf16.mxu0 0
        %3392 = vmatpush1.bf16.msra.mxu0 %v3371
        %3393 = vmatprep.subr.bf16.mxu0 0
        %3394 = vmatpush1.bf16.msra.mxu0 %v3372
        %3395 = vmatprep.subr.bf16.mxu0 0
        %3396 = vmatpush1.bf16.msra.mxu0 %v3373
        %3397 = vmatprep.subr.bf16.mxu0 0
        %3398 = vmatpush1.bf16.msra.mxu0 %v3374
        %3399 = vmatprep.subr.bf16.mxu0 0
        %3400 = vmatpush1.bf16.msra.mxu0 0
        %3401 = vmatprep.subr.bf16.mxu0 0
        %3402 = vmatpush1.bf16.msra.mxu0 0
        %3403 = vmatprep.subr.bf16.mxu0 0
        %3404 = vmatpush1.bf16.msra.mxu0 0
        %3405 = vmatprep.subr.bf16.mxu0 0
        %3406 = vmatpush1.bf16.msra.mxu0 0
        %3407 = vmatprep.subr.bf16.mxu0 0
        %3408 = vmatpush1.bf16.msra.mxu0 0
        %3409 = vmatprep.subr.bf16.mxu0 0
        %3410 = vmatpush1.bf16.msra.mxu0 0
        %3411 = vmatprep.subr.bf16.mxu0 0
        %3412 = vmatpush1.bf16.msra.mxu0 0
        %3413 = vmatprep.subr.bf16.mxu0 0
        %3414 = vmatpush1.bf16.msra.mxu0 0
        %3415 = vmatprep.mubr.bf16.mxu0 0
        %3416 = vmatmul.mubr.bf16.gmra.mrb[0].mxu0 %v3326
        %v3417 = vpop.f32.mrb[0].mxu0
        %v3418 = vadd.f32 %v3333, %v3417
        %v3419 = vpop.f32.mrb[0].mxu0
        %v3420 = vpop.f32.mrb[0].mxu0
        %v3421 = vpop.f32.mrb[0].mxu0
        %3422 = vdwg.mxu0
        %v3423 = vadd.f32 %v2355, %v3418
        %v3424 = vlaneseq
        %v3425 = vshrl.u32 %v3424, 7
        %v3426 = vsub.s32 0, %v3425
        %v3427 = vrot.slane %v985, %v3426
        %v3428 = vadd.f32 %v3423, %v3427
        %s3429 = scalar_lea.vmem %s13, 1
        %v3430 = vld [vmem:[%s3429] sm:$0x1]
        %s3431 = scalar_lea.vmem %s14, 1
        %v3432 = vld [vmem:[%s3431] sm:$0x1]
        %v3433 = vmul.f32 %v3428, %v774
        %3434 = vadd.xlane.f32.xlu0 %v3433
        %v3435 = vpop.xlane.xlu0 %3434
        %v3436 = vmul.f32 %v3435, 0.03125
        %v3437 = vsub.f32 %v3433, %v3436
        %v3438 = vmul.f32 %v3437, %v774
        %v3439 = vmul.f32 %v3438, %v3438
        %3440 = vadd.xlane.f32.xlu0 %v3439
        %v3441 = vpop.xlane.xlu0 %3440
        %v3442 = vmul.f32 %v3441, 0.03125
        %v3443 = vadd.f32 %v3442, 1e-05
        %v3444 = vrsqrt.pop %v3443
        %v3445 = vmul.f32 %v3438, %v3444
        %v3447 = vlaneseq
        %v3448 = vshrl.u32 %v3447, 7
        %v3449 = vsub.s32 0, %v3448
        %v3450 = vrot.slane %v3430, %v3449
        %v3452 = vmul.f32 %v3445, %v3450
        %v3454 = vlaneseq
        %v3455 = vshrl.u32 %v3454, 7
        %v3456 = vsub.s32 0, %v3455
        %v3457 = vrot.slane %v3432, %v3456
        %v3459 = vadd.f32 %v3452, %v3457
        %s3460 = scalar_lea.vmem [#allocation6], 64
        %v3461 = vld [vmem:[%s3460] sm:$0xf]
        %v3462 = vld [vmem:[%s3460 + $0x4] sm:$0xf]
        %v3463 = vld [vmem:[%s3460 + $0x8] sm:$0xf]
        %v3464 = vld [vmem:[%s3460 + $0xc] sm:$0xf]
        %v3465 = vld [vmem:[%s3460 + $0x10] sm:$0xf]
        %v3466 = vld [vmem:[%s3460 + $0x14] sm:$0xf]
        %v3467 = vld [vmem:[%s3460 + $0x18] sm:$0xf]
        %v3468 = vld [vmem:[%s3460 + $0x1c] sm:$0xf]
        %v3469 = vld [vmem:[%s3460 + $0x20] sm:$0xf]
        %v3470 = vld [vmem:[%s3460 + $0x24] sm:$0xf]
        %v3471 = vld [vmem:[%s3460 + $0x28] sm:$0xf]
        %v3472 = vld [vmem:[%s3460 + $0x2c] sm:$0xf]
        %v3473 = vld [vmem:[%s3460 + $0x30] sm:$0xf]
        %v3474 = vld [vmem:[%s3460 + $0x34] sm:$0xf]
        %v3475 = vld [vmem:[%s3460 + $0x38] sm:$0xf]
        %v3476 = vld [vmem:[%s3460 + $0x3c] sm:$0xf]
        %v3477 = vpack.c.bf16 %v3459, %v3459
        %s3478 = scalar_lea.vmem %s16, 1
        %v3479 = vld [vmem:[%s3478] sm:$0x1]
        %v3481 = vlaneseq
        %v3482 = vshrl.u32 %v3481, 7
        %v3483 = vsub.s32 0, %v3482
        %v3484 = vrot.slane %v3479, %v3483
        %v3502 = vunpack.c.l.b16 %v3461
        %v3503 = vunpack.c.l.b16 %v3462
        %v3504 = vunpack.c.l.b16 %v3463
        %v3505 = vunpack.c.l.b16 %v3464
        %v3506 = vunpack.c.l.b16 %v3465
        %v3507 = vunpack.c.l.b16 %v3466
        %v3508 = vunpack.c.l.b16 %v3467
        %v3509 = vunpack.c.l.b16 %v3468
        %v3510 = vunpack.c.l.b16 %v3469
        %v3511 = vunpack.c.l.b16 %v3470
        %v3512 = vunpack.c.l.b16 %v3471
        %v3513 = vunpack.c.l.b16 %v3472
        %v3514 = vunpack.c.l.b16 %v3473
        %v3515 = vunpack.c.l.b16 %v3474
        %v3516 = vunpack.c.l.b16 %v3475
        %v3517 = vunpack.c.l.b16 %v3476
        %v3518 = vpack.c.b16 %v3503, %v3502
        %v3519 = vpack.c.b16 %v3505, %v3504
        %v3520 = vpack.c.b16 %v3507, %v3506
        %v3521 = vpack.c.b16 %v3509, %v3508
        %v3522 = vpack.c.b16 %v3511, %v3510
        %v3523 = vpack.c.b16 %v3513, %v3512
        %v3524 = vpack.c.b16 %v3515, %v3514
        %v3525 = vpack.c.b16 %v3517, %v3516
        %3534 = vmatprep.subr.bf16.mxu0 0
        %3535 = vmatpush1.bf16.msra.mxu0 %v3518
        %3536 = vmatprep.subr.bf16.mxu0 0
        %3537 = vmatpush1.bf16.msra.mxu0 %v3519
        %3538 = vmatprep.subr.bf16.mxu0 0
        %3539 = vmatpush1.bf16.msra.mxu0 %v3520
        %3540 = vmatprep.subr.bf16.mxu0 0
        %3541 = vmatpush1.bf16.msra.mxu0 %v3521
        %3542 = vmatprep.subr.bf16.mxu0 0
        %3543 = vmatpush1.bf16.msra.mxu0 %v3522
        %3544 = vmatprep.subr.bf16.mxu0 0
        %3545 = vmatpush1.bf16.msra.mxu0 %v3523
        %3546 = vmatprep.subr.bf16.mxu0 0
        %3547 = vmatpush1.bf16.msra.mxu0 %v3524
        %3548 = vmatprep.subr.bf16.mxu0 0
        %3549 = vmatpush1.bf16.msra.mxu0 %v3525
        %3550 = vmatprep.subr.bf16.mxu0 0
        %3551 = vmatpush1.bf16.msra.mxu0 0
        %3552 = vmatprep.subr.bf16.mxu0 0
        %3553 = vmatpush1.bf16.msra.mxu0 0
        %3554 = vmatprep.subr.bf16.mxu0 0
        %3555 = vmatpush1.bf16.msra.mxu0 0
        %3556 = vmatprep.subr.bf16.mxu0 0
        %3557 = vmatpush1.bf16.msra.mxu0 0
        %3558 = vmatprep.subr.bf16.mxu0 0
        %3559 = vmatpush1.bf16.msra.mxu0 0
        %3560 = vmatprep.subr.bf16.mxu0 0
        %3561 = vmatpush1.bf16.msra.mxu0 0
        %3562 = vmatprep.subr.bf16.mxu0 0
        %3563 = vmatpush1.bf16.msra.mxu0 0
        %3564 = vmatprep.subr.bf16.mxu0 0
        %3565 = vmatpush1.bf16.msra.mxu0 0
        %3566 = vmatprep.mubr.bf16.mxu0 0
        %3567 = vmatmul.mubr.bf16.gmra.mrb[0].mxu0 %v3477
        %v3568 = vpop.f32.mrb[0].mxu0
        %v3569 = vadd.f32 %v3484, %v3568
        %v3570 = vpop.f32.mrb[0].mxu0
        %v3571 = vpop.f32.mrb[0].mxu0
        %v3572 = vpop.f32.mrb[0].mxu0
        %3573 = vdwg.mxu0
        %v3574 = vmul.f32 %v3569, 0.5
        %v3575 = vmul.f32 %v3569, 0.044715
        %v3576 = vmul.f32 %v3575, %v3569
        %v3577 = vmul.f32 %v3576, %v3569
        %v3578 = vadd.f32 %v3569, %v3577
        %v3579 = vmul.f32 %v3578, 0.7978846
        %v3580 = vtanh.pop %v3579
        %v3581 = vadd.f32 %v3580, 1.0
        %v3582 = vmul.f32 %v3574, %v3581
        %s3583 = scalar_lea.vmem [#allocation7], 64
        %v3584 = vld [vmem:[%s3583] sm:$0xf]
        %v3585 = vld [vmem:[%s3583 + $0x4] sm:$0xf]
        %v3586 = vld [vmem:[%s3583 + $0x8] sm:$0xf]
        %v3587 = vld [vmem:[%s3583 + $0xc] sm:$0xf]
        %v3588 = vld [vmem:[%s3583 + $0x10] sm:$0xf]
        %v3589 = vld [vmem:[%s3583 + $0x14] sm:$0xf]
        %v3590 = vld [vmem:[%s3583 + $0x18] sm:$0xf]
        %v3591 = vld [vmem:[%s3583 + $0x1c] sm:$0xf]
        %v3592 = vld [vmem:[%s3583 + $0x20] sm:$0xf]
        %v3593 = vld [vmem:[%s3583 + $0x24] sm:$0xf]
        %v3594 = vld [vmem:[%s3583 + $0x28] sm:$0xf]
        %v3595 = vld [vmem:[%s3583 + $0x2c] sm:$0xf]
        %v3596 = vld [vmem:[%s3583 + $0x30] sm:$0xf]
        %v3597 = vld [vmem:[%s3583 + $0x34] sm:$0xf]
        %v3598 = vld [vmem:[%s3583 + $0x38] sm:$0xf]
        %v3599 = vld [vmem:[%s3583 + $0x3c] sm:$0xf]
        %v3600 = vpack.c.bf16 %v3582, %v3582
        %v3617 = vunpack.c.l.b16 %v3584
        %v3618 = vunpack.c.l.b16 %v3585
        %v3619 = vunpack.c.l.b16 %v3586
        %v3620 = vunpack.c.l.b16 %v3587
        %v3621 = vunpack.c.l.b16 %v3588
        %v3622 = vunpack.c.l.b16 %v3589
        %v3623 = vunpack.c.l.b16 %v3590
        %v3624 = vunpack.c.l.b16 %v3591
        %v3625 = vunpack.c.l.b16 %v3592
        %v3626 = vunpack.c.l.b16 %v3593
        %v3627 = vunpack.c.l.b16 %v3594
        %v3628 = vunpack.c.l.b16 %v3595
        %v3629 = vunpack.c.l.b16 %v3596
        %v3630 = vunpack.c.l.b16 %v3597
        %v3631 = vunpack.c.l.b16 %v3598
        %v3632 = vunpack.c.l.b16 %v3599
        %v3633 = vpack.c.b16 %v3618, %v3617
        %v3634 = vpack.c.b16 %v3620, %v3619
        %v3635 = vpack.c.b16 %v3622, %v3621
        %v3636 = vpack.c.b16 %v3624, %v3623
        %v3637 = vpack.c.b16 %v3626, %v3625
        %v3638 = vpack.c.b16 %v3628, %v3627
        %v3639 = vpack.c.b16 %v3630, %v3629
        %v3640 = vpack.c.b16 %v3632, %v3631
        %3649 = vmatprep.subr.bf16.mxu0 0
        %3650 = vmatpush1.bf16.msra.mxu0 %v3633
        %3651 = vmatprep.subr.bf16.mxu0 0
        %3652 = vmatpush1.bf16.msra.mxu0 %v3634
        %3653 = vmatprep.subr.bf16.mxu0 0
        %3654 = vmatpush1.bf16.msra.mxu0 %v3635
        %3655 = vmatprep.subr.bf16.mxu0 0
        %3656 = vmatpush1.bf16.msra.mxu0 %v3636
        %3657 = vmatprep.subr.bf16.mxu0 0
        %3658 = vmatpush1.bf16.msra.mxu0 %v3637
        %3659 = vmatprep.subr.bf16.mxu0 0
        %3660 = vmatpush1.bf16.msra.mxu0 %v3638
        %3661 = vmatprep.subr.bf16.mxu0 0
        %3662 = vmatpush1.bf16.msra.mxu0 %v3639
        %3663 = vmatprep.subr.bf16.mxu0 0
        %3664 = vmatpush1.bf16.msra.mxu0 %v3640
        %3665 = vmatprep.subr.bf16.mxu0 0
        %3666 = vmatpush1.bf16.msra.mxu0 0
        %3667 = vmatprep.subr.bf16.mxu0 0
        %3668 = vmatpush1.bf16.msra.mxu0 0
        %3669 = vmatprep.subr.bf16.mxu0 0
        %3670 = vmatpush1.bf16.msra.mxu0 0
        %3671 = vmatprep.subr.bf16.mxu0 0
        %3672 = vmatpush1.bf16.msra.mxu0 0
        %3673 = vmatprep.subr.bf16.mxu0 0
        %3674 = vmatpush1.bf16.msra.mxu0 0
        %3675 = vmatprep.subr.bf16.mxu0 0
        %3676 = vmatpush1.bf16.msra.mxu0 0
        %3677 = vmatprep.subr.bf16.mxu0 0
        %3678 = vmatpush1.bf16.msra.mxu0 0
        %3679 = vmatprep.subr.bf16.mxu0 0
        %3680 = vmatpush1.bf16.msra.mxu0 0
        %3681 = vmatprep.mubr.bf16.mxu0 0
        %3682 = vmatmul.mubr.bf16.gmra.mrb[0].mxu0 %v3600
        %v3683 = vpop.f32.mrb[0].mxu0
        %v3684 = vadd.f32 0.0, %v3683
        %v3685 = vpop.f32.mrb[0].mxu0
        %v3686 = vpop.f32.mrb[0].mxu0
        %v3687 = vpop.f32.mrb[0].mxu0
        %3688 = vdwg.mxu0
        %v3689 = vadd.f32 %v3428, %v3684
        %s3690 = scalar_lea.vmem %s18, 1
        %v3691 = vld [vmem:[%s3690] sm:$0x1]
        %v3693 = vlaneseq
        %v3694 = vshrl.u32 %v3693, 7
        %v3695 = vsub.s32 0, %v3694
        %v3696 = vrot.slane %v3691, %v3695
        %v3698 = vadd.f32 %v3689, %v3696
        %v3699 = vld [vmem:[%s19] sm:$0x1]
        %v3700 = vld [vmem:[%s20] sm:$0x1]
        %v3701 = vmul.f32 %v3698, %v774
        %3702 = vadd.xlane.f32.xlu0 %v3701
        %v3703 = vpop.xlane.xlu0 %3702
        %v3704 = vmul.f32 %v3703, 0.03125
        %v3705 = vsub.f32 %v3701, %v3704
        %v3706 = vmul.f32 %v3705, %v774
        %v3707 = vmul.f32 %v3706, %v3706
        %3708 = vadd.xlane.f32.xlu0 %v3707
        %v3709 = vpop.xlane.xlu0 %3708
        %v3710 = vmul.f32 %v3709, 0.03125
        %v3711 = vadd.f32 %v3710, 1e-05
        %v3712 = vrsqrt.pop %v3711
        %v3713 = vmul.f32 %v3706, %v3712
        %v3715 = vlaneseq
        %v3716 = vshrl.u32 %v3715, 7
        %v3717 = vsub.s32 0, %v3716
        %v3718 = vrot.slane %v3699, %v3717
        %v3720 = vmul.f32 %v3713, %v3718
        %v3722 = vlaneseq
        %v3723 = vshrl.u32 %v3722, 7
        %v3724 = vsub.s32 0, %v3723
        %v3725 = vrot.slane %v3700, %v3724
        %v3727 = vadd.f32 %v3720, %v3725
        %v3728 = vld [vmem:[%s21] sm:$0xf]
        %v3729 = vld [vmem:[%s21 + $0x4] sm:$0xf]
        %v3730 = vld [vmem:[%s21 + $0x8] sm:$0xf]
        %v3731 = vld [vmem:[%s21 + $0xc] sm:$0xf]
        %v3732 = vld [vmem:[%s21 + $0x10] sm:$0xf]
        %v3733 = vld [vmem:[%s21 + $0x14] sm:$0xf]
        %v3734 = vld [vmem:[%s21 + $0x18] sm:$0xf]
        %v3735 = vld [vmem:[%s21 + $0x1c] sm:$0xf]
        %v3736 = vld [vmem:[%s21 + $0x20] sm:$0xf]
        %v3737 = vld [vmem:[%s21 + $0x24] sm:$0xf]
        %v3738 = vld [vmem:[%s21 + $0x28] sm:$0xf]
        %v3739 = vld [vmem:[%s21 + $0x2c] sm:$0xf]
        %v3740 = vld [vmem:[%s21 + $0x30] sm:$0xf]
        %v3741 = vld [vmem:[%s21 + $0x34] sm:$0xf]
        %v3742 = vld [vmem:[%s21 + $0x38] sm:$0xf]
        %v3743 = vld [vmem:[%s21 + $0x3c] sm:$0xf]
        %v3744 = vpack.c.bf16 %v3727, %v3727
        %v3761 = vunpack.c.l.b16 %v3728
        %v3762 = vunpack.c.l.b16 %v3729
        %v3763 = vunpack.c.l.b16 %v3730
        %v3764 = vunpack.c.l.b16 %v3731
        %v3765 = vunpack.c.l.b16 %v3732
        %v3766 = vunpack.c.l.b16 %v3733
        %v3767 = vunpack.c.l.b16 %v3734
        %v3768 = vunpack.c.l.b16 %v3735
        %v3769 = vunpack.c.l.b16 %v3736
        %v3770 = vunpack.c.l.b16 %v3737
        %v3771 = vunpack.c.l.b16 %v3738
        %v3772 = vunpack.c.l.b16 %v3739
        %v3773 = vunpack.c.l.b16 %v3740
        %v3774 = vunpack.c.l.b16 %v3741
        %v3775 = vunpack.c.l.b16 %v3742
        %v3776 = vunpack.c.l.b16 %v3743
        %v3777 = vpack.c.b16 %v3762, %v3761
        %v3778 = vpack.c.b16 %v3764, %v3763
        %v3779 = vpack.c.b16 %v3766, %v3765
        %v3780 = vpack.c.b16 %v3768, %v3767
        %v3781 = vpack.c.b16 %v3770, %v3769
        %v3782 = vpack.c.b16 %v3772, %v3771
        %v3783 = vpack.c.b16 %v3774, %v3773
        %v3784 = vpack.c.b16 %v3776, %v3775
        %3793 = vmatprep.subr.bf16.mxu0 0
        %3794 = vmatpush1.bf16.msra.mxu0 %v3777
        %3795 = vmatprep.subr.bf16.mxu0 0
        %3796 = vmatpush1.bf16.msra.mxu0 %v3778
        %3797 = vmatprep.subr.bf16.mxu0 0
        %3798 = vmatpush1.bf16.msra.mxu0 %v3779
        %3799 = vmatprep.subr.bf16.mxu0 0
        %3800 = vmatpush1.bf16.msra.mxu0 %v3780
        %3801 = vmatprep.subr.bf16.mxu0 0
        %3802 = vmatpush1.bf16.msra.mxu0 %v3781
        %3803 = vmatprep.subr.bf16.mxu0 0
        %3804 = vmatpush1.bf16.msra.mxu0 %v3782
        %3805 = vmatprep.subr.bf16.mxu0 0
        %3806 = vmatpush1.bf16.msra.mxu0 %v3783
        %3807 = vmatprep.subr.bf16.mxu0 0
        %3808 = vmatpush1.bf16.msra.mxu0 %v3784
        %3809 = vmatprep.subr.bf16.mxu0 0
        %3810 = vmatpush1.bf16.msra.mxu0 0
        %3811 = vmatprep.subr.bf16.mxu0 0
        %3812 = vmatpush1.bf16.msra.mxu0 0
        %3813 = vmatprep.subr.bf16.mxu0 0
        %3814 = vmatpush1.bf16.msra.mxu0 0
        %3815 = vmatprep.subr.bf16.mxu0 0
        %3816 = vmatpush1.bf16.msra.mxu0 0
        %3817 = vmatprep.subr.bf16.mxu0 0
        %3818 = vmatpush1.bf16.msra.mxu0 0
        %3819 = vmatprep.subr.bf16.mxu0 0
        %3820 = vmatpush1.bf16.msra.mxu0 0
        %3821 = vmatprep.subr.bf16.mxu0 0
        %3822 = vmatpush1.bf16.msra.mxu0 0
        %3823 = vmatprep.subr.bf16.mxu0 0
        %3824 = vmatpush1.bf16.msra.mxu0 0
        %3825 = vmatprep.mubr.bf16.mxu0 0
        %3826 = vmatmul.mubr.bf16.gmra.mrb[0].mxu0 %v3744
        %v3827 = vpop.f32.mrb[0].mxu0
        %v3828 = vadd.f32 0.0, %v3827
        %v3829 = vpop.f32.mrb[0].mxu0
        %v3830 = vpop.f32.mrb[0].mxu0
        %v3831 = vpop.f32.mrb[0].mxu0
        %3832 = vdwg.mxu0
        %3833 = vst [vmem:[%s768] sm:$0xff] %v3828
        %p3834 = scmp.lt.s32.totalorder %s36, 1
        %s3835 = scalar_select %p3834, %s36, 1
        %s3836 = smul.addr %s3835, 8
        %s3837 = scalar_lea.vmem %s22, %s3836
        // Predicated region
        $region125: #{ergpt2_forward.1} parent=107 // pred_check
          %p3838 = pneg %p531
        $region126: #{ergpt2_forward.1} parent=107 // pred_check_branch
          %3840 = sbr.rel (%p3838) target = $region128
        $region127: #{ergpt2_forward.1} parent=107 // pred_region
          _
        $region128: #{ergpt2_forward.1} parent=107 // pred_fallthru
          _
      $region108: #{ergpt2_forward.1} parent=5 // pred_fallthru
        _
      %p3841 = scmp.le.s32.totalorder 2, %s31
      // Predicated region
      $region129: #{ergpt2_forward.1} parent=5 // pred_check
        %p3842 = pneg %p3841
      $region130: #{ergpt2_forward.1} parent=5 // pred_check_branch
        %3844 = sbr.rel (%p3842) target = $region132
      $region131: #{ergpt2_forward.1} parent=5 // pred_region
        %s3845 = ssub.s32 %s31, 2
        // Predicated region
        $region133: #{ergpt2_forward.1} parent=131 // pred_check
          %p3846 = pneg %p537
        $region134: #{ergpt2_forward.1} parent=131 // pred_check_branch
          %3848 = sbr.rel (%p3846) target = $region136
        $region135: #{ergpt2_forward.1} parent=131 // pred_region
          %p3849 = scmp.lt.s32.totalorder %s37, 1
          %s3850 = scalar_select %p3849, %s37, 1
          %s3851 = smul.addr %s3850, 8
          %s3852 = scalar_lea.vmem %s22, %s3851
        $region136: #{ergpt2_forward.1} parent=131 // pred_fallthru
          _
      $region132: #{ergpt2_forward.1} parent=5 // pred_fallthru
        _
    $region6: #{ergpt2_forward.1} parent=1 // loop_footer
      %s35 = sadd.s32 1, %s31
    $region7: #{ergpt2_forward.1} parent=1 // loop_footer_branch
      %30 = sbr.rel target = $region3
    $region8: #{ergpt2_forward.1} parent=1 // loop_exit
      _
    %3853 = vsyncpa [#allocation3], 1
    %s3854 = scalar_lea.sflag [#allocation3], 1
    %3855 = vsyncpa %s3854, 1
    %3856 = vsyncpa [#allocation5], 1
    %3857 = vsyncpa [#allocation8], 1

</llo_original>
